<compile_context>
chip_gen: v7x
topology: tpu7x:2x2x1
jax: 0.10.0
libtpu: 0.0.40
codegen_flags: <defaults>
</compile_context>

<pallas_src>
import functools
import math

import jax
import jax.numpy as jnp
import numpy as np
from jax.experimental import pallas as pl
from jax.experimental.pallas import tpu as pltpu


# --------------------------------------------------------------------------------
# Fused attention sub-layer kernel:  QKV -> MHA (+rel-pos) -> proj -> +res -> LN
# --------------------------------------------------------------------------------

def _attn_ln_kernel(x_ref, mr_ref, mc_ref, wqkv_ref, bqkv_ref, ekt_ref, ev_ref,
                    wo_ref, bo_ref, g_ref, bb_ref, o_ref, att_ref,
                    *, n_heads, window_size, scale):
    x = x_ref[...]                                        # (T, C)
    T, C = x.shape
    H = n_heads
    dk = C // H
    W = window_size

    # Fused Q/K/V projection: one (T,C) @ (C,3C) MXU matmul.
    qkv = jnp.dot(x, wqkv_ref[...], preferred_element_type=jnp.float32) + bqkv_ref[...]

    # Attention mask rebuilt in-kernel from the (T,1)/(1,T) mask views (no (T,T) input).
    valid = mr_ref[...] * mc_ref[...]                     # (T, T)
    ii = jax.lax.broadcasted_iota(jnp.int32, (T, T), 0)
    jj = jax.lax.broadcasted_iota(jnp.int32, (T, T), 1)
    diff = jj - ii                                        # j - i

    ekt = ekt_ref[...]                                    # (dk, 2W+1)  == Ek^T
    ev = ev_ref[...]                                      # (2W+1, dk)

    for h in range(H):                                    # static unroll over heads
        q = qkv[:, h * dk:(h + 1) * dk] * scale
        k = qkv[:, C + h * dk:C + (h + 1) * dk]
        v = qkv[:, 2 * C + h * dk:2 * C + (h + 1) * dk]

        # content scores on the MXU (contract over dk, no explicit transpose)
        scores = jax.lax.dot_general(q, k, (((1,), (1,)), ((), ())),
                                     preferred_element_type=jnp.float32)   # (T, T)

        # relative-key bias: scores[i, j] += q[i] . Ek[j - i + W]  (zero outside window)
        crel = jnp.dot(q, ekt, preferred_element_type=jnp.float32)          # (T, 2W+1)
        for r in range(-W, W + 1):
            scores = scores + jnp.where(diff == r, crel[:, r + W:r + W + 1], 0.0)

        scores = jnp.where(valid == 0.0, -1e4, scores)
        scores = scores - jnp.max(scores, axis=-1, keepdims=True)
        p = jnp.exp(scores)
        p = p * pl.reciprocal(jnp.sum(p, axis=-1, keepdims=True), approx=True)

        out = jnp.dot(p, v, preferred_element_type=jnp.float32)             # (T, dk)

        # relative-value contribution: out[i] += sum_j p[i, j] * Ev[j - i + W]
        for r in range(-W, W + 1):
            d = jnp.sum(jnp.where(diff == r, p, 0.0), axis=-1, keepdims=True)  # (T, 1)
            out = out + d * ev[r + W:r + W + 1, :]

        att_ref[:, h * dk:(h + 1) * dk] = out

    # output projection + residual + LayerNorm1 (torch eps=1e-5, biased variance)
    y = jnp.dot(att_ref[...], wo_ref[...], preferred_element_type=jnp.float32) + bo_ref[...]
    s = x + y
    mean = jnp.mean(s, axis=-1, keepdims=True)
    c = s - mean
    var = jnp.mean(c * c, axis=-1, keepdims=True)
    o_ref[...] = (c * jax.lax.rsqrt(var + 1e-5) * g_ref[...] + bb_ref[...]).astype(o_ref.dtype)


def attn_ln_block(x, mask_r, mask_c, wqkv, bqkv, ek_t, ev, wo, bo, ln_g, ln_b,
                  *, n_heads, window_size):
    """x:(B,T,C) -> LayerNorm1(x + MHA(x)) : (B,T,C)."""
    B, T, C = x.shape
    dk = C // n_heads
    W = window_size
    kernel = functools.partial(_attn_ln_kernel, n_heads=n_heads,
                               window_size=window_size, scale=1.0 / math.sqrt(dk))
    return pl.pallas_call(
        kernel,
        out_shape=jax.ShapeDtypeStruct((B, T, C), x.dtype),
        grid=(B,),
        in_specs=[
            pl.BlockSpec((None, T, C), lambda i: (i, 0, 0)),       # x
            pl.BlockSpec((None, T, 1), lambda i: (i, 0, 0)),       # mask (rows)
            pl.BlockSpec((None, 1, T), lambda i: (i, 0, 0)),       # mask (cols)
            pl.BlockSpec((C, 3 * C), lambda i: (0, 0)),            # Wqkv
            pl.BlockSpec((1, 3 * C), lambda i: (0, 0)),            # bqkv
            pl.BlockSpec((dk, 2 * W + 1), lambda i: (0, 0)),       # Ek^T
            pl.BlockSpec((2 * W + 1, dk), lambda i: (0, 0)),       # Ev
            pl.BlockSpec((C, C), lambda i: (0, 0)),                # Wo
            pl.BlockSpec((1, C), lambda i: (0, 0)),                # bo
            pl.BlockSpec((1, C), lambda i: (0, 0)),                # LN1 gamma
            pl.BlockSpec((1, C), lambda i: (0, 0)),                # LN1 beta
        ],
        out_specs=pl.BlockSpec((None, T, C), lambda i: (i, 0, 0)),
        scratch_shapes=[pltpu.VMEM((T, C), jnp.float32)],          # concatenated heads
        compiler_params=pltpu.CompilerParams(dimension_semantics=("parallel",)),
    )(x, mask_r, mask_c, wqkv, bqkv, ek_t, ev, wo, bo, ln_g, ln_b)


# --------------------------------------------------------------------------------
# Fused FFN sub-layer kernel:  mask -> conv1 -> relu -> mask -> conv2 -> +res -> LN
# --------------------------------------------------------------------------------

def _ffn_ln_kernel(x_ref, m_ref, w1_ref, b1_ref, w2_ref, b2_ref, g_ref, bb_ref, o_ref,
                   *, mask_output):
    x = x_ref[...]                                        # (tT, C)
    m = m_ref[...]                                        # (tT, 1)
    h = jnp.dot(x * m, w1_ref[...], preferred_element_type=jnp.float32) + b1_ref[...]
    h = jnp.maximum(h, 0.0) * m
    y = jnp.dot(h, w2_ref[...], preferred_element_type=jnp.float32) + b2_ref[...]
    s = x + y
    mean = jnp.mean(s, axis=-1, keepdims=True)
    c = s - mean
    var = jnp.mean(c * c, axis=-1, keepdims=True)
    out = c * jax.lax.rsqrt(var + 1e-5) * g_ref[...] + bb_ref[...]
    if mask_output:                                       # fold final `x * mask` in
        out = out * m
    o_ref[...] = out.astype(o_ref.dtype)


def ffn_ln_block(x, mask_r, w1, b1, w2, b2, ln_g, ln_b, *, mask_output, block_t=256):
    """x:(B,T,C) -> LayerNorm2(x + FFN(x)) : (B,T,C).  Time-tiled when T % block_t == 0."""
    B, T, C = x.shape
    F_ = w1.shape[1]
    tT = block_t if (block_t is not None and T % block_t == 0) else T
    kernel = functools.partial(_ffn_ln_kernel, mask_output=mask_output)
    return pl.pallas_call(
        kernel,
        out_shape=jax.ShapeDtypeStruct((B, T, C), x.dtype),
        grid=(B, T // tT),
        in_specs=[
            pl.BlockSpec((None, tT, C), lambda i, t: (i, t, 0)),   # x
            pl.BlockSpec((None, tT, 1), lambda i, t: (i, t, 0)),   # mask
            pl.BlockSpec((C, F_), lambda i, t: (0, 0)),            # W1 (constant -> fetched once)
            pl.BlockSpec((1, F_), lambda i, t: (0, 0)),
            pl.BlockSpec((F_, C), lambda i, t: (0, 0)),            # W2
            pl.BlockSpec((1, C), lambda i, t: (0, 0)),
            pl.BlockSpec((1, C), lambda i, t: (0, 0)),             # LN2 gamma
            pl.BlockSpec((1, C), lambda i, t: (0, 0)),             # LN2 beta
        ],
        out_specs=pl.BlockSpec((None, tT, C), lambda i, t: (i, t, 0)),
        compiler_params=pltpu.CompilerParams(
            dimension_semantics=("parallel", "parallel")),
    )(x, mask_r, w1, b1.reshape(1, F_), w2, b2.reshape(1, C),
      ln_g.reshape(1, C), ln_b.reshape(1, C))


# --------------------------------------------------------------------------------
# Parameters + forward
# --------------------------------------------------------------------------------

def init_params(key, n_layers, C, H, window_size):
    dk = C // H
    F_ = 4 * C
    params = []
    for l in range(n_layers):
        ks = jax.random.split(jax.random.fold_in(key, l), 14)

        def nrm(k, shape, scale):
            return jax.random.normal(k, shape, jnp.float32) * scale

        params.append(dict(
            wq=nrm(ks[0], (C, C), C ** -0.5), bq=jnp.zeros((C,), jnp.float32),
            wk=nrm(ks[1], (C, C), C ** -0.5), bk=jnp.zeros((C,), jnp.float32),
            wv=nrm(ks[2], (C, C), C ** -0.5), bv=jnp.zeros((C,), jnp.float32),
            wo=nrm(ks[3], (C, C), C ** -0.5), bo=nrm(ks[4], (C,), 0.02),
            emb_rel_k=nrm(ks[5], (2 * window_size + 1, dk), dk ** -0.5),
            emb_rel_v=nrm(ks[6], (2 * window_size + 1, dk), dk ** -0.5),
            ln1_g=jnp.ones((C,), jnp.float32) + nrm(ks[7], (C,), 0.02),
            ln1_b=nrm(ks[8], (C,), 0.02),
            w1=nrm(ks[9], (C, F_), C ** -0.5), b1=nrm(ks[10], (F_,), 0.02),
            w2=nrm(ks[11], (F_, C), F_ ** -0.5), b2=nrm(ks[12], (C,), 0.02),
            ln2_g=jnp.ones((C,), jnp.float32) + nrm(ks[13], (C,), 0.02),
            ln2_b=jnp.zeros((C,), jnp.float32),
        ))
    return params


def encoder_block_forward(x, mask, params, *, n_heads, window_size):
    """x:(B,T,C), mask:(B,T) float -> (B,T,C).  Equals torch output transposed to (B,T,C)."""
    B, T, C = x.shape
    mask_r = mask[:, :, None]                    # (B, T, 1)
    mask_c = mask[:, None, :]                    # (B, 1, T)
    n_layers = len(params)
    for li, p in enumerate(params):
        wqkv = jnp.concatenate([p['wq'], p['wk'], p['wv']], axis=1)          # (C, 3C)
        bqkv = jnp.concatenate([p['bq'], p['bk'], p['bv']]).reshape(1, 3 * C)
        x = attn_ln_block(
            x, mask_r, mask_c, wqkv, bqkv,
            p['emb_rel_k'].T, p['emb_rel_v'],
            p['wo'], p['bo'].reshape(1, C),
            p['ln1_g'].reshape(1, C), p['ln1_b'].reshape(1, C),
            n_heads=n_heads, window_size=window_size)
        x = ffn_ln_block(
            x, mask_r, p['w1'], p['b1'], p['w2'], p['b2'],
            p['ln2_g'], p['ln2_b'],
            mask_output=(li == n_layers - 1))
    return x


# --------------------------------------------------------------------------------
# Pure-JAX reference (mirrors the torch forward) for correctness checking
# --------------------------------------------------------------------------------

def rel_embeddings_for_length(emb, length, window_size):
    """emb:(2W+1, dk) -> gathered (T, T, dk) with G[i, j] = E[j - i] (0 outside window)."""
    pad = max(length - (window_size + 1), 0)
    start = max((window_size + 1) - length, 0)
    emb_p = jnp.pad(emb, ((pad, pad), (0, 0)))
    used = jax.lax.dynamic_slice_in_dim(emb_p, start, 2 * length - 1, axis=0)
    idx = jnp.arange(length)[None, :] - jnp.arange(length)[:, None] + (length - 1)
    return used[idx]


def reference_forward(x, mask, params, *, n_heads, window_size):
    B, T, C = x.shape
    H = n_heads
    dk = C // H
    mask_bt1 = mask[:, :, None]
    mask2d = mask[:, :, None] * mask[:, None, :]

    def layer_norm(s, g, b):
        mean = jnp.mean(s, axis=-1, keepdims=True)
        var = jnp.mean((s - mean) ** 2, axis=-1, keepdims=True)
        return (s - mean) * jax.lax.rsqrt(var + 1e-5) * g + b

    for p in params:
        q = x @ p['wq'] + p['bq']
        k = x @ p['wk'] + p['bk']
        v = x @ p['wv'] + p['bv']
        qh = q.reshape(B, T, H, dk).transpose(0, 2, 1, 3) / math.sqrt(dk)
        kh = k.reshape(B, T, H, dk).transpose(0, 2, 1, 3)
        vh = v.reshape(B, T, H, dk).transpose(0, 2, 1, 3)
        gk = rel_embeddings_for_length(p['emb_rel_k'], T, window_size)
        gv = rel_embeddings_for_length(p['emb_rel_v'], T, window_size)
        scores = jnp.einsum('bhid,bhjd->bhij', qh, kh)
        scores = scores + jnp.einsum('bhid,ijd->bhij', qh, gk)
        scores = jnp.where(mask2d[:, None] == 0, -1e4, scores)
        pattn = jax.nn.softmax(scores, axis=-1)
        out = jnp.einsum('bhij,bhjd->bhid', pattn, vh)
        out = out + jnp.einsum('bhij,ijd->bhid', pattn, gv)
        a = out.transpose(0, 2, 1, 3).reshape(B, T, C)
        y = a @ p['wo'] + p['bo']
        x = layer_norm(x + y, p['ln1_g'], p['ln1_b'])
        h = jnp.maximum((x * mask_bt1) @ p['w1'] + p['b1'], 0.0)
        y = (h * mask_bt1) @ p['w2'] + p['b2']
        x = layer_norm(x + y, p['ln2_g'], p['ln2_b'])
    return x * mask_bt1


# --------------------------------------------------------------------------------

if __name__ == "__main__":
    B, T, C, H, L, W = 2, 8, 32, 4, 2, 4   # batch, seq, hidden, heads, layers, window

    key = jax.random.PRNGKey(0)
    kx, kp = jax.random.split(key)
    x = jax.random.normal(kx, (B, T, C), jnp.float32)
    mask = jnp.ones((B, T), jnp.float32).at[1, 6:].set(0.0)   # 2nd sequence has length 6

    params = init_params(kp, L, C, H, W)

    out = encoder_block_forward(x, mask, params, n_heads=H, window_size=W)
    out = jax.block_until_ready(out)

    ref = reference_forward(x, mask, params, n_heads=H, window_size=W)
    assert out.shape == (B, T, C)
    # tolerance accommodates the EUP approximate reciprocal in the softmax normalization
    np.testing.assert_allclose(np.asarray(out), np.asarray(ref), atol=5e-3, rtol=5e-3)

    print("KERNEL_OK")
</pallas_src>

<mosaic_0001>
module attributes {stable_mosaic.version = 11 : i64} {
  func.func @_attn_ln_kernel(%arg0: i32, %arg1: memref<1x8x32xf32, #tpu.memory_space<vmem>>, %arg2: memref<1x8x1xf32, #tpu.memory_space<vmem>>, %arg3: memref<1x1x8xf32, #tpu.memory_space<vmem>>, %arg4: memref<32x96xf32, #tpu.memory_space<vmem>>, %arg5: memref<1x96xf32, #tpu.memory_space<vmem>>, %arg6: memref<8x9xf32, #tpu.memory_space<vmem>>, %arg7: memref<9x8xf32, #tpu.memory_space<vmem>>, %arg8: memref<32x32xf32, #tpu.memory_space<vmem>>, %arg9: memref<1x32xf32, #tpu.memory_space<vmem>>, %arg10: memref<1x32xf32, #tpu.memory_space<vmem>>, %arg11: memref<1x32xf32, #tpu.memory_space<vmem>>, %arg12: memref<1x8x32xf32, #tpu.memory_space<vmem>>, %arg13: memref<8x32xf32, #tpu.memory_space<vmem>>) attributes {dimension_semantics = [#tpu.dimension_semantics<parallel>], iteration_bounds = array<i64: 2>, scalar_prefetch = 0 : i64, scratch_operands = 1 : i64, tpu.core_type = #tpu.core_type<tc>, window_params = [{transform_indices = @transform_0, window_bounds = array<i64: 1, 8, 32>}, {transform_indices = @transform_1, window_bounds = array<i64: 1, 8, 1>}, {transform_indices = @transform_2, window_bounds = array<i64: 1, 1, 8>}, {pipeline_mode = #tpu.pipeline_mode<synchronous>, transform_indices = @transform_3, window_bounds = array<i64: 32, 96>}, {pipeline_mode = #tpu.pipeline_mode<synchronous>, transform_indices = @transform_4, window_bounds = array<i64: 1, 96>}, {pipeline_mode = #tpu.pipeline_mode<synchronous>, transform_indices = @transform_5, window_bounds = array<i64: 8, 9>}, {pipeline_mode = #tpu.pipeline_mode<synchronous>, transform_indices = @transform_6, window_bounds = array<i64: 9, 8>}, {pipeline_mode = #tpu.pipeline_mode<synchronous>, transform_indices = @transform_7, window_bounds = array<i64: 32, 32>}, {pipeline_mode = #tpu.pipeline_mode<synchronous>, transform_indices = @transform_8, window_bounds = array<i64: 1, 32>}, {pipeline_mode = #tpu.pipeline_mode<synchronous>, transform_indices = @transform_9, window_bounds = array<i64: 1, 32>}, {pipeline_mode = #tpu.pipeline_mode<synchronous>, transform_indices = @transform_10, window_bounds = array<i64: 1, 32>}, {transform_indices = @transform_11, window_bounds = array<i64: 1, 8, 32>}]} {
    %c0 = arith.constant 0 : index
    %c0_0 = arith.constant 0 : index
    %c0_1 = arith.constant 0 : index
    %0 = vector.load %arg1[%c0, %c0_0, %c0_1] : memref<1x8x32xf32, #tpu.memory_space<vmem>>, vector<1x8x32xf32>
    %1 = vector.shape_cast %0 : vector<1x8x32xf32> to vector<8x32xf32>
    %c0_2 = arith.constant 0 : index
    %c0_3 = arith.constant 0 : index
    %2 = vector.load %arg4[%c0_2, %c0_3] : memref<32x96xf32, #tpu.memory_space<vmem>>, vector<32x96xf32>
    %cst = arith.constant dense<0.000000e+00> : vector<8x96xf32>
    %3 = tpu.matmul %1, %2, %cst {dimension_numbers = #tpu.dot_dimension_numbers<[1], [0], [0], [1], [0, 0, 1, 1], [], []>} : vector<8x32xf32>, vector<32x96xf32>, vector<8x96xf32> -> vector<8x96xf32>
    %c0_4 = arith.constant 0 : index
    %c0_5 = arith.constant 0 : index
    %4 = vector.load %arg5[%c0_4, %c0_5] : memref<1x96xf32, #tpu.memory_space<vmem>>, vector<1x96xf32>
    %5 = vector.broadcast %4 : vector<1x96xf32> to vector<8x96xf32>
    %6 = arith.addf %3, %5 : vector<8x96xf32>
    %c0_6 = arith.constant 0 : index
    %c0_7 = arith.constant 0 : index
    %c0_8 = arith.constant 0 : index
    %7 = vector.load %arg2[%c0_6, %c0_7, %c0_8] : memref<1x8x1xf32, #tpu.memory_space<vmem>>, vector<1x8x1xf32>
    %8 = vector.shape_cast %7 : vector<1x8x1xf32> to vector<8x1xf32>
    %c0_9 = arith.constant 0 : index
    %c0_10 = arith.constant 0 : index
    %c0_11 = arith.constant 0 : index
    %9 = vector.load %arg3[%c0_9, %c0_10, %c0_11] : memref<1x1x8xf32, #tpu.memory_space<vmem>>, vector<1x1x8xf32>
    %10 = vector.shape_cast %9 : vector<1x1x8xf32> to vector<1x8xf32>
    %11 = vector.broadcast %8 : vector<8x1xf32> to vector<8x8xf32>
    %12 = vector.broadcast %10 : vector<1x8xf32> to vector<8x8xf32>
    %13 = arith.mulf %11, %12 : vector<8x8xf32>
    %14 = tpu.iota {dimensions = array<i32: 0>} : vector<8x8xi32>
    %15 = tpu.iota {dimensions = array<i32: 1>} : vector<8x8xi32>
    %16 = arith.subi %15, %14 : vector<8x8xi32>
    %c0_12 = arith.constant 0 : index
    %c0_13 = arith.constant 0 : index
    %17 = vector.load %arg6[%c0_12, %c0_13] : memref<8x9xf32, #tpu.memory_space<vmem>>, vector<8x9xf32>
    %c0_14 = arith.constant 0 : index
    %c0_15 = arith.constant 0 : index
    %18 = vector.load %arg7[%c0_14, %c0_15] : memref<9x8xf32, #tpu.memory_space<vmem>>, vector<9x8xf32>
    %19 = vector.extract_strided_slice %6 {offsets = [0, 0], sizes = [8, 8], strides = [1, 1]} : vector<8x96xf32> to vector<8x8xf32>
    %cst_16 = arith.constant 0.353553385 : f32
    %20 = vector.broadcast %cst_16 : f32 to vector<8x8xf32>
    %21 = arith.mulf %19, %20 : vector<8x8xf32>
    %22 = vector.extract_strided_slice %6 {offsets = [0, 32], sizes = [8, 8], strides = [1, 1]} : vector<8x96xf32> to vector<8x8xf32>
    %23 = vector.extract_strided_slice %6 {offsets = [0, 64], sizes = [8, 8], strides = [1, 1]} : vector<8x96xf32> to vector<8x8xf32>
    %cst_17 = arith.constant dense<0.000000e+00> : vector<8x8xf32>
    %24 = tpu.matmul %21, %22, %cst_17 {dimension_numbers = #tpu.dot_dimension_numbers<[1], [1], [0], [0], [0, 0, 1, 0], [], []>} : vector<8x8xf32>, vector<8x8xf32>, vector<8x8xf32> -> vector<8x8xf32>
    %cst_18 = arith.constant dense<0.000000e+00> : vector<8x9xf32>
    %25 = tpu.matmul %21, %17, %cst_18 {dimension_numbers = #tpu.dot_dimension_numbers<[1], [0], [0], [1], [0, 0, 1, 1], [], []>} : vector<8x8xf32>, vector<8x9xf32>, vector<8x9xf32> -> vector<8x9xf32>
    %c-4_i32 = arith.constant -4 : i32
    %26 = vector.broadcast %c-4_i32 : i32 to vector<8x8xi32>
    %27 = arith.cmpi eq, %16, %26 : vector<8x8xi32>
    %28 = vector.extract_strided_slice %25 {offsets = [0, 0], sizes = [8, 1], strides = [1, 1]} : vector<8x9xf32> to vector<8x1xf32>
    %cst_19 = arith.constant 0.000000e+00 : f32
    %29 = vector.shape_cast %28 : vector<8x1xf32> to vector<8x1xf32>
    %30 = vector.broadcast %29 : vector<8x1xf32> to vector<8x8xf32>
    %31 = vector.broadcast %cst_19 : f32 to vector<8x8xf32>
    %32 = arith.select %27, %30, %31 : vector<8x8xi1>, vector<8x8xf32>
    %33 = arith.addf %24, %32 : vector<8x8xf32>
    %c-3_i32 = arith.constant -3 : i32
    %34 = vector.broadcast %c-3_i32 : i32 to vector<8x8xi32>
    %35 = arith.cmpi eq, %16, %34 : vector<8x8xi32>
    %36 = vector.extract_strided_slice %25 {offsets = [0, 1], sizes = [8, 1], strides = [1, 1]} : vector<8x9xf32> to vector<8x1xf32>
    %cst_20 = arith.constant 0.000000e+00 : f32
    %37 = vector.shape_cast %36 : vector<8x1xf32> to vector<8x1xf32>
    %38 = vector.broadcast %37 : vector<8x1xf32> to vector<8x8xf32>
    %39 = vector.broadcast %cst_20 : f32 to vector<8x8xf32>
    %40 = arith.select %35, %38, %39 : vector<8x8xi1>, vector<8x8xf32>
    %41 = arith.addf %33, %40 : vector<8x8xf32>
    %c-2_i32 = arith.constant -2 : i32
    %42 = vector.broadcast %c-2_i32 : i32 to vector<8x8xi32>
    %43 = arith.cmpi eq, %16, %42 : vector<8x8xi32>
    %44 = vector.extract_strided_slice %25 {offsets = [0, 2], sizes = [8, 1], strides = [1, 1]} : vector<8x9xf32> to vector<8x1xf32>
    %cst_21 = arith.constant 0.000000e+00 : f32
    %45 = vector.shape_cast %44 : vector<8x1xf32> to vector<8x1xf32>
    %46 = vector.broadcast %45 : vector<8x1xf32> to vector<8x8xf32>
    %47 = vector.broadcast %cst_21 : f32 to vector<8x8xf32>
    %48 = arith.select %43, %46, %47 : vector<8x8xi1>, vector<8x8xf32>
    %49 = arith.addf %41, %48 : vector<8x8xf32>
    %c-1_i32 = arith.constant -1 : i32
    %50 = vector.broadcast %c-1_i32 : i32 to vector<8x8xi32>
    %51 = arith.cmpi eq, %16, %50 : vector<8x8xi32>
    %52 = vector.extract_strided_slice %25 {offsets = [0, 3], sizes = [8, 1], strides = [1, 1]} : vector<8x9xf32> to vector<8x1xf32>
    %cst_22 = arith.constant 0.000000e+00 : f32
    %53 = vector.shape_cast %52 : vector<8x1xf32> to vector<8x1xf32>
    %54 = vector.broadcast %53 : vector<8x1xf32> to vector<8x8xf32>
    %55 = vector.broadcast %cst_22 : f32 to vector<8x8xf32>
    %56 = arith.select %51, %54, %55 : vector<8x8xi1>, vector<8x8xf32>
    %57 = arith.addf %49, %56 : vector<8x8xf32>
    %c0_i32 = arith.constant 0 : i32
    %58 = vector.broadcast %c0_i32 : i32 to vector<8x8xi32>
    %59 = arith.cmpi eq, %16, %58 : vector<8x8xi32>
    %60 = vector.extract_strided_slice %25 {offsets = [0, 4], sizes = [8, 1], strides = [1, 1]} : vector<8x9xf32> to vector<8x1xf32>
    %cst_23 = arith.constant 0.000000e+00 : f32
    %61 = vector.shape_cast %60 : vector<8x1xf32> to vector<8x1xf32>
    %62 = vector.broadcast %61 : vector<8x1xf32> to vector<8x8xf32>
    %63 = vector.broadcast %cst_23 : f32 to vector<8x8xf32>
    %64 = arith.select %59, %62, %63 : vector<8x8xi1>, vector<8x8xf32>
    %65 = arith.addf %57, %64 : vector<8x8xf32>
    %c1_i32 = arith.constant 1 : i32
    %66 = vector.broadcast %c1_i32 : i32 to vector<8x8xi32>
    %67 = arith.cmpi eq, %16, %66 : vector<8x8xi32>
    %68 = vector.extract_strided_slice %25 {offsets = [0, 5], sizes = [8, 1], strides = [1, 1]} : vector<8x9xf32> to vector<8x1xf32>
    %cst_24 = arith.constant 0.000000e+00 : f32
    %69 = vector.shape_cast %68 : vector<8x1xf32> to vector<8x1xf32>
    %70 = vector.broadcast %69 : vector<8x1xf32> to vector<8x8xf32>
    %71 = vector.broadcast %cst_24 : f32 to vector<8x8xf32>
    %72 = arith.select %67, %70, %71 : vector<8x8xi1>, vector<8x8xf32>
    %73 = arith.addf %65, %72 : vector<8x8xf32>
    %c2_i32 = arith.constant 2 : i32
    %74 = vector.broadcast %c2_i32 : i32 to vector<8x8xi32>
    %75 = arith.cmpi eq, %16, %74 : vector<8x8xi32>
    %76 = vector.extract_strided_slice %25 {offsets = [0, 6], sizes = [8, 1], strides = [1, 1]} : vector<8x9xf32> to vector<8x1xf32>
    %cst_25 = arith.constant 0.000000e+00 : f32
    %77 = vector.shape_cast %76 : vector<8x1xf32> to vector<8x1xf32>
    %78 = vector.broadcast %77 : vector<8x1xf32> to vector<8x8xf32>
    %79 = vector.broadcast %cst_25 : f32 to vector<8x8xf32>
    %80 = arith.select %75, %78, %79 : vector<8x8xi1>, vector<8x8xf32>
    %81 = arith.addf %73, %80 : vector<8x8xf32>
    %c3_i32 = arith.constant 3 : i32
    %82 = vector.broadcast %c3_i32 : i32 to vector<8x8xi32>
    %83 = arith.cmpi eq, %16, %82 : vector<8x8xi32>
    %84 = vector.extract_strided_slice %25 {offsets = [0, 7], sizes = [8, 1], strides = [1, 1]} : vector<8x9xf32> to vector<8x1xf32>
    %cst_26 = arith.constant 0.000000e+00 : f32
    %85 = vector.shape_cast %84 : vector<8x1xf32> to vector<8x1xf32>
    %86 = vector.broadcast %85 : vector<8x1xf32> to vector<8x8xf32>
    %87 = vector.broadcast %cst_26 : f32 to vector<8x8xf32>
    %88 = arith.select %83, %86, %87 : vector<8x8xi1>, vector<8x8xf32>
    %89 = arith.addf %81, %88 : vector<8x8xf32>
    %c4_i32 = arith.constant 4 : i32
    %90 = vector.broadcast %c4_i32 : i32 to vector<8x8xi32>
    %91 = arith.cmpi eq, %16, %90 : vector<8x8xi32>
    %92 = vector.extract_strided_slice %25 {offsets = [0, 8], sizes = [8, 1], strides = [1, 1]} : vector<8x9xf32> to vector<8x1xf32>
    %cst_27 = arith.constant 0.000000e+00 : f32
    %93 = vector.shape_cast %92 : vector<8x1xf32> to vector<8x1xf32>
    %94 = vector.broadcast %93 : vector<8x1xf32> to vector<8x8xf32>
    %95 = vector.broadcast %cst_27 : f32 to vector<8x8xf32>
    %96 = arith.select %91, %94, %95 : vector<8x8xi1>, vector<8x8xf32>
    %97 = arith.addf %89, %96 : vector<8x8xf32>
    %cst_28 = arith.constant 0.000000e+00 : f32
    %98 = vector.broadcast %cst_28 : f32 to vector<8x8xf32>
    %99 = arith.cmpf oeq, %13, %98 : vector<8x8xf32>
    %cst_29 = arith.constant -1.000000e+04 : f32
    %100 = vector.broadcast %cst_29 : f32 to vector<8x8xf32>
    %101 = arith.select %99, %100, %97 : vector<8x8xi1>, vector<8x8xf32>
    %cst_30 = arith.constant dense<0xFF800000> : vector<8xf32>
    %102 = vector.multi_reduction <maximumf>, %101, %cst_30 [1] : vector<8x8xf32> to vector<8xf32>
    %103 = vector.shape_cast %102 : vector<8xf32> to vector<8x1xf32>
    %104 = vector.broadcast %103 : vector<8x1xf32> to vector<8x8xf32>
    %105 = arith.subf %101, %104 : vector<8x8xf32>
    %106 = math.exp %105 : vector<8x8xf32>
    %cst_31 = arith.constant dense<0.000000e+00> : vector<8xf32>
    %107 = vector.multi_reduction <add>, %106, %cst_31 [1] : vector<8x8xf32> to vector<8xf32>
    %108 = vector.shape_cast %107 : vector<8xf32> to vector<8x1xf32>
    %109 = tpu.reciprocal %108 {approx = true} : vector<8x1xf32> -> vector<8x1xf32>
    %110 = vector.broadcast %109 : vector<8x1xf32> to vector<8x8xf32>
    %111 = arith.mulf %106, %110 : vector<8x8xf32>
    %cst_32 = arith.constant dense<0.000000e+00> : vector<8x8xf32>
    %112 = tpu.matmul %111, %23, %cst_32 {dimension_numbers = #tpu.dot_dimension_numbers<[1], [0], [0], [1], [0, 0, 1, 1], [], []>} : vector<8x8xf32>, vector<8x8xf32>, vector<8x8xf32> -> vector<8x8xf32>
    %c-4_i32_33 = arith.constant -4 : i32
    %113 = vector.broadcast %c-4_i32_33 : i32 to vector<8x8xi32>
    %114 = arith.cmpi eq, %16, %113 : vector<8x8xi32>
    %cst_34 = arith.constant 0.000000e+00 : f32
    %115 = vector.broadcast %cst_34 : f32 to vector<8x8xf32>
    %116 = arith.select %114, %111, %115 : vector<8x8xi1>, vector<8x8xf32>
    %cst_35 = arith.constant dense<0.000000e+00> : vector<8xf32>
    %117 = vector.multi_reduction <add>, %116, %cst_35 [1] : vector<8x8xf32> to vector<8xf32>
    %118 = vector.shape_cast %117 : vector<8xf32> to vector<8x1xf32>
    %119 = vector.extract_strided_slice %18 {offsets = [0, 0], sizes = [1, 8], strides = [1, 1]} : vector<9x8xf32> to vector<1x8xf32>
    %120 = vector.broadcast %118 : vector<8x1xf32> to vector<8x8xf32>
    %121 = vector.broadcast %119 : vector<1x8xf32> to vector<8x8xf32>
    %122 = arith.mulf %120, %121 : vector<8x8xf32>
    %123 = arith.addf %112, %122 : vector<8x8xf32>
    %c-3_i32_36 = arith.constant -3 : i32
    %124 = vector.broadcast %c-3_i32_36 : i32 to vector<8x8xi32>
    %125 = arith.cmpi eq, %16, %124 : vector<8x8xi32>
    %cst_37 = arith.constant 0.000000e+00 : f32
    %126 = vector.broadcast %cst_37 : f32 to vector<8x8xf32>
    %127 = arith.select %125, %111, %126 : vector<8x8xi1>, vector<8x8xf32>
    %cst_38 = arith.constant dense<0.000000e+00> : vector<8xf32>
    %128 = vector.multi_reduction <add>, %127, %cst_38 [1] : vector<8x8xf32> to vector<8xf32>
    %129 = vector.shape_cast %128 : vector<8xf32> to vector<8x1xf32>
    %130 = vector.extract_strided_slice %18 {offsets = [1, 0], sizes = [1, 8], strides = [1, 1]} : vector<9x8xf32> to vector<1x8xf32>
    %131 = vector.broadcast %129 : vector<8x1xf32> to vector<8x8xf32>
    %132 = vector.broadcast %130 : vector<1x8xf32> to vector<8x8xf32>
    %133 = arith.mulf %131, %132 : vector<8x8xf32>
    %134 = arith.addf %123, %133 : vector<8x8xf32>
    %c-2_i32_39 = arith.constant -2 : i32
    %135 = vector.broadcast %c-2_i32_39 : i32 to vector<8x8xi32>
    %136 = arith.cmpi eq, %16, %135 : vector<8x8xi32>
    %cst_40 = arith.constant 0.000000e+00 : f32
    %137 = vector.broadcast %cst_40 : f32 to vector<8x8xf32>
    %138 = arith.select %136, %111, %137 : vector<8x8xi1>, vector<8x8xf32>
    %cst_41 = arith.constant dense<0.000000e+00> : vector<8xf32>
    %139 = vector.multi_reduction <add>, %138, %cst_41 [1] : vector<8x8xf32> to vector<8xf32>
    %140 = vector.shape_cast %139 : vector<8xf32> to vector<8x1xf32>
    %141 = vector.extract_strided_slice %18 {offsets = [2, 0], sizes = [1, 8], strides = [1, 1]} : vector<9x8xf32> to vector<1x8xf32>
    %142 = vector.broadcast %140 : vector<8x1xf32> to vector<8x8xf32>
    %143 = vector.broadcast %141 : vector<1x8xf32> to vector<8x8xf32>
    %144 = arith.mulf %142, %143 : vector<8x8xf32>
    %145 = arith.addf %134, %144 : vector<8x8xf32>
    %c-1_i32_42 = arith.constant -1 : i32
    %146 = vector.broadcast %c-1_i32_42 : i32 to vector<8x8xi32>
    %147 = arith.cmpi eq, %16, %146 : vector<8x8xi32>
    %cst_43 = arith.constant 0.000000e+00 : f32
    %148 = vector.broadcast %cst_43 : f32 to vector<8x8xf32>
    %149 = arith.select %147, %111, %148 : vector<8x8xi1>, vector<8x8xf32>
    %cst_44 = arith.constant dense<0.000000e+00> : vector<8xf32>
    %150 = vector.multi_reduction <add>, %149, %cst_44 [1] : vector<8x8xf32> to vector<8xf32>
    %151 = vector.shape_cast %150 : vector<8xf32> to vector<8x1xf32>
    %152 = vector.extract_strided_slice %18 {offsets = [3, 0], sizes = [1, 8], strides = [1, 1]} : vector<9x8xf32> to vector<1x8xf32>
    %153 = vector.broadcast %151 : vector<8x1xf32> to vector<8x8xf32>
    %154 = vector.broadcast %152 : vector<1x8xf32> to vector<8x8xf32>
    %155 = arith.mulf %153, %154 : vector<8x8xf32>
    %156 = arith.addf %145, %155 : vector<8x8xf32>
    %c0_i32_45 = arith.constant 0 : i32
    %157 = vector.broadcast %c0_i32_45 : i32 to vector<8x8xi32>
    %158 = arith.cmpi eq, %16, %157 : vector<8x8xi32>
    %cst_46 = arith.constant 0.000000e+00 : f32
    %159 = vector.broadcast %cst_46 : f32 to vector<8x8xf32>
    %160 = arith.select %158, %111, %159 : vector<8x8xi1>, vector<8x8xf32>
    %cst_47 = arith.constant dense<0.000000e+00> : vector<8xf32>
    %161 = vector.multi_reduction <add>, %160, %cst_47 [1] : vector<8x8xf32> to vector<8xf32>
    %162 = vector.shape_cast %161 : vector<8xf32> to vector<8x1xf32>
    %163 = vector.extract_strided_slice %18 {offsets = [4, 0], sizes = [1, 8], strides = [1, 1]} : vector<9x8xf32> to vector<1x8xf32>
    %164 = vector.broadcast %162 : vector<8x1xf32> to vector<8x8xf32>
    %165 = vector.broadcast %163 : vector<1x8xf32> to vector<8x8xf32>
    %166 = arith.mulf %164, %165 : vector<8x8xf32>
    %167 = arith.addf %156, %166 : vector<8x8xf32>
    %c1_i32_48 = arith.constant 1 : i32
    %168 = vector.broadcast %c1_i32_48 : i32 to vector<8x8xi32>
    %169 = arith.cmpi eq, %16, %168 : vector<8x8xi32>
    %cst_49 = arith.constant 0.000000e+00 : f32
    %170 = vector.broadcast %cst_49 : f32 to vector<8x8xf32>
    %171 = arith.select %169, %111, %170 : vector<8x8xi1>, vector<8x8xf32>
    %cst_50 = arith.constant dense<0.000000e+00> : vector<8xf32>
    %172 = vector.multi_reduction <add>, %171, %cst_50 [1] : vector<8x8xf32> to vector<8xf32>
    %173 = vector.shape_cast %172 : vector<8xf32> to vector<8x1xf32>
    %174 = vector.extract_strided_slice %18 {offsets = [5, 0], sizes = [1, 8], strides = [1, 1]} : vector<9x8xf32> to vector<1x8xf32>
    %175 = vector.broadcast %173 : vector<8x1xf32> to vector<8x8xf32>
    %176 = vector.broadcast %174 : vector<1x8xf32> to vector<8x8xf32>
    %177 = arith.mulf %175, %176 : vector<8x8xf32>
    %178 = arith.addf %167, %177 : vector<8x8xf32>
    %c2_i32_51 = arith.constant 2 : i32
    %179 = vector.broadcast %c2_i32_51 : i32 to vector<8x8xi32>
    %180 = arith.cmpi eq, %16, %179 : vector<8x8xi32>
    %cst_52 = arith.constant 0.000000e+00 : f32
    %181 = vector.broadcast %cst_52 : f32 to vector<8x8xf32>
    %182 = arith.select %180, %111, %181 : vector<8x8xi1>, vector<8x8xf32>
    %cst_53 = arith.constant dense<0.000000e+00> : vector<8xf32>
    %183 = vector.multi_reduction <add>, %182, %cst_53 [1] : vector<8x8xf32> to vector<8xf32>
    %184 = vector.shape_cast %183 : vector<8xf32> to vector<8x1xf32>
    %185 = vector.extract_strided_slice %18 {offsets = [6, 0], sizes = [1, 8], strides = [1, 1]} : vector<9x8xf32> to vector<1x8xf32>
    %186 = vector.broadcast %184 : vector<8x1xf32> to vector<8x8xf32>
    %187 = vector.broadcast %185 : vector<1x8xf32> to vector<8x8xf32>
    %188 = arith.mulf %186, %187 : vector<8x8xf32>
    %189 = arith.addf %178, %188 : vector<8x8xf32>
    %c3_i32_54 = arith.constant 3 : i32
    %190 = vector.broadcast %c3_i32_54 : i32 to vector<8x8xi32>
    %191 = arith.cmpi eq, %16, %190 : vector<8x8xi32>
    %cst_55 = arith.constant 0.000000e+00 : f32
    %192 = vector.broadcast %cst_55 : f32 to vector<8x8xf32>
    %193 = arith.select %191, %111, %192 : vector<8x8xi1>, vector<8x8xf32>
    %cst_56 = arith.constant dense<0.000000e+00> : vector<8xf32>
    %194 = vector.multi_reduction <add>, %193, %cst_56 [1] : vector<8x8xf32> to vector<8xf32>
    %195 = vector.shape_cast %194 : vector<8xf32> to vector<8x1xf32>
    %196 = vector.extract_strided_slice %18 {offsets = [7, 0], sizes = [1, 8], strides = [1, 1]} : vector<9x8xf32> to vector<1x8xf32>
    %197 = vector.broadcast %195 : vector<8x1xf32> to vector<8x8xf32>
    %198 = vector.broadcast %196 : vector<1x8xf32> to vector<8x8xf32>
    %199 = arith.mulf %197, %198 : vector<8x8xf32>
    %200 = arith.addf %189, %199 : vector<8x8xf32>
    %c4_i32_57 = arith.constant 4 : i32
    %201 = vector.broadcast %c4_i32_57 : i32 to vector<8x8xi32>
    %202 = arith.cmpi eq, %16, %201 : vector<8x8xi32>
    %cst_58 = arith.constant 0.000000e+00 : f32
    %203 = vector.broadcast %cst_58 : f32 to vector<8x8xf32>
    %204 = arith.select %202, %111, %203 : vector<8x8xi1>, vector<8x8xf32>
    %cst_59 = arith.constant dense<0.000000e+00> : vector<8xf32>
    %205 = vector.multi_reduction <add>, %204, %cst_59 [1] : vector<8x8xf32> to vector<8xf32>
    %206 = vector.shape_cast %205 : vector<8xf32> to vector<8x1xf32>
    %207 = vector.extract_strided_slice %18 {offsets = [8, 0], sizes = [1, 8], strides = [1, 1]} : vector<9x8xf32> to vector<1x8xf32>
    %208 = vector.broadcast %206 : vector<8x1xf32> to vector<8x8xf32>
    %209 = vector.broadcast %207 : vector<1x8xf32> to vector<8x8xf32>
    %210 = arith.mulf %208, %209 : vector<8x8xf32>
    %211 = arith.addf %200, %210 : vector<8x8xf32>
    %c0_60 = arith.constant 0 : index
    %c0_61 = arith.constant 0 : index
    %212 = vector.load %arg13[%c0_60, %c0_61] : memref<8x32xf32, #tpu.memory_space<vmem>>, vector<8x8xf32>
    tpu.vector_store %arg13[%c0_60, %c0_61], %211 {strides = array<i32>} : memref<8x32xf32, #tpu.memory_space<vmem>>, vector<8x8xf32>,
    %213 = vector.extract_strided_slice %6 {offsets = [0, 8], sizes = [8, 8], strides = [1, 1]} : vector<8x96xf32> to vector<8x8xf32>
    %cst_62 = arith.constant 0.353553385 : f32
    %214 = vector.broadcast %cst_62 : f32 to vector<8x8xf32>
    %215 = arith.mulf %213, %214 : vector<8x8xf32>
    %216 = vector.extract_strided_slice %6 {offsets = [0, 40], sizes = [8, 8], strides = [1, 1]} : vector<8x96xf32> to vector<8x8xf32>
    %217 = vector.extract_strided_slice %6 {offsets = [0, 72], sizes = [8, 8], strides = [1, 1]} : vector<8x96xf32> to vector<8x8xf32>
    %cst_63 = arith.constant dense<0.000000e+00> : vector<8x8xf32>
    %218 = tpu.matmul %215, %216, %cst_63 {dimension_numbers = #tpu.dot_dimension_numbers<[1], [1], [0], [0], [0, 0, 1, 0], [], []>} : vector<8x8xf32>, vector<8x8xf32>, vector<8x8xf32> -> vector<8x8xf32>
    %cst_64 = arith.constant dense<0.000000e+00> : vector<8x9xf32>
    %219 = tpu.matmul %215, %17, %cst_64 {dimension_numbers = #tpu.dot_dimension_numbers<[1], [0], [0], [1], [0, 0, 1, 1], [], []>} : vector<8x8xf32>, vector<8x9xf32>, vector<8x9xf32> -> vector<8x9xf32>
    %c-4_i32_65 = arith.constant -4 : i32
    %220 = vector.broadcast %c-4_i32_65 : i32 to vector<8x8xi32>
    %221 = arith.cmpi eq, %16, %220 : vector<8x8xi32>
    %222 = vector.extract_strided_slice %219 {offsets = [0, 0], sizes = [8, 1], strides = [1, 1]} : vector<8x9xf32> to vector<8x1xf32>
    %cst_66 = arith.constant 0.000000e+00 : f32
    %223 = vector.shape_cast %222 : vector<8x1xf32> to vector<8x1xf32>
    %224 = vector.broadcast %223 : vector<8x1xf32> to vector<8x8xf32>
    %225 = vector.broadcast %cst_66 : f32 to vector<8x8xf32>
    %226 = arith.select %221, %224, %225 : vector<8x8xi1>, vector<8x8xf32>
    %227 = arith.addf %218, %226 : vector<8x8xf32>
    %c-3_i32_67 = arith.constant -3 : i32
    %228 = vector.broadcast %c-3_i32_67 : i32 to vector<8x8xi32>
    %229 = arith.cmpi eq, %16, %228 : vector<8x8xi32>
    %230 = vector.extract_strided_slice %219 {offsets = [0, 1], sizes = [8, 1], strides = [1, 1]} : vector<8x9xf32> to vector<8x1xf32>
    %cst_68 = arith.constant 0.000000e+00 : f32
    %231 = vector.shape_cast %230 : vector<8x1xf32> to vector<8x1xf32>
    %232 = vector.broadcast %231 : vector<8x1xf32> to vector<8x8xf32>
    %233 = vector.broadcast %cst_68 : f32 to vector<8x8xf32>
    %234 = arith.select %229, %232, %233 : vector<8x8xi1>, vector<8x8xf32>
    %235 = arith.addf %227, %234 : vector<8x8xf32>
    %c-2_i32_69 = arith.constant -2 : i32
    %236 = vector.broadcast %c-2_i32_69 : i32 to vector<8x8xi32>
    %237 = arith.cmpi eq, %16, %236 : vector<8x8xi32>
    %238 = vector.extract_strided_slice %219 {offsets = [0, 2], sizes = [8, 1], strides = [1, 1]} : vector<8x9xf32> to vector<8x1xf32>
    %cst_70 = arith.constant 0.000000e+00 : f32
    %239 = vector.shape_cast %238 : vector<8x1xf32> to vector<8x1xf32>
    %240 = vector.broadcast %239 : vector<8x1xf32> to vector<8x8xf32>
    %241 = vector.broadcast %cst_70 : f32 to vector<8x8xf32>
    %242 = arith.select %237, %240, %241 : vector<8x8xi1>, vector<8x8xf32>
    %243 = arith.addf %235, %242 : vector<8x8xf32>
    %c-1_i32_71 = arith.constant -1 : i32
    %244 = vector.broadcast %c-1_i32_71 : i32 to vector<8x8xi32>
    %245 = arith.cmpi eq, %16, %244 : vector<8x8xi32>
    %246 = vector.extract_strided_slice %219 {offsets = [0, 3], sizes = [8, 1], strides = [1, 1]} : vector<8x9xf32> to vector<8x1xf32>
    %cst_72 = arith.constant 0.000000e+00 : f32
    %247 = vector.shape_cast %246 : vector<8x1xf32> to vector<8x1xf32>
    %248 = vector.broadcast %247 : vector<8x1xf32> to vector<8x8xf32>
    %249 = vector.broadcast %cst_72 : f32 to vector<8x8xf32>
    %250 = arith.select %245, %248, %249 : vector<8x8xi1>, vector<8x8xf32>
    %251 = arith.addf %243, %250 : vector<8x8xf32>
    %c0_i32_73 = arith.constant 0 : i32
    %252 = vector.broadcast %c0_i32_73 : i32 to vector<8x8xi32>
    %253 = arith.cmpi eq, %16, %252 : vector<8x8xi32>
    %254 = vector.extract_strided_slice %219 {offsets = [0, 4], sizes = [8, 1], strides = [1, 1]} : vector<8x9xf32> to vector<8x1xf32>
    %cst_74 = arith.constant 0.000000e+00 : f32
    %255 = vector.shape_cast %254 : vector<8x1xf32> to vector<8x1xf32>
    %256 = vector.broadcast %255 : vector<8x1xf32> to vector<8x8xf32>
    %257 = vector.broadcast %cst_74 : f32 to vector<8x8xf32>
    %258 = arith.select %253, %256, %257 : vector<8x8xi1>, vector<8x8xf32>
    %259 = arith.addf %251, %258 : vector<8x8xf32>
    %c1_i32_75 = arith.constant 1 : i32
    %260 = vector.broadcast %c1_i32_75 : i32 to vector<8x8xi32>
    %261 = arith.cmpi eq, %16, %260 : vector<8x8xi32>
    %262 = vector.extract_strided_slice %219 {offsets = [0, 5], sizes = [8, 1], strides = [1, 1]} : vector<8x9xf32> to vector<8x1xf32>
    %cst_76 = arith.constant 0.000000e+00 : f32
    %263 = vector.shape_cast %262 : vector<8x1xf32> to vector<8x1xf32>
    %264 = vector.broadcast %263 : vector<8x1xf32> to vector<8x8xf32>
    %265 = vector.broadcast %cst_76 : f32 to vector<8x8xf32>
    %266 = arith.select %261, %264, %265 : vector<8x8xi1>, vector<8x8xf32>
    %267 = arith.addf %259, %266 : vector<8x8xf32>
    %c2_i32_77 = arith.constant 2 : i32
    %268 = vector.broadcast %c2_i32_77 : i32 to vector<8x8xi32>
    %269 = arith.cmpi eq, %16, %268 : vector<8x8xi32>
    %270 = vector.extract_strided_slice %219 {offsets = [0, 6], sizes = [8, 1], strides = [1, 1]} : vector<8x9xf32> to vector<8x1xf32>
    %cst_78 = arith.constant 0.000000e+00 : f32
    %271 = vector.shape_cast %270 : vector<8x1xf32> to vector<8x1xf32>
    %272 = vector.broadcast %271 : vector<8x1xf32> to vector<8x8xf32>
    %273 = vector.broadcast %cst_78 : f32 to vector<8x8xf32>
    %274 = arith.select %269, %272, %273 : vector<8x8xi1>, vector<8x8xf32>
    %275 = arith.addf %267, %274 : vector<8x8xf32>
    %c3_i32_79 = arith.constant 3 : i32
    %276 = vector.broadcast %c3_i32_79 : i32 to vector<8x8xi32>
    %277 = arith.cmpi eq, %16, %276 : vector<8x8xi32>
    %278 = vector.extract_strided_slice %219 {offsets = [0, 7], sizes = [8, 1], strides = [1, 1]} : vector<8x9xf32> to vector<8x1xf32>
    %cst_80 = arith.constant 0.000000e+00 : f32
    %279 = vector.shape_cast %278 : vector<8x1xf32> to vector<8x1xf32>
    %280 = vector.broadcast %279 : vector<8x1xf32> to vector<8x8xf32>
    %281 = vector.broadcast %cst_80 : f32 to vector<8x8xf32>
    %282 = arith.select %277, %280, %281 : vector<8x8xi1>, vector<8x8xf32>
    %283 = arith.addf %275, %282 : vector<8x8xf32>
    %c4_i32_81 = arith.constant 4 : i32
    %284 = vector.broadcast %c4_i32_81 : i32 to vector<8x8xi32>
    %285 = arith.cmpi eq, %16, %284 : vector<8x8xi32>
    %286 = vector.extract_strided_slice %219 {offsets = [0, 8], sizes = [8, 1], strides = [1, 1]} : vector<8x9xf32> to vector<8x1xf32>
    %cst_82 = arith.constant 0.000000e+00 : f32
    %287 = vector.shape_cast %286 : vector<8x1xf32> to vector<8x1xf32>
    %288 = vector.broadcast %287 : vector<8x1xf32> to vector<8x8xf32>
    %289 = vector.broadcast %cst_82 : f32 to vector<8x8xf32>
    %290 = arith.select %285, %288, %289 : vector<8x8xi1>, vector<8x8xf32>
    %291 = arith.addf %283, %290 : vector<8x8xf32>
    %cst_83 = arith.constant 0.000000e+00 : f32
    %292 = vector.broadcast %cst_83 : f32 to vector<8x8xf32>
    %293 = arith.cmpf oeq, %13, %292 : vector<8x8xf32>
    %cst_84 = arith.constant -1.000000e+04 : f32
    %294 = vector.broadcast %cst_84 : f32 to vector<8x8xf32>
    %295 = arith.select %293, %294, %291 : vector<8x8xi1>, vector<8x8xf32>
    %cst_85 = arith.constant dense<0xFF800000> : vector<8xf32>
    %296 = vector.multi_reduction <maximumf>, %295, %cst_85 [1] : vector<8x8xf32> to vector<8xf32>
    %297 = vector.shape_cast %296 : vector<8xf32> to vector<8x1xf32>
    %298 = vector.broadcast %297 : vector<8x1xf32> to vector<8x8xf32>
    %299 = arith.subf %295, %298 : vector<8x8xf32>
    %300 = math.exp %299 : vector<8x8xf32>
    %cst_86 = arith.constant dense<0.000000e+00> : vector<8xf32>
    %301 = vector.multi_reduction <add>, %300, %cst_86 [1] : vector<8x8xf32> to vector<8xf32>
    %302 = vector.shape_cast %301 : vector<8xf32> to vector<8x1xf32>
    %303 = tpu.reciprocal %302 {approx = true} : vector<8x1xf32> -> vector<8x1xf32>
    %304 = vector.broadcast %303 : vector<8x1xf32> to vector<8x8xf32>
    %305 = arith.mulf %300, %304 : vector<8x8xf32>
    %cst_87 = arith.constant dense<0.000000e+00> : vector<8x8xf32>
    %306 = tpu.matmul %305, %217, %cst_87 {dimension_numbers = #tpu.dot_dimension_numbers<[1], [0], [0], [1], [0, 0, 1, 1], [], []>} : vector<8x8xf32>, vector<8x8xf32>, vector<8x8xf32> -> vector<8x8xf32>
    %c-4_i32_88 = arith.constant -4 : i32
    %307 = vector.broadcast %c-4_i32_88 : i32 to vector<8x8xi32>
    %308 = arith.cmpi eq, %16, %307 : vector<8x8xi32>
    %cst_89 = arith.constant 0.000000e+00 : f32
    %309 = vector.broadcast %cst_89 : f32 to vector<8x8xf32>
    %310 = arith.select %308, %305, %309 : vector<8x8xi1>, vector<8x8xf32>
    %cst_90 = arith.constant dense<0.000000e+00> : vector<8xf32>
    %311 = vector.multi_reduction <add>, %310, %cst_90 [1] : vector<8x8xf32> to vector<8xf32>
    %312 = vector.shape_cast %311 : vector<8xf32> to vector<8x1xf32>
    %313 = vector.extract_strided_slice %18 {offsets = [0, 0], sizes = [1, 8], strides = [1, 1]} : vector<9x8xf32> to vector<1x8xf32>
    %314 = vector.broadcast %312 : vector<8x1xf32> to vector<8x8xf32>
    %315 = vector.broadcast %313 : vector<1x8xf32> to vector<8x8xf32>
    %316 = arith.mulf %314, %315 : vector<8x8xf32>
    %317 = arith.addf %306, %316 : vector<8x8xf32>
    %c-3_i32_91 = arith.constant -3 : i32
    %318 = vector.broadcast %c-3_i32_91 : i32 to vector<8x8xi32>
    %319 = arith.cmpi eq, %16, %318 : vector<8x8xi32>
    %cst_92 = arith.constant 0.000000e+00 : f32
    %320 = vector.broadcast %cst_92 : f32 to vector<8x8xf32>
    %321 = arith.select %319, %305, %320 : vector<8x8xi1>, vector<8x8xf32>
    %cst_93 = arith.constant dense<0.000000e+00> : vector<8xf32>
    %322 = vector.multi_reduction <add>, %321, %cst_93 [1] : vector<8x8xf32> to vector<8xf32>
    %323 = vector.shape_cast %322 : vector<8xf32> to vector<8x1xf32>
    %324 = vector.extract_strided_slice %18 {offsets = [1, 0], sizes = [1, 8], strides = [1, 1]} : vector<9x8xf32> to vector<1x8xf32>
    %325 = vector.broadcast %323 : vector<8x1xf32> to vector<8x8xf32>
    %326 = vector.broadcast %324 : vector<1x8xf32> to vector<8x8xf32>
    %327 = arith.mulf %325, %326 : vector<8x8xf32>
    %328 = arith.addf %317, %327 : vector<8x8xf32>
    %c-2_i32_94 = arith.constant -2 : i32
    %329 = vector.broadcast %c-2_i32_94 : i32 to vector<8x8xi32>
    %330 = arith.cmpi eq, %16, %329 : vector<8x8xi32>
    %cst_95 = arith.constant 0.000000e+00 : f32
    %331 = vector.broadcast %cst_95 : f32 to vector<8x8xf32>
    %332 = arith.select %330, %305, %331 : vector<8x8xi1>, vector<8x8xf32>
    %cst_96 = arith.constant dense<0.000000e+00> : vector<8xf32>
    %333 = vector.multi_reduction <add>, %332, %cst_96 [1] : vector<8x8xf32> to vector<8xf32>
    %334 = vector.shape_cast %333 : vector<8xf32> to vector<8x1xf32>
    %335 = vector.extract_strided_slice %18 {offsets = [2, 0], sizes = [1, 8], strides = [1, 1]} : vector<9x8xf32> to vector<1x8xf32>
    %336 = vector.broadcast %334 : vector<8x1xf32> to vector<8x8xf32>
    %337 = vector.broadcast %335 : vector<1x8xf32> to vector<8x8xf32>
    %338 = arith.mulf %336, %337 : vector<8x8xf32>
    %339 = arith.addf %328, %338 : vector<8x8xf32>
    %c-1_i32_97 = arith.constant -1 : i32
    %340 = vector.broadcast %c-1_i32_97 : i32 to vector<8x8xi32>
    %341 = arith.cmpi eq, %16, %340 : vector<8x8xi32>
    %cst_98 = arith.constant 0.000000e+00 : f32
    %342 = vector.broadcast %cst_98 : f32 to vector<8x8xf32>
    %343 = arith.select %341, %305, %342 : vector<8x8xi1>, vector<8x8xf32>
    %cst_99 = arith.constant dense<0.000000e+00> : vector<8xf32>
    %344 = vector.multi_reduction <add>, %343, %cst_99 [1] : vector<8x8xf32> to vector<8xf32>
    %345 = vector.shape_cast %344 : vector<8xf32> to vector<8x1xf32>
    %346 = vector.extract_strided_slice %18 {offsets = [3, 0], sizes = [1, 8], strides = [1, 1]} : vector<9x8xf32> to vector<1x8xf32>
    %347 = vector.broadcast %345 : vector<8x1xf32> to vector<8x8xf32>
    %348 = vector.broadcast %346 : vector<1x8xf32> to vector<8x8xf32>
    %349 = arith.mulf %347, %348 : vector<8x8xf32>
    %350 = arith.addf %339, %349 : vector<8x8xf32>
    %c0_i32_100 = arith.constant 0 : i32
    %351 = vector.broadcast %c0_i32_100 : i32 to vector<8x8xi32>
    %352 = arith.cmpi eq, %16, %351 : vector<8x8xi32>
    %cst_101 = arith.constant 0.000000e+00 : f32
    %353 = vector.broadcast %cst_101 : f32 to vector<8x8xf32>
    %354 = arith.select %352, %305, %353 : vector<8x8xi1>, vector<8x8xf32>
    %cst_102 = arith.constant dense<0.000000e+00> : vector<8xf32>
    %355 = vector.multi_reduction <add>, %354, %cst_102 [1] : vector<8x8xf32> to vector<8xf32>
    %356 = vector.shape_cast %355 : vector<8xf32> to vector<8x1xf32>
    %357 = vector.extract_strided_slice %18 {offsets = [4, 0], sizes = [1, 8], strides = [1, 1]} : vector<9x8xf32> to vector<1x8xf32>
    %358 = vector.broadcast %356 : vector<8x1xf32> to vector<8x8xf32>
    %359 = vector.broadcast %357 : vector<1x8xf32> to vector<8x8xf32>
    %360 = arith.mulf %358, %359 : vector<8x8xf32>
    %361 = arith.addf %350, %360 : vector<8x8xf32>
    %c1_i32_103 = arith.constant 1 : i32
    %362 = vector.broadcast %c1_i32_103 : i32 to vector<8x8xi32>
    %363 = arith.cmpi eq, %16, %362 : vector<8x8xi32>
    %cst_104 = arith.constant 0.000000e+00 : f32
    %364 = vector.broadcast %cst_104 : f32 to vector<8x8xf32>
    %365 = arith.select %363, %305, %364 : vector<8x8xi1>, vector<8x8xf32>
    %cst_105 = arith.constant dense<0.000000e+00> : vector<8xf32>
    %366 = vector.multi_reduction <add>, %365, %cst_105 [1] : vector<8x8xf32> to vector<8xf32>
    %367 = vector.shape_cast %366 : vector<8xf32> to vector<8x1xf32>
    %368 = vector.extract_strided_slice %18 {offsets = [5, 0], sizes = [1, 8], strides = [1, 1]} : vector<9x8xf32> to vector<1x8xf32>
    %369 = vector.broadcast %367 : vector<8x1xf32> to vector<8x8xf32>
    %370 = vector.broadcast %368 : vector<1x8xf32> to vector<8x8xf32>
    %371 = arith.mulf %369, %370 : vector<8x8xf32>
    %372 = arith.addf %361, %371 : vector<8x8xf32>
    %c2_i32_106 = arith.constant 2 : i32
    %373 = vector.broadcast %c2_i32_106 : i32 to vector<8x8xi32>
    %374 = arith.cmpi eq, %16, %373 : vector<8x8xi32>
    %cst_107 = arith.constant 0.000000e+00 : f32
    %375 = vector.broadcast %cst_107 : f32 to vector<8x8xf32>
    %376 = arith.select %374, %305, %375 : vector<8x8xi1>, vector<8x8xf32>
    %cst_108 = arith.constant dense<0.000000e+00> : vector<8xf32>
    %377 = vector.multi_reduction <add>, %376, %cst_108 [1] : vector<8x8xf32> to vector<8xf32>
    %378 = vector.shape_cast %377 : vector<8xf32> to vector<8x1xf32>
    %379 = vector.extract_strided_slice %18 {offsets = [6, 0], sizes = [1, 8], strides = [1, 1]} : vector<9x8xf32> to vector<1x8xf32>
    %380 = vector.broadcast %378 : vector<8x1xf32> to vector<8x8xf32>
    %381 = vector.broadcast %379 : vector<1x8xf32> to vector<8x8xf32>
    %382 = arith.mulf %380, %381 : vector<8x8xf32>
    %383 = arith.addf %372, %382 : vector<8x8xf32>
    %c3_i32_109 = arith.constant 3 : i32
    %384 = vector.broadcast %c3_i32_109 : i32 to vector<8x8xi32>
    %385 = arith.cmpi eq, %16, %384 : vector<8x8xi32>
    %cst_110 = arith.constant 0.000000e+00 : f32
    %386 = vector.broadcast %cst_110 : f32 to vector<8x8xf32>
    %387 = arith.select %385, %305, %386 : vector<8x8xi1>, vector<8x8xf32>
    %cst_111 = arith.constant dense<0.000000e+00> : vector<8xf32>
    %388 = vector.multi_reduction <add>, %387, %cst_111 [1] : vector<8x8xf32> to vector<8xf32>
    %389 = vector.shape_cast %388 : vector<8xf32> to vector<8x1xf32>
    %390 = vector.extract_strided_slice %18 {offsets = [7, 0], sizes = [1, 8], strides = [1, 1]} : vector<9x8xf32> to vector<1x8xf32>
    %391 = vector.broadcast %389 : vector<8x1xf32> to vector<8x8xf32>
    %392 = vector.broadcast %390 : vector<1x8xf32> to vector<8x8xf32>
    %393 = arith.mulf %391, %392 : vector<8x8xf32>
    %394 = arith.addf %383, %393 : vector<8x8xf32>
    %c4_i32_112 = arith.constant 4 : i32
    %395 = vector.broadcast %c4_i32_112 : i32 to vector<8x8xi32>
    %396 = arith.cmpi eq, %16, %395 : vector<8x8xi32>
    %cst_113 = arith.constant 0.000000e+00 : f32
    %397 = vector.broadcast %cst_113 : f32 to vector<8x8xf32>
    %398 = arith.select %396, %305, %397 : vector<8x8xi1>, vector<8x8xf32>
    %cst_114 = arith.constant dense<0.000000e+00> : vector<8xf32>
    %399 = vector.multi_reduction <add>, %398, %cst_114 [1] : vector<8x8xf32> to vector<8xf32>
    %400 = vector.shape_cast %399 : vector<8xf32> to vector<8x1xf32>
    %401 = vector.extract_strided_slice %18 {offsets = [8, 0], sizes = [1, 8], strides = [1, 1]} : vector<9x8xf32> to vector<1x8xf32>
    %402 = vector.broadcast %400 : vector<8x1xf32> to vector<8x8xf32>
    %403 = vector.broadcast %401 : vector<1x8xf32> to vector<8x8xf32>
    %404 = arith.mulf %402, %403 : vector<8x8xf32>
    %405 = arith.addf %394, %404 : vector<8x8xf32>
    %c0_115 = arith.constant 0 : index
    %c8 = arith.constant 8 : index
    %406 = vector.load %arg13[%c0_115, %c8] : memref<8x32xf32, #tpu.memory_space<vmem>>, vector<8x8xf32>
    tpu.vector_store %arg13[%c0_115, %c8], %405 {strides = array<i32>} : memref<8x32xf32, #tpu.memory_space<vmem>>, vector<8x8xf32>,
    %407 = vector.extract_strided_slice %6 {offsets = [0, 16], sizes = [8, 8], strides = [1, 1]} : vector<8x96xf32> to vector<8x8xf32>
    %cst_116 = arith.constant 0.353553385 : f32
    %408 = vector.broadcast %cst_116 : f32 to vector<8x8xf32>
    %409 = arith.mulf %407, %408 : vector<8x8xf32>
    %410 = vector.extract_strided_slice %6 {offsets = [0, 48], sizes = [8, 8], strides = [1, 1]} : vector<8x96xf32> to vector<8x8xf32>
    %411 = vector.extract_strided_slice %6 {offsets = [0, 80], sizes = [8, 8], strides = [1, 1]} : vector<8x96xf32> to vector<8x8xf32>
    %cst_117 = arith.constant dense<0.000000e+00> : vector<8x8xf32>
    %412 = tpu.matmul %409, %410, %cst_117 {dimension_numbers = #tpu.dot_dimension_numbers<[1], [1], [0], [0], [0, 0, 1, 0], [], []>} : vector<8x8xf32>, vector<8x8xf32>, vector<8x8xf32> -> vector<8x8xf32>
    %cst_118 = arith.constant dense<0.000000e+00> : vector<8x9xf32>
    %413 = tpu.matmul %409, %17, %cst_118 {dimension_numbers = #tpu.dot_dimension_numbers<[1], [0], [0], [1], [0, 0, 1, 1], [], []>} : vector<8x8xf32>, vector<8x9xf32>, vector<8x9xf32> -> vector<8x9xf32>
    %c-4_i32_119 = arith.constant -4 : i32
    %414 = vector.broadcast %c-4_i32_119 : i32 to vector<8x8xi32>
    %415 = arith.cmpi eq, %16, %414 : vector<8x8xi32>
    %416 = vector.extract_strided_slice %413 {offsets = [0, 0], sizes = [8, 1], strides = [1, 1]} : vector<8x9xf32> to vector<8x1xf32>
    %cst_120 = arith.constant 0.000000e+00 : f32
    %417 = vector.shape_cast %416 : vector<8x1xf32> to vector<8x1xf32>
    %418 = vector.broadcast %417 : vector<8x1xf32> to vector<8x8xf32>
    %419 = vector.broadcast %cst_120 : f32 to vector<8x8xf32>
    %420 = arith.select %415, %418, %419 : vector<8x8xi1>, vector<8x8xf32>
    %421 = arith.addf %412, %420 : vector<8x8xf32>
    %c-3_i32_121 = arith.constant -3 : i32
    %422 = vector.broadcast %c-3_i32_121 : i32 to vector<8x8xi32>
    %423 = arith.cmpi eq, %16, %422 : vector<8x8xi32>
    %424 = vector.extract_strided_slice %413 {offsets = [0, 1], sizes = [8, 1], strides = [1, 1]} : vector<8x9xf32> to vector<8x1xf32>
    %cst_122 = arith.constant 0.000000e+00 : f32
    %425 = vector.shape_cast %424 : vector<8x1xf32> to vector<8x1xf32>
    %426 = vector.broadcast %425 : vector<8x1xf32> to vector<8x8xf32>
    %427 = vector.broadcast %cst_122 : f32 to vector<8x8xf32>
    %428 = arith.select %423, %426, %427 : vector<8x8xi1>, vector<8x8xf32>
    %429 = arith.addf %421, %428 : vector<8x8xf32>
    %c-2_i32_123 = arith.constant -2 : i32
    %430 = vector.broadcast %c-2_i32_123 : i32 to vector<8x8xi32>
    %431 = arith.cmpi eq, %16, %430 : vector<8x8xi32>
    %432 = vector.extract_strided_slice %413 {offsets = [0, 2], sizes = [8, 1], strides = [1, 1]} : vector<8x9xf32> to vector<8x1xf32>
    %cst_124 = arith.constant 0.000000e+00 : f32
    %433 = vector.shape_cast %432 : vector<8x1xf32> to vector<8x1xf32>
    %434 = vector.broadcast %433 : vector<8x1xf32> to vector<8x8xf32>
    %435 = vector.broadcast %cst_124 : f32 to vector<8x8xf32>
    %436 = arith.select %431, %434, %435 : vector<8x8xi1>, vector<8x8xf32>
    %437 = arith.addf %429, %436 : vector<8x8xf32>
    %c-1_i32_125 = arith.constant -1 : i32
    %438 = vector.broadcast %c-1_i32_125 : i32 to vector<8x8xi32>
    %439 = arith.cmpi eq, %16, %438 : vector<8x8xi32>
    %440 = vector.extract_strided_slice %413 {offsets = [0, 3], sizes = [8, 1], strides = [1, 1]} : vector<8x9xf32> to vector<8x1xf32>
    %cst_126 = arith.constant 0.000000e+00 : f32
    %441 = vector.shape_cast %440 : vector<8x1xf32> to vector<8x1xf32>
    %442 = vector.broadcast %441 : vector<8x1xf32> to vector<8x8xf32>
    %443 = vector.broadcast %cst_126 : f32 to vector<8x8xf32>
    %444 = arith.select %439, %442, %443 : vector<8x8xi1>, vector<8x8xf32>
    %445 = arith.addf %437, %444 : vector<8x8xf32>
    %c0_i32_127 = arith.constant 0 : i32
    %446 = vector.broadcast %c0_i32_127 : i32 to vector<8x8xi32>
    %447 = arith.cmpi eq, %16, %446 : vector<8x8xi32>
    %448 = vector.extract_strided_slice %413 {offsets = [0, 4], sizes = [8, 1], strides = [1, 1]} : vector<8x9xf32> to vector<8x1xf32>
    %cst_128 = arith.constant 0.000000e+00 : f32
    %449 = vector.shape_cast %448 : vector<8x1xf32> to vector<8x1xf32>
    %450 = vector.broadcast %449 : vector<8x1xf32> to vector<8x8xf32>
    %451 = vector.broadcast %cst_128 : f32 to vector<8x8xf32>
    %452 = arith.select %447, %450, %451 : vector<8x8xi1>, vector<8x8xf32>
    %453 = arith.addf %445, %452 : vector<8x8xf32>
    %c1_i32_129 = arith.constant 1 : i32
    %454 = vector.broadcast %c1_i32_129 : i32 to vector<8x8xi32>
    %455 = arith.cmpi eq, %16, %454 : vector<8x8xi32>
    %456 = vector.extract_strided_slice %413 {offsets = [0, 5], sizes = [8, 1], strides = [1, 1]} : vector<8x9xf32> to vector<8x1xf32>
    %cst_130 = arith.constant 0.000000e+00 : f32
    %457 = vector.shape_cast %456 : vector<8x1xf32> to vector<8x1xf32>
    %458 = vector.broadcast %457 : vector<8x1xf32> to vector<8x8xf32>
    %459 = vector.broadcast %cst_130 : f32 to vector<8x8xf32>
    %460 = arith.select %455, %458, %459 : vector<8x8xi1>, vector<8x8xf32>
    %461 = arith.addf %453, %460 : vector<8x8xf32>
    %c2_i32_131 = arith.constant 2 : i32
    %462 = vector.broadcast %c2_i32_131 : i32 to vector<8x8xi32>
    %463 = arith.cmpi eq, %16, %462 : vector<8x8xi32>
    %464 = vector.extract_strided_slice %413 {offsets = [0, 6], sizes = [8, 1], strides = [1, 1]} : vector<8x9xf32> to vector<8x1xf32>
    %cst_132 = arith.constant 0.000000e+00 : f32
    %465 = vector.shape_cast %464 : vector<8x1xf32> to vector<8x1xf32>
    %466 = vector.broadcast %465 : vector<8x1xf32> to vector<8x8xf32>
    %467 = vector.broadcast %cst_132 : f32 to vector<8x8xf32>
    %468 = arith.select %463, %466, %467 : vector<8x8xi1>, vector<8x8xf32>
    %469 = arith.addf %461, %468 : vector<8x8xf32>
    %c3_i32_133 = arith.constant 3 : i32
    %470 = vector.broadcast %c3_i32_133 : i32 to vector<8x8xi32>
    %471 = arith.cmpi eq, %16, %470 : vector<8x8xi32>
    %472 = vector.extract_strided_slice %413 {offsets = [0, 7], sizes = [8, 1], strides = [1, 1]} : vector<8x9xf32> to vector<8x1xf32>
    %cst_134 = arith.constant 0.000000e+00 : f32
    %473 = vector.shape_cast %472 : vector<8x1xf32> to vector<8x1xf32>
    %474 = vector.broadcast %473 : vector<8x1xf32> to vector<8x8xf32>
    %475 = vector.broadcast %cst_134 : f32 to vector<8x8xf32>
    %476 = arith.select %471, %474, %475 : vector<8x8xi1>, vector<8x8xf32>
    %477 = arith.addf %469, %476 : vector<8x8xf32>
    %c4_i32_135 = arith.constant 4 : i32
    %478 = vector.broadcast %c4_i32_135 : i32 to vector<8x8xi32>
    %479 = arith.cmpi eq, %16, %478 : vector<8x8xi32>
    %480 = vector.extract_strided_slice %413 {offsets = [0, 8], sizes = [8, 1], strides = [1, 1]} : vector<8x9xf32> to vector<8x1xf32>
    %cst_136 = arith.constant 0.000000e+00 : f32
    %481 = vector.shape_cast %480 : vector<8x1xf32> to vector<8x1xf32>
    %482 = vector.broadcast %481 : vector<8x1xf32> to vector<8x8xf32>
    %483 = vector.broadcast %cst_136 : f32 to vector<8x8xf32>
    %484 = arith.select %479, %482, %483 : vector<8x8xi1>, vector<8x8xf32>
    %485 = arith.addf %477, %484 : vector<8x8xf32>
    %cst_137 = arith.constant 0.000000e+00 : f32
    %486 = vector.broadcast %cst_137 : f32 to vector<8x8xf32>
    %487 = arith.cmpf oeq, %13, %486 : vector<8x8xf32>
    %cst_138 = arith.constant -1.000000e+04 : f32
    %488 = vector.broadcast %cst_138 : f32 to vector<8x8xf32>
    %489 = arith.select %487, %488, %485 : vector<8x8xi1>, vector<8x8xf32>
    %cst_139 = arith.constant dense<0xFF800000> : vector<8xf32>
    %490 = vector.multi_reduction <maximumf>, %489, %cst_139 [1] : vector<8x8xf32> to vector<8xf32>
    %491 = vector.shape_cast %490 : vector<8xf32> to vector<8x1xf32>
    %492 = vector.broadcast %491 : vector<8x1xf32> to vector<8x8xf32>
    %493 = arith.subf %489, %492 : vector<8x8xf32>
    %494 = math.exp %493 : vector<8x8xf32>
    %cst_140 = arith.constant dense<0.000000e+00> : vector<8xf32>
    %495 = vector.multi_reduction <add>, %494, %cst_140 [1] : vector<8x8xf32> to vector<8xf32>
    %496 = vector.shape_cast %495 : vector<8xf32> to vector<8x1xf32>
    %497 = tpu.reciprocal %496 {approx = true} : vector<8x1xf32> -> vector<8x1xf32>
    %498 = vector.broadcast %497 : vector<8x1xf32> to vector<8x8xf32>
    %499 = arith.mulf %494, %498 : vector<8x8xf32>
    %cst_141 = arith.constant dense<0.000000e+00> : vector<8x8xf32>
    %500 = tpu.matmul %499, %411, %cst_141 {dimension_numbers = #tpu.dot_dimension_numbers<[1], [0], [0], [1], [0, 0, 1, 1], [], []>} : vector<8x8xf32>, vector<8x8xf32>, vector<8x8xf32> -> vector<8x8xf32>
    %c-4_i32_142 = arith.constant -4 : i32
    %501 = vector.broadcast %c-4_i32_142 : i32 to vector<8x8xi32>
    %502 = arith.cmpi eq, %16, %501 : vector<8x8xi32>
    %cst_143 = arith.constant 0.000000e+00 : f32
    %503 = vector.broadcast %cst_143 : f32 to vector<8x8xf32>
    %504 = arith.select %502, %499, %503 : vector<8x8xi1>, vector<8x8xf32>
    %cst_144 = arith.constant dense<0.000000e+00> : vector<8xf32>
    %505 = vector.multi_reduction <add>, %504, %cst_144 [1] : vector<8x8xf32> to vector<8xf32>
    %506 = vector.shape_cast %505 : vector<8xf32> to vector<8x1xf32>
    %507 = vector.extract_strided_slice %18 {offsets = [0, 0], sizes = [1, 8], strides = [1, 1]} : vector<9x8xf32> to vector<1x8xf32>
    %508 = vector.broadcast %506 : vector<8x1xf32> to vector<8x8xf32>
    %509 = vector.broadcast %507 : vector<1x8xf32> to vector<8x8xf32>
    %510 = arith.mulf %508, %509 : vector<8x8xf32>
    %511 = arith.addf %500, %510 : vector<8x8xf32>
    %c-3_i32_145 = arith.constant -3 : i32
    %512 = vector.broadcast %c-3_i32_145 : i32 to vector<8x8xi32>
    %513 = arith.cmpi eq, %16, %512 : vector<8x8xi32>
    %cst_146 = arith.constant 0.000000e+00 : f32
    %514 = vector.broadcast %cst_146 : f32 to vector<8x8xf32>
    %515 = arith.select %513, %499, %514 : vector<8x8xi1>, vector<8x8xf32>
    %cst_147 = arith.constant dense<0.000000e+00> : vector<8xf32>
    %516 = vector.multi_reduction <add>, %515, %cst_147 [1] : vector<8x8xf32> to vector<8xf32>
    %517 = vector.shape_cast %516 : vector<8xf32> to vector<8x1xf32>
    %518 = vector.extract_strided_slice %18 {offsets = [1, 0], sizes = [1, 8], strides = [1, 1]} : vector<9x8xf32> to vector<1x8xf32>
    %519 = vector.broadcast %517 : vector<8x1xf32> to vector<8x8xf32>
    %520 = vector.broadcast %518 : vector<1x8xf32> to vector<8x8xf32>
    %521 = arith.mulf %519, %520 : vector<8x8xf32>
    %522 = arith.addf %511, %521 : vector<8x8xf32>
    %c-2_i32_148 = arith.constant -2 : i32
    %523 = vector.broadcast %c-2_i32_148 : i32 to vector<8x8xi32>
    %524 = arith.cmpi eq, %16, %523 : vector<8x8xi32>
    %cst_149 = arith.constant 0.000000e+00 : f32
    %525 = vector.broadcast %cst_149 : f32 to vector<8x8xf32>
    %526 = arith.select %524, %499, %525 : vector<8x8xi1>, vector<8x8xf32>
    %cst_150 = arith.constant dense<0.000000e+00> : vector<8xf32>
    %527 = vector.multi_reduction <add>, %526, %cst_150 [1] : vector<8x8xf32> to vector<8xf32>
    %528 = vector.shape_cast %527 : vector<8xf32> to vector<8x1xf32>
    %529 = vector.extract_strided_slice %18 {offsets = [2, 0], sizes = [1, 8], strides = [1, 1]} : vector<9x8xf32> to vector<1x8xf32>
    %530 = vector.broadcast %528 : vector<8x1xf32> to vector<8x8xf32>
    %531 = vector.broadcast %529 : vector<1x8xf32> to vector<8x8xf32>
    %532 = arith.mulf %530, %531 : vector<8x8xf32>
    %533 = arith.addf %522, %532 : vector<8x8xf32>
    %c-1_i32_151 = arith.constant -1 : i32
    %534 = vector.broadcast %c-1_i32_151 : i32 to vector<8x8xi32>
    %535 = arith.cmpi eq, %16, %534 : vector<8x8xi32>
    %cst_152 = arith.constant 0.000000e+00 : f32
    %536 = vector.broadcast %cst_152 : f32 to vector<8x8xf32>
    %537 = arith.select %535, %499, %536 : vector<8x8xi1>, vector<8x8xf32>
    %cst_153 = arith.constant dense<0.000000e+00> : vector<8xf32>
    %538 = vector.multi_reduction <add>, %537, %cst_153 [1] : vector<8x8xf32> to vector<8xf32>
    %539 = vector.shape_cast %538 : vector<8xf32> to vector<8x1xf32>
    %540 = vector.extract_strided_slice %18 {offsets = [3, 0], sizes = [1, 8], strides = [1, 1]} : vector<9x8xf32> to vector<1x8xf32>
    %541 = vector.broadcast %539 : vector<8x1xf32> to vector<8x8xf32>
    %542 = vector.broadcast %540 : vector<1x8xf32> to vector<8x8xf32>
    %543 = arith.mulf %541, %542 : vector<8x8xf32>
    %544 = arith.addf %533, %543 : vector<8x8xf32>
    %c0_i32_154 = arith.constant 0 : i32
    %545 = vector.broadcast %c0_i32_154 : i32 to vector<8x8xi32>
    %546 = arith.cmpi eq, %16, %545 : vector<8x8xi32>
    %cst_155 = arith.constant 0.000000e+00 : f32
    %547 = vector.broadcast %cst_155 : f32 to vector<8x8xf32>
    %548 = arith.select %546, %499, %547 : vector<8x8xi1>, vector<8x8xf32>
    %cst_156 = arith.constant dense<0.000000e+00> : vector<8xf32>
    %549 = vector.multi_reduction <add>, %548, %cst_156 [1] : vector<8x8xf32> to vector<8xf32>
    %550 = vector.shape_cast %549 : vector<8xf32> to vector<8x1xf32>
    %551 = vector.extract_strided_slice %18 {offsets = [4, 0], sizes = [1, 8], strides = [1, 1]} : vector<9x8xf32> to vector<1x8xf32>
    %552 = vector.broadcast %550 : vector<8x1xf32> to vector<8x8xf32>
    %553 = vector.broadcast %551 : vector<1x8xf32> to vector<8x8xf32>
    %554 = arith.mulf %552, %553 : vector<8x8xf32>
    %555 = arith.addf %544, %554 : vector<8x8xf32>
    %c1_i32_157 = arith.constant 1 : i32
    %556 = vector.broadcast %c1_i32_157 : i32 to vector<8x8xi32>
    %557 = arith.cmpi eq, %16, %556 : vector<8x8xi32>
    %cst_158 = arith.constant 0.000000e+00 : f32
    %558 = vector.broadcast %cst_158 : f32 to vector<8x8xf32>
    %559 = arith.select %557, %499, %558 : vector<8x8xi1>, vector<8x8xf32>
    %cst_159 = arith.constant dense<0.000000e+00> : vector<8xf32>
    %560 = vector.multi_reduction <add>, %559, %cst_159 [1] : vector<8x8xf32> to vector<8xf32>
    %561 = vector.shape_cast %560 : vector<8xf32> to vector<8x1xf32>
    %562 = vector.extract_strided_slice %18 {offsets = [5, 0], sizes = [1, 8], strides = [1, 1]} : vector<9x8xf32> to vector<1x8xf32>
    %563 = vector.broadcast %561 : vector<8x1xf32> to vector<8x8xf32>
    %564 = vector.broadcast %562 : vector<1x8xf32> to vector<8x8xf32>
    %565 = arith.mulf %563, %564 : vector<8x8xf32>
    %566 = arith.addf %555, %565 : vector<8x8xf32>
    %c2_i32_160 = arith.constant 2 : i32
    %567 = vector.broadcast %c2_i32_160 : i32 to vector<8x8xi32>
    %568 = arith.cmpi eq, %16, %567 : vector<8x8xi32>
    %cst_161 = arith.constant 0.000000e+00 : f32
    %569 = vector.broadcast %cst_161 : f32 to vector<8x8xf32>
    %570 = arith.select %568, %499, %569 : vector<8x8xi1>, vector<8x8xf32>
    %cst_162 = arith.constant dense<0.000000e+00> : vector<8xf32>
    %571 = vector.multi_reduction <add>, %570, %cst_162 [1] : vector<8x8xf32> to vector<8xf32>
    %572 = vector.shape_cast %571 : vector<8xf32> to vector<8x1xf32>
    %573 = vector.extract_strided_slice %18 {offsets = [6, 0], sizes = [1, 8], strides = [1, 1]} : vector<9x8xf32> to vector<1x8xf32>
    %574 = vector.broadcast %572 : vector<8x1xf32> to vector<8x8xf32>
    %575 = vector.broadcast %573 : vector<1x8xf32> to vector<8x8xf32>
    %576 = arith.mulf %574, %575 : vector<8x8xf32>
    %577 = arith.addf %566, %576 : vector<8x8xf32>
    %c3_i32_163 = arith.constant 3 : i32
    %578 = vector.broadcast %c3_i32_163 : i32 to vector<8x8xi32>
    %579 = arith.cmpi eq, %16, %578 : vector<8x8xi32>
    %cst_164 = arith.constant 0.000000e+00 : f32
    %580 = vector.broadcast %cst_164 : f32 to vector<8x8xf32>
    %581 = arith.select %579, %499, %580 : vector<8x8xi1>, vector<8x8xf32>
    %cst_165 = arith.constant dense<0.000000e+00> : vector<8xf32>
    %582 = vector.multi_reduction <add>, %581, %cst_165 [1] : vector<8x8xf32> to vector<8xf32>
    %583 = vector.shape_cast %582 : vector<8xf32> to vector<8x1xf32>
    %584 = vector.extract_strided_slice %18 {offsets = [7, 0], sizes = [1, 8], strides = [1, 1]} : vector<9x8xf32> to vector<1x8xf32>
    %585 = vector.broadcast %583 : vector<8x1xf32> to vector<8x8xf32>
    %586 = vector.broadcast %584 : vector<1x8xf32> to vector<8x8xf32>
    %587 = arith.mulf %585, %586 : vector<8x8xf32>
    %588 = arith.addf %577, %587 : vector<8x8xf32>
    %c4_i32_166 = arith.constant 4 : i32
    %589 = vector.broadcast %c4_i32_166 : i32 to vector<8x8xi32>
    %590 = arith.cmpi eq, %16, %589 : vector<8x8xi32>
    %cst_167 = arith.constant 0.000000e+00 : f32
    %591 = vector.broadcast %cst_167 : f32 to vector<8x8xf32>
    %592 = arith.select %590, %499, %591 : vector<8x8xi1>, vector<8x8xf32>
    %cst_168 = arith.constant dense<0.000000e+00> : vector<8xf32>
    %593 = vector.multi_reduction <add>, %592, %cst_168 [1] : vector<8x8xf32> to vector<8xf32>
    %594 = vector.shape_cast %593 : vector<8xf32> to vector<8x1xf32>
    %595 = vector.extract_strided_slice %18 {offsets = [8, 0], sizes = [1, 8], strides = [1, 1]} : vector<9x8xf32> to vector<1x8xf32>
    %596 = vector.broadcast %594 : vector<8x1xf32> to vector<8x8xf32>
    %597 = vector.broadcast %595 : vector<1x8xf32> to vector<8x8xf32>
    %598 = arith.mulf %596, %597 : vector<8x8xf32>
    %599 = arith.addf %588, %598 : vector<8x8xf32>
    %c0_169 = arith.constant 0 : index
    %c16 = arith.constant 16 : index
    %600 = vector.load %arg13[%c0_169, %c16] : memref<8x32xf32, #tpu.memory_space<vmem>>, vector<8x8xf32>
    tpu.vector_store %arg13[%c0_169, %c16], %599 {strides = array<i32>} : memref<8x32xf32, #tpu.memory_space<vmem>>, vector<8x8xf32>,
    %601 = vector.extract_strided_slice %6 {offsets = [0, 24], sizes = [8, 8], strides = [1, 1]} : vector<8x96xf32> to vector<8x8xf32>
    %cst_170 = arith.constant 0.353553385 : f32
    %602 = vector.broadcast %cst_170 : f32 to vector<8x8xf32>
    %603 = arith.mulf %601, %602 : vector<8x8xf32>
    %604 = vector.extract_strided_slice %6 {offsets = [0, 56], sizes = [8, 8], strides = [1, 1]} : vector<8x96xf32> to vector<8x8xf32>
    %605 = vector.extract_strided_slice %6 {offsets = [0, 88], sizes = [8, 8], strides = [1, 1]} : vector<8x96xf32> to vector<8x8xf32>
    %cst_171 = arith.constant dense<0.000000e+00> : vector<8x8xf32>
    %606 = tpu.matmul %603, %604, %cst_171 {dimension_numbers = #tpu.dot_dimension_numbers<[1], [1], [0], [0], [0, 0, 1, 0], [], []>} : vector<8x8xf32>, vector<8x8xf32>, vector<8x8xf32> -> vector<8x8xf32>
    %cst_172 = arith.constant dense<0.000000e+00> : vector<8x9xf32>
    %607 = tpu.matmul %603, %17, %cst_172 {dimension_numbers = #tpu.dot_dimension_numbers<[1], [0], [0], [1], [0, 0, 1, 1], [], []>} : vector<8x8xf32>, vector<8x9xf32>, vector<8x9xf32> -> vector<8x9xf32>
    %c-4_i32_173 = arith.constant -4 : i32
    %608 = vector.broadcast %c-4_i32_173 : i32 to vector<8x8xi32>
    %609 = arith.cmpi eq, %16, %608 : vector<8x8xi32>
    %610 = vector.extract_strided_slice %607 {offsets = [0, 0], sizes = [8, 1], strides = [1, 1]} : vector<8x9xf32> to vector<8x1xf32>
    %cst_174 = arith.constant 0.000000e+00 : f32
    %611 = vector.shape_cast %610 : vector<8x1xf32> to vector<8x1xf32>
    %612 = vector.broadcast %611 : vector<8x1xf32> to vector<8x8xf32>
    %613 = vector.broadcast %cst_174 : f32 to vector<8x8xf32>
    %614 = arith.select %609, %612, %613 : vector<8x8xi1>, vector<8x8xf32>
    %615 = arith.addf %606, %614 : vector<8x8xf32>
    %c-3_i32_175 = arith.constant -3 : i32
    %616 = vector.broadcast %c-3_i32_175 : i32 to vector<8x8xi32>
    %617 = arith.cmpi eq, %16, %616 : vector<8x8xi32>
    %618 = vector.extract_strided_slice %607 {offsets = [0, 1], sizes = [8, 1], strides = [1, 1]} : vector<8x9xf32> to vector<8x1xf32>
    %cst_176 = arith.constant 0.000000e+00 : f32
    %619 = vector.shape_cast %618 : vector<8x1xf32> to vector<8x1xf32>
    %620 = vector.broadcast %619 : vector<8x1xf32> to vector<8x8xf32>
    %621 = vector.broadcast %cst_176 : f32 to vector<8x8xf32>
    %622 = arith.select %617, %620, %621 : vector<8x8xi1>, vector<8x8xf32>
    %623 = arith.addf %615, %622 : vector<8x8xf32>
    %c-2_i32_177 = arith.constant -2 : i32
    %624 = vector.broadcast %c-2_i32_177 : i32 to vector<8x8xi32>
    %625 = arith.cmpi eq, %16, %624 : vector<8x8xi32>
    %626 = vector.extract_strided_slice %607 {offsets = [0, 2], sizes = [8, 1], strides = [1, 1]} : vector<8x9xf32> to vector<8x1xf32>
    %cst_178 = arith.constant 0.000000e+00 : f32
    %627 = vector.shape_cast %626 : vector<8x1xf32> to vector<8x1xf32>
    %628 = vector.broadcast %627 : vector<8x1xf32> to vector<8x8xf32>
    %629 = vector.broadcast %cst_178 : f32 to vector<8x8xf32>
    %630 = arith.select %625, %628, %629 : vector<8x8xi1>, vector<8x8xf32>
    %631 = arith.addf %623, %630 : vector<8x8xf32>
    %c-1_i32_179 = arith.constant -1 : i32
    %632 = vector.broadcast %c-1_i32_179 : i32 to vector<8x8xi32>
    %633 = arith.cmpi eq, %16, %632 : vector<8x8xi32>
    %634 = vector.extract_strided_slice %607 {offsets = [0, 3], sizes = [8, 1], strides = [1, 1]} : vector<8x9xf32> to vector<8x1xf32>
    %cst_180 = arith.constant 0.000000e+00 : f32
    %635 = vector.shape_cast %634 : vector<8x1xf32> to vector<8x1xf32>
    %636 = vector.broadcast %635 : vector<8x1xf32> to vector<8x8xf32>
    %637 = vector.broadcast %cst_180 : f32 to vector<8x8xf32>
    %638 = arith.select %633, %636, %637 : vector<8x8xi1>, vector<8x8xf32>
    %639 = arith.addf %631, %638 : vector<8x8xf32>
    %c0_i32_181 = arith.constant 0 : i32
    %640 = vector.broadcast %c0_i32_181 : i32 to vector<8x8xi32>
    %641 = arith.cmpi eq, %16, %640 : vector<8x8xi32>
    %642 = vector.extract_strided_slice %607 {offsets = [0, 4], sizes = [8, 1], strides = [1, 1]} : vector<8x9xf32> to vector<8x1xf32>
    %cst_182 = arith.constant 0.000000e+00 : f32
    %643 = vector.shape_cast %642 : vector<8x1xf32> to vector<8x1xf32>
    %644 = vector.broadcast %643 : vector<8x1xf32> to vector<8x8xf32>
    %645 = vector.broadcast %cst_182 : f32 to vector<8x8xf32>
    %646 = arith.select %641, %644, %645 : vector<8x8xi1>, vector<8x8xf32>
    %647 = arith.addf %639, %646 : vector<8x8xf32>
    %c1_i32_183 = arith.constant 1 : i32
    %648 = vector.broadcast %c1_i32_183 : i32 to vector<8x8xi32>
    %649 = arith.cmpi eq, %16, %648 : vector<8x8xi32>
    %650 = vector.extract_strided_slice %607 {offsets = [0, 5], sizes = [8, 1], strides = [1, 1]} : vector<8x9xf32> to vector<8x1xf32>
    %cst_184 = arith.constant 0.000000e+00 : f32
    %651 = vector.shape_cast %650 : vector<8x1xf32> to vector<8x1xf32>
    %652 = vector.broadcast %651 : vector<8x1xf32> to vector<8x8xf32>
    %653 = vector.broadcast %cst_184 : f32 to vector<8x8xf32>
    %654 = arith.select %649, %652, %653 : vector<8x8xi1>, vector<8x8xf32>
    %655 = arith.addf %647, %654 : vector<8x8xf32>
    %c2_i32_185 = arith.constant 2 : i32
    %656 = vector.broadcast %c2_i32_185 : i32 to vector<8x8xi32>
    %657 = arith.cmpi eq, %16, %656 : vector<8x8xi32>
    %658 = vector.extract_strided_slice %607 {offsets = [0, 6], sizes = [8, 1], strides = [1, 1]} : vector<8x9xf32> to vector<8x1xf32>
    %cst_186 = arith.constant 0.000000e+00 : f32
    %659 = vector.shape_cast %658 : vector<8x1xf32> to vector<8x1xf32>
    %660 = vector.broadcast %659 : vector<8x1xf32> to vector<8x8xf32>
    %661 = vector.broadcast %cst_186 : f32 to vector<8x8xf32>
    %662 = arith.select %657, %660, %661 : vector<8x8xi1>, vector<8x8xf32>
    %663 = arith.addf %655, %662 : vector<8x8xf32>
    %c3_i32_187 = arith.constant 3 : i32
    %664 = vector.broadcast %c3_i32_187 : i32 to vector<8x8xi32>
    %665 = arith.cmpi eq, %16, %664 : vector<8x8xi32>
    %666 = vector.extract_strided_slice %607 {offsets = [0, 7], sizes = [8, 1], strides = [1, 1]} : vector<8x9xf32> to vector<8x1xf32>
    %cst_188 = arith.constant 0.000000e+00 : f32
    %667 = vector.shape_cast %666 : vector<8x1xf32> to vector<8x1xf32>
    %668 = vector.broadcast %667 : vector<8x1xf32> to vector<8x8xf32>
    %669 = vector.broadcast %cst_188 : f32 to vector<8x8xf32>
    %670 = arith.select %665, %668, %669 : vector<8x8xi1>, vector<8x8xf32>
    %671 = arith.addf %663, %670 : vector<8x8xf32>
    %c4_i32_189 = arith.constant 4 : i32
    %672 = vector.broadcast %c4_i32_189 : i32 to vector<8x8xi32>
    %673 = arith.cmpi eq, %16, %672 : vector<8x8xi32>
    %674 = vector.extract_strided_slice %607 {offsets = [0, 8], sizes = [8, 1], strides = [1, 1]} : vector<8x9xf32> to vector<8x1xf32>
    %cst_190 = arith.constant 0.000000e+00 : f32
    %675 = vector.shape_cast %674 : vector<8x1xf32> to vector<8x1xf32>
    %676 = vector.broadcast %675 : vector<8x1xf32> to vector<8x8xf32>
    %677 = vector.broadcast %cst_190 : f32 to vector<8x8xf32>
    %678 = arith.select %673, %676, %677 : vector<8x8xi1>, vector<8x8xf32>
    %679 = arith.addf %671, %678 : vector<8x8xf32>
    %cst_191 = arith.constant 0.000000e+00 : f32
    %680 = vector.broadcast %cst_191 : f32 to vector<8x8xf32>
    %681 = arith.cmpf oeq, %13, %680 : vector<8x8xf32>
    %cst_192 = arith.constant -1.000000e+04 : f32
    %682 = vector.broadcast %cst_192 : f32 to vector<8x8xf32>
    %683 = arith.select %681, %682, %679 : vector<8x8xi1>, vector<8x8xf32>
    %cst_193 = arith.constant dense<0xFF800000> : vector<8xf32>
    %684 = vector.multi_reduction <maximumf>, %683, %cst_193 [1] : vector<8x8xf32> to vector<8xf32>
    %685 = vector.shape_cast %684 : vector<8xf32> to vector<8x1xf32>
    %686 = vector.broadcast %685 : vector<8x1xf32> to vector<8x8xf32>
    %687 = arith.subf %683, %686 : vector<8x8xf32>
    %688 = math.exp %687 : vector<8x8xf32>
    %cst_194 = arith.constant dense<0.000000e+00> : vector<8xf32>
    %689 = vector.multi_reduction <add>, %688, %cst_194 [1] : vector<8x8xf32> to vector<8xf32>
    %690 = vector.shape_cast %689 : vector<8xf32> to vector<8x1xf32>
    %691 = tpu.reciprocal %690 {approx = true} : vector<8x1xf32> -> vector<8x1xf32>
    %692 = vector.broadcast %691 : vector<8x1xf32> to vector<8x8xf32>
    %693 = arith.mulf %688, %692 : vector<8x8xf32>
    %cst_195 = arith.constant dense<0.000000e+00> : vector<8x8xf32>
    %694 = tpu.matmul %693, %605, %cst_195 {dimension_numbers = #tpu.dot_dimension_numbers<[1], [0], [0], [1], [0, 0, 1, 1], [], []>} : vector<8x8xf32>, vector<8x8xf32>, vector<8x8xf32> -> vector<8x8xf32>
    %c-4_i32_196 = arith.constant -4 : i32
    %695 = vector.broadcast %c-4_i32_196 : i32 to vector<8x8xi32>
    %696 = arith.cmpi eq, %16, %695 : vector<8x8xi32>
    %cst_197 = arith.constant 0.000000e+00 : f32
    %697 = vector.broadcast %cst_197 : f32 to vector<8x8xf32>
    %698 = arith.select %696, %693, %697 : vector<8x8xi1>, vector<8x8xf32>
    %cst_198 = arith.constant dense<0.000000e+00> : vector<8xf32>
    %699 = vector.multi_reduction <add>, %698, %cst_198 [1] : vector<8x8xf32> to vector<8xf32>
    %700 = vector.shape_cast %699 : vector<8xf32> to vector<8x1xf32>
    %701 = vector.extract_strided_slice %18 {offsets = [0, 0], sizes = [1, 8], strides = [1, 1]} : vector<9x8xf32> to vector<1x8xf32>
    %702 = vector.broadcast %700 : vector<8x1xf32> to vector<8x8xf32>
    %703 = vector.broadcast %701 : vector<1x8xf32> to vector<8x8xf32>
    %704 = arith.mulf %702, %703 : vector<8x8xf32>
    %705 = arith.addf %694, %704 : vector<8x8xf32>
    %c-3_i32_199 = arith.constant -3 : i32
    %706 = vector.broadcast %c-3_i32_199 : i32 to vector<8x8xi32>
    %707 = arith.cmpi eq, %16, %706 : vector<8x8xi32>
    %cst_200 = arith.constant 0.000000e+00 : f32
    %708 = vector.broadcast %cst_200 : f32 to vector<8x8xf32>
    %709 = arith.select %707, %693, %708 : vector<8x8xi1>, vector<8x8xf32>
    %cst_201 = arith.constant dense<0.000000e+00> : vector<8xf32>
    %710 = vector.multi_reduction <add>, %709, %cst_201 [1] : vector<8x8xf32> to vector<8xf32>
    %711 = vector.shape_cast %710 : vector<8xf32> to vector<8x1xf32>
    %712 = vector.extract_strided_slice %18 {offsets = [1, 0], sizes = [1, 8], strides = [1, 1]} : vector<9x8xf32> to vector<1x8xf32>
    %713 = vector.broadcast %711 : vector<8x1xf32> to vector<8x8xf32>
    %714 = vector.broadcast %712 : vector<1x8xf32> to vector<8x8xf32>
    %715 = arith.mulf %713, %714 : vector<8x8xf32>
    %716 = arith.addf %705, %715 : vector<8x8xf32>
    %c-2_i32_202 = arith.constant -2 : i32
    %717 = vector.broadcast %c-2_i32_202 : i32 to vector<8x8xi32>
    %718 = arith.cmpi eq, %16, %717 : vector<8x8xi32>
    %cst_203 = arith.constant 0.000000e+00 : f32
    %719 = vector.broadcast %cst_203 : f32 to vector<8x8xf32>
    %720 = arith.select %718, %693, %719 : vector<8x8xi1>, vector<8x8xf32>
    %cst_204 = arith.constant dense<0.000000e+00> : vector<8xf32>
    %721 = vector.multi_reduction <add>, %720, %cst_204 [1] : vector<8x8xf32> to vector<8xf32>
    %722 = vector.shape_cast %721 : vector<8xf32> to vector<8x1xf32>
    %723 = vector.extract_strided_slice %18 {offsets = [2, 0], sizes = [1, 8], strides = [1, 1]} : vector<9x8xf32> to vector<1x8xf32>
    %724 = vector.broadcast %722 : vector<8x1xf32> to vector<8x8xf32>
    %725 = vector.broadcast %723 : vector<1x8xf32> to vector<8x8xf32>
    %726 = arith.mulf %724, %725 : vector<8x8xf32>
    %727 = arith.addf %716, %726 : vector<8x8xf32>
    %c-1_i32_205 = arith.constant -1 : i32
    %728 = vector.broadcast %c-1_i32_205 : i32 to vector<8x8xi32>
    %729 = arith.cmpi eq, %16, %728 : vector<8x8xi32>
    %cst_206 = arith.constant 0.000000e+00 : f32
    %730 = vector.broadcast %cst_206 : f32 to vector<8x8xf32>
    %731 = arith.select %729, %693, %730 : vector<8x8xi1>, vector<8x8xf32>
    %cst_207 = arith.constant dense<0.000000e+00> : vector<8xf32>
    %732 = vector.multi_reduction <add>, %731, %cst_207 [1] : vector<8x8xf32> to vector<8xf32>
    %733 = vector.shape_cast %732 : vector<8xf32> to vector<8x1xf32>
    %734 = vector.extract_strided_slice %18 {offsets = [3, 0], sizes = [1, 8], strides = [1, 1]} : vector<9x8xf32> to vector<1x8xf32>
    %735 = vector.broadcast %733 : vector<8x1xf32> to vector<8x8xf32>
    %736 = vector.broadcast %734 : vector<1x8xf32> to vector<8x8xf32>
    %737 = arith.mulf %735, %736 : vector<8x8xf32>
    %738 = arith.addf %727, %737 : vector<8x8xf32>
    %c0_i32_208 = arith.constant 0 : i32
    %739 = vector.broadcast %c0_i32_208 : i32 to vector<8x8xi32>
    %740 = arith.cmpi eq, %16, %739 : vector<8x8xi32>
    %cst_209 = arith.constant 0.000000e+00 : f32
    %741 = vector.broadcast %cst_209 : f32 to vector<8x8xf32>
    %742 = arith.select %740, %693, %741 : vector<8x8xi1>, vector<8x8xf32>
    %cst_210 = arith.constant dense<0.000000e+00> : vector<8xf32>
    %743 = vector.multi_reduction <add>, %742, %cst_210 [1] : vector<8x8xf32> to vector<8xf32>
    %744 = vector.shape_cast %743 : vector<8xf32> to vector<8x1xf32>
    %745 = vector.extract_strided_slice %18 {offsets = [4, 0], sizes = [1, 8], strides = [1, 1]} : vector<9x8xf32> to vector<1x8xf32>
    %746 = vector.broadcast %744 : vector<8x1xf32> to vector<8x8xf32>
    %747 = vector.broadcast %745 : vector<1x8xf32> to vector<8x8xf32>
    %748 = arith.mulf %746, %747 : vector<8x8xf32>
    %749 = arith.addf %738, %748 : vector<8x8xf32>
    %c1_i32_211 = arith.constant 1 : i32
    %750 = vector.broadcast %c1_i32_211 : i32 to vector<8x8xi32>
    %751 = arith.cmpi eq, %16, %750 : vector<8x8xi32>
    %cst_212 = arith.constant 0.000000e+00 : f32
    %752 = vector.broadcast %cst_212 : f32 to vector<8x8xf32>
    %753 = arith.select %751, %693, %752 : vector<8x8xi1>, vector<8x8xf32>
    %cst_213 = arith.constant dense<0.000000e+00> : vector<8xf32>
    %754 = vector.multi_reduction <add>, %753, %cst_213 [1] : vector<8x8xf32> to vector<8xf32>
    %755 = vector.shape_cast %754 : vector<8xf32> to vector<8x1xf32>
    %756 = vector.extract_strided_slice %18 {offsets = [5, 0], sizes = [1, 8], strides = [1, 1]} : vector<9x8xf32> to vector<1x8xf32>
    %757 = vector.broadcast %755 : vector<8x1xf32> to vector<8x8xf32>
    %758 = vector.broadcast %756 : vector<1x8xf32> to vector<8x8xf32>
    %759 = arith.mulf %757, %758 : vector<8x8xf32>
    %760 = arith.addf %749, %759 : vector<8x8xf32>
    %c2_i32_214 = arith.constant 2 : i32
    %761 = vector.broadcast %c2_i32_214 : i32 to vector<8x8xi32>
    %762 = arith.cmpi eq, %16, %761 : vector<8x8xi32>
    %cst_215 = arith.constant 0.000000e+00 : f32
    %763 = vector.broadcast %cst_215 : f32 to vector<8x8xf32>
    %764 = arith.select %762, %693, %763 : vector<8x8xi1>, vector<8x8xf32>
    %cst_216 = arith.constant dense<0.000000e+00> : vector<8xf32>
    %765 = vector.multi_reduction <add>, %764, %cst_216 [1] : vector<8x8xf32> to vector<8xf32>
    %766 = vector.shape_cast %765 : vector<8xf32> to vector<8x1xf32>
    %767 = vector.extract_strided_slice %18 {offsets = [6, 0], sizes = [1, 8], strides = [1, 1]} : vector<9x8xf32> to vector<1x8xf32>
    %768 = vector.broadcast %766 : vector<8x1xf32> to vector<8x8xf32>
    %769 = vector.broadcast %767 : vector<1x8xf32> to vector<8x8xf32>
    %770 = arith.mulf %768, %769 : vector<8x8xf32>
    %771 = arith.addf %760, %770 : vector<8x8xf32>
    %c3_i32_217 = arith.constant 3 : i32
    %772 = vector.broadcast %c3_i32_217 : i32 to vector<8x8xi32>
    %773 = arith.cmpi eq, %16, %772 : vector<8x8xi32>
    %cst_218 = arith.constant 0.000000e+00 : f32
    %774 = vector.broadcast %cst_218 : f32 to vector<8x8xf32>
    %775 = arith.select %773, %693, %774 : vector<8x8xi1>, vector<8x8xf32>
    %cst_219 = arith.constant dense<0.000000e+00> : vector<8xf32>
    %776 = vector.multi_reduction <add>, %775, %cst_219 [1] : vector<8x8xf32> to vector<8xf32>
    %777 = vector.shape_cast %776 : vector<8xf32> to vector<8x1xf32>
    %778 = vector.extract_strided_slice %18 {offsets = [7, 0], sizes = [1, 8], strides = [1, 1]} : vector<9x8xf32> to vector<1x8xf32>
    %779 = vector.broadcast %777 : vector<8x1xf32> to vector<8x8xf32>
    %780 = vector.broadcast %778 : vector<1x8xf32> to vector<8x8xf32>
    %781 = arith.mulf %779, %780 : vector<8x8xf32>
    %782 = arith.addf %771, %781 : vector<8x8xf32>
    %c4_i32_220 = arith.constant 4 : i32
    %783 = vector.broadcast %c4_i32_220 : i32 to vector<8x8xi32>
    %784 = arith.cmpi eq, %16, %783 : vector<8x8xi32>
    %cst_221 = arith.constant 0.000000e+00 : f32
    %785 = vector.broadcast %cst_221 : f32 to vector<8x8xf32>
    %786 = arith.select %784, %693, %785 : vector<8x8xi1>, vector<8x8xf32>
    %cst_222 = arith.constant dense<0.000000e+00> : vector<8xf32>
    %787 = vector.multi_reduction <add>, %786, %cst_222 [1] : vector<8x8xf32> to vector<8xf32>
    %788 = vector.shape_cast %787 : vector<8xf32> to vector<8x1xf32>
    %789 = vector.extract_strided_slice %18 {offsets = [8, 0], sizes = [1, 8], strides = [1, 1]} : vector<9x8xf32> to vector<1x8xf32>
    %790 = vector.broadcast %788 : vector<8x1xf32> to vector<8x8xf32>
    %791 = vector.broadcast %789 : vector<1x8xf32> to vector<8x8xf32>
    %792 = arith.mulf %790, %791 : vector<8x8xf32>
    %793 = arith.addf %782, %792 : vector<8x8xf32>
    %c0_223 = arith.constant 0 : index
    %c24 = arith.constant 24 : index
    %794 = vector.load %arg13[%c0_223, %c24] : memref<8x32xf32, #tpu.memory_space<vmem>>, vector<8x8xf32>
    tpu.vector_store %arg13[%c0_223, %c24], %793 {strides = array<i32>} : memref<8x32xf32, #tpu.memory_space<vmem>>, vector<8x8xf32>,
    %c0_224 = arith.constant 0 : index
    %c0_225 = arith.constant 0 : index
    %795 = vector.load %arg13[%c0_224, %c0_225] : memref<8x32xf32, #tpu.memory_space<vmem>>, vector<8x32xf32>
    %c0_226 = arith.constant 0 : index
    %c0_227 = arith.constant 0 : index
    %796 = vector.load %arg8[%c0_226, %c0_227] : memref<32x32xf32, #tpu.memory_space<vmem>>, vector<32x32xf32>
    %cst_228 = arith.constant dense<0.000000e+00> : vector<8x32xf32>
    %797 = tpu.matmul %795, %796, %cst_228 {dimension_numbers = #tpu.dot_dimension_numbers<[1], [0], [0], [1], [0, 0, 1, 1], [], []>} : vector<8x32xf32>, vector<32x32xf32>, vector<8x32xf32> -> vector<8x32xf32>
    %c0_229 = arith.constant 0 : index
    %c0_230 = arith.constant 0 : index
    %798 = vector.load %arg9[%c0_229, %c0_230] : memref<1x32xf32, #tpu.memory_space<vmem>>, vector<1x32xf32>
    %799 = vector.broadcast %798 : vector<1x32xf32> to vector<8x32xf32>
    %800 = arith.addf %797, %799 : vector<8x32xf32>
    %801 = arith.addf %1, %800 : vector<8x32xf32>
    %cst_231 = arith.constant dense<0.000000e+00> : vector<8xf32>
    %802 = vector.multi_reduction <add>, %801, %cst_231 [1] : vector<8x32xf32> to vector<8xf32>
    %803 = vector.shape_cast %802 : vector<8xf32> to vector<8x1xf32>
    %cst_232 = arith.constant 3.200000e+01 : f32
    %804 = vector.broadcast %cst_232 : f32 to vector<8x1xf32>
    %805 = arith.divf %803, %804 : vector<8x1xf32>
    %806 = vector.broadcast %805 : vector<8x1xf32> to vector<8x32xf32>
    %807 = arith.subf %801, %806 : vector<8x32xf32>
    %808 = arith.mulf %807, %807 : vector<8x32xf32>
    %cst_233 = arith.constant dense<0.000000e+00> : vector<8xf32>
    %809 = vector.multi_reduction <add>, %808, %cst_233 [1] : vector<8x32xf32> to vector<8xf32>
    %810 = vector.shape_cast %809 : vector<8xf32> to vector<8x1xf32>
    %cst_234 = arith.constant 3.200000e+01 : f32
    %811 = vector.broadcast %cst_234 : f32 to vector<8x1xf32>
    %812 = arith.divf %810, %811 : vector<8x1xf32>
    %cst_235 = arith.constant 9.99999974E-6 : f32
    %813 = vector.broadcast %cst_235 : f32 to vector<8x1xf32>
    %814 = arith.addf %812, %813 : vector<8x1xf32>
    %815 = math.rsqrt %814 : vector<8x1xf32>
    %816 = vector.broadcast %815 : vector<8x1xf32> to vector<8x32xf32>
    %817 = arith.mulf %807, %816 : vector<8x32xf32>
    %c0_236 = arith.constant 0 : index
    %c0_237 = arith.constant 0 : index
    %818 = vector.load %arg10[%c0_236, %c0_237] : memref<1x32xf32, #tpu.memory_space<vmem>>, vector<1x32xf32>
    %819 = vector.broadcast %818 : vector<1x32xf32> to vector<8x32xf32>
    %820 = arith.mulf %817, %819 : vector<8x32xf32>
    %c0_238 = arith.constant 0 : index
    %c0_239 = arith.constant 0 : index
    %821 = vector.load %arg11[%c0_238, %c0_239] : memref<1x32xf32, #tpu.memory_space<vmem>>, vector<1x32xf32>
    %822 = vector.broadcast %821 : vector<1x32xf32> to vector<8x32xf32>
    %823 = arith.addf %820, %822 : vector<8x32xf32>
    %c0_240 = arith.constant 0 : index
    %c0_241 = arith.constant 0 : index
    %c0_242 = arith.constant 0 : index
    %824 = vector.load %arg12[%c0_240, %c0_241, %c0_242] : memref<1x8x32xf32, #tpu.memory_space<vmem>>, vector<1x8x32xf32>
    %825 = vector.shape_cast %824 : vector<1x8x32xf32> to vector<8x32xf32>
    %826 = vector.shape_cast %823 : vector<8x32xf32> to vector<1x8x32xf32>
    tpu.vector_store %arg12[%c0_240, %c0_241, %c0_242], %826 {strides = array<i32>} : memref<1x8x32xf32, #tpu.memory_space<vmem>>, vector<1x8x32xf32>,
    return
  }
  func.func @transform_0(%arg0: i32) -> (i32, i32, i32) {
    %c0_i32 = arith.constant 0 : i32
    %c0_i32_0 = arith.constant 0 : i32
    %c0_i32_1 = arith.constant 0 : i32
    return %arg0, %c0_i32, %c0_i32_0 : i32, i32, i32
  }
  func.func @transform_1(%arg0: i32) -> (i32, i32, i32) {
    %c0_i32 = arith.constant 0 : i32
    %c0_i32_0 = arith.constant 0 : i32
    %c0_i32_1 = arith.constant 0 : i32
    return %arg0, %c0_i32, %c0_i32_0 : i32, i32, i32
  }
  func.func @transform_2(%arg0: i32) -> (i32, i32, i32) {
    %c0_i32 = arith.constant 0 : i32
    %c0_i32_0 = arith.constant 0 : i32
    %c0_i32_1 = arith.constant 0 : i32
    return %arg0, %c0_i32, %c0_i32_0 : i32, i32, i32
  }
  func.func @transform_3(%arg0: i32) -> (i32, i32) {
    %c0_i32 = arith.constant 0 : i32
    %c0_i32_0 = arith.constant 0 : i32
    %c0_i32_1 = arith.constant 0 : i32
    return %c0_i32, %c0_i32_0 : i32, i32
  }
  func.func @transform_4(%arg0: i32) -> (i32, i32) {
    %c0_i32 = arith.constant 0 : i32
    %c0_i32_0 = arith.constant 0 : i32
    %c0_i32_1 = arith.constant 0 : i32
    return %c0_i32, %c0_i32_0 : i32, i32
  }
  func.func @transform_5(%arg0: i32) -> (i32, i32) {
    %c0_i32 = arith.constant 0 : i32
    %c0_i32_0 = arith.constant 0 : i32
    %c0_i32_1 = arith.constant 0 : i32
    return %c0_i32, %c0_i32_0 : i32, i32
  }
  func.func @transform_6(%arg0: i32) -> (i32, i32) {
    %c0_i32 = arith.constant 0 : i32
    %c0_i32_0 = arith.constant 0 : i32
    %c0_i32_1 = arith.constant 0 : i32
    return %c0_i32, %c0_i32_0 : i32, i32
  }
  func.func @transform_7(%arg0: i32) -> (i32, i32) {
    %c0_i32 = arith.constant 0 : i32
    %c0_i32_0 = arith.constant 0 : i32
    %c0_i32_1 = arith.constant 0 : i32
    return %c0_i32, %c0_i32_0 : i32, i32
  }
  func.func @transform_8(%arg0: i32) -> (i32, i32) {
    %c0_i32 = arith.constant 0 : i32
    %c0_i32_0 = arith.constant 0 : i32
    %c0_i32_1 = arith.constant 0 : i32
    return %c0_i32, %c0_i32_0 : i32, i32
  }
  func.func @transform_9(%arg0: i32) -> (i32, i32) {
    %c0_i32 = arith.constant 0 : i32
    %c0_i32_0 = arith.constant 0 : i32
    %c0_i32_1 = arith.constant 0 : i32
    return %c0_i32, %c0_i32_0 : i32, i32
  }
  func.func @transform_10(%arg0: i32) -> (i32, i32) {
    %c0_i32 = arith.constant 0 : i32
    %c0_i32_0 = arith.constant 0 : i32
    %c0_i32_1 = arith.constant 0 : i32
    return %c0_i32, %c0_i32_0 : i32, i32
  }
  func.func @transform_11(%arg0: i32) -> (i32, i32, i32) {
    %c0_i32 = arith.constant 0 : i32
    %c0_i32_0 = arith.constant 0 : i32
    %c0_i32_1 = arith.constant 0 : i32
    return %arg0, %c0_i32, %c0_i32_0 : i32, i32, i32
  }
}

</mosaic_0001>

<llo_original>
// kernel: tpu_custom_call.1
$region0: #{tpu_custom_call.1}
  #allocation0 [shape = 'u32[]', space=smem, size = 0x4, offset = 0x4, fixed_abs, tag = 'smem constant byte address 0x4 - core index']
  #allocation1 [shape = 'u32[144,128]{1,0:T(1,128)}', space=vmem, size = 0x12000, scoped, tag = 'internal scratch']
  #allocation2 [shape = 'f32[8,32]{1,0:T(8,128)}', space=vmem, size = 0x1000, scoped, tag = 'scratch operand']
  %s0 = inlined_call_operand.hbm [shape: f32[2,8,32], index: 0, kind: input, shape index: {}]
  %s1 = inlined_call_operand.vmem [shape: f32[2,8,1], index: 1, kind: input, shape index: {}]
  %s2 = inlined_call_operand.hbm [shape: f32[2,1,8], index: 2, kind: input, shape index: {}]
  %s3 = inlined_call_operand.vmem [shape: f32[32,96], index: 3, kind: input, shape index: {}]
  %s4 = inlined_call_operand.hbm [shape: f32[1,96], index: 4, kind: input, shape index: {}]
  %s5 = inlined_call_operand.hbm [shape: f32[8,9], index: 5, kind: input, shape index: {}]
  %s6 = inlined_call_operand.vmem [shape: f32[9,8], index: 6, kind: input, shape index: {}]
  %s7 = inlined_call_operand.vmem [shape: f32[32,32], index: 7, kind: input, shape index: {}]
  %s8 = inlined_call_operand.vmem [shape: f32[1,32], index: 8, kind: input, shape index: {}]
  %s9 = inlined_call_operand.vmem [shape: f32[1,32], index: 9, kind: input, shape index: {}]
  %s10 = inlined_call_operand.vmem [shape: f32[1,32], index: 10, kind: input, shape index: {}]
  %s11 = inlined_call_operand.hbm [shape: f32[2,8,32], index: 11, kind: output, shape index: {}]
  %s12 = sld [smem:[#allocation0]]
  $region93: #{tpu_custom_call.1} parent=0
    _
  %s14 = ssub.s32 1, %s12
  %s15 = scalar_select 0, %s14, %s12
  $region1: #{tpu_custom_call.1} parent=0
    #allocation3 [shape = 'u8[8192]{0}', space=vmem, size = 0x2000, scoped, tag = 'input window, operand 0']
    #allocation4 [shape = 's32[2]{0}', space=sflag, size = 0x8, scoped, tag = 'scoped memory for tpu_custom_call.1']
    #allocation5 [shape = 's32[2]{0}', space=sflag, size = 0x8, scoped, tag = 'scoped memory for tpu_custom_call.1']
    #allocation6 [shape = 'u8[1024]{0}', space=vmem, size = 0x400, scoped, tag = 'input window, operand 2']
    #allocation7 [shape = 's32[2]{0}', space=sflag, size = 0x8, scoped, tag = 'scoped memory for tpu_custom_call.1']
    #allocation8 [shape = 'u8[512]{0}', space=vmem, size = 0x400, scoped, tag = 'input window, operand 4, single buffered']
    #allocation9 [shape = 'u8[4096]{0}', space=vmem, size = 0x1000, scoped, tag = 'input window, operand 5, single buffered']
    #allocation10 [shape = 's32[1]{0}', space=sflag, size = 0x4, scoped, tag = 'scoped memory for tpu_custom_call.1']
    #allocation11 [shape = 'u8[8192]{0}', space=vmem, size = 0x2000, scoped, tag = 'output window, operand 0']
    %16 = vsyncpa [#allocation4], 0
    %s17 = scalar_lea.sflag [#allocation4], 1
    %18 = vsyncpa %s17, 0
    %19 = vsyncpa [#allocation7], 0
    %s20 = scalar_lea.sflag [#allocation7], 1
    %21 = vsyncpa %s20, 0
    %22 = vsyncpa [#allocation10], 0
    %23 = vsyncpa [#allocation5], 0
    %s24 = scalar_lea.sflag [#allocation5], 1
    %25 = vsyncpa %s24, 0
    loop: start=0, step=1, limit=4
    $region2: #{tpu_custom_call.1} parent=1 // loop_pre_header
      _
    $region3: #{tpu_custom_call.1} parent=1 // loop_header
      %s27 = sphi 0, %s31
      %p28 = scmp.ge.s32.totalorder %s27, 4
      %s37 = sphi 0, %s39
      %s40 = sphi 0, %s37
      %s41 = sphi 0, %s40
      %s57 = sphi 0, %s41
      %s63 = sphi 0, %s65
      %s66 = sphi 0, %s63
      %s67 = sphi 0, %s66
      %s83 = sphi 0, %s67
      %s89 = sphi 0, %s91
      %s92 = sphi 0, %s89
      %s93 = sphi 0, %s92
      %s109 = sphi 0, %s93
      %s113 = sphi 0, %s113
      %s115 = sphi 0, %s113
      %s116 = sphi 0, %s115
      %s130 = sphi 0, %s116
      %s134 = sphi 0, %s134
      %s136 = sphi 0, %s134
      %s137 = sphi 0, %s136
      %s151 = sphi 0, %s137
      %s155 = sphi 0, %s155
      %s157 = sphi 0, %s155
      %s158 = sphi 0, %s157
      %s172 = sphi 0, %s158
      %s176 = sphi 0, %s176
      %s178 = sphi 0, %s176
      %s179 = sphi 0, %s178
      %s193 = sphi 0, %s179
      %s197 = sphi 0, %s197
      %s199 = sphi 0, %s197
      %s200 = sphi 0, %s199
      %s214 = sphi 0, %s200
      %s218 = sphi 0, %s218
      %s220 = sphi 0, %s218
      %s221 = sphi 0, %s220
      %s235 = sphi 0, %s221
      %s239 = sphi 0, %s239
      %s241 = sphi 0, %s239
      %s242 = sphi 0, %s241
      %s256 = sphi 0, %s242
      %s260 = sphi 0, %s260
      %s262 = sphi 0, %s260
      %s263 = sphi 0, %s262
      %s277 = sphi 0, %s263
      %s283 = sphi 0, %s285
      %s286 = sphi 0, %s283
      %s287 = sphi 0, %s286
      %s303 = sphi 0, %s287
    $region4: #{tpu_custom_call.1} parent=1 // loop_header_branch
      %30 = sbr.rel (%p28) target = $region8
    $region5: #{tpu_custom_call.1} parent=1 // loop_body
      %s32 = ssub.s32 %s27, 1
      %s33 = ssub.s32 %s27, 2
      %s34 = sadd.s32 %s27, 1
      %s35 = ssub.s32 %s27, %s34
      %p36 = scmp.eq.s32.totalorder %s35, 0
      %s38 = sadd.s32 %s37, 1
      %s39 = scalar_select %p36, %s37, %s38
      %p42 = pneg %p36
      %p43 = scmp.eq.s32.totalorder %s27, 1
      %p44 = por %p42, %p43
      %p45 = scmp.ne.s32.totalorder %s37, %s40
      %p46 = scmp.eq.s32.totalorder %s27, 0
      %p47 = por %p45, %p46
      %p48 = scmp.ne.s32.totalorder %s37, %s40
      %p49 = scmp.eq.s32.totalorder %s32, 1
      %p50 = por %p48, %p49
      %p51 = scmp.ne.s32.totalorder %s40, %s41
      %p52 = scmp.eq.s32.totalorder %s32, 0
      %p53 = por %p51, %p52
      %p54 = scmp.ne.s32.totalorder %s40, %s41
      %p55 = scmp.eq.s32.totalorder %s33, 1
      %p56 = por %p54, %p55
      %p58 = scmp.ne.s32.totalorder %s41, %s57
      %p59 = scmp.eq.s32.totalorder %s33, 0
      %p60 = por %p58, %p59
      %s61 = ssub.s32 %s27, %s34
      %p62 = scmp.eq.s32.totalorder %s61, 0
      %s64 = sadd.s32 %s63, 1
      %s65 = scalar_select %p62, %s63, %s64
      %p68 = pneg %p62
      %p69 = scmp.eq.s32.totalorder %s27, 1
      %p70 = por %p68, %p69
      %p71 = scmp.ne.s32.totalorder %s63, %s66
      %p72 = scmp.eq.s32.totalorder %s27, 0
      %p73 = por %p71, %p72
      %p74 = scmp.ne.s32.totalorder %s63, %s66
      %p75 = scmp.eq.s32.totalorder %s32, 1
      %p76 = por %p74, %p75
      %p77 = scmp.ne.s32.totalorder %s66, %s67
      %p78 = scmp.eq.s32.totalorder %s32, 0
      %p79 = por %p77, %p78
      %p80 = scmp.ne.s32.totalorder %s66, %s67
      %p81 = scmp.eq.s32.totalorder %s33, 1
      %p82 = por %p80, %p81
      %p84 = scmp.ne.s32.totalorder %s67, %s83
      %p85 = scmp.eq.s32.totalorder %s33, 0
      %p86 = por %p84, %p85
      %s87 = ssub.s32 %s27, %s34
      %p88 = scmp.eq.s32.totalorder %s87, 0
      %s90 = sadd.s32 %s89, 1
      %s91 = scalar_select %p88, %s89, %s90
      %p94 = pneg %p88
      %p95 = scmp.eq.s32.totalorder %s27, 1
      %p96 = por %p94, %p95
      %p97 = scmp.ne.s32.totalorder %s89, %s92
      %p98 = scmp.eq.s32.totalorder %s27, 0
      %p99 = por %p97, %p98
      %p100 = scmp.ne.s32.totalorder %s89, %s92
      %p101 = scmp.eq.s32.totalorder %s32, 1
      %p102 = por %p100, %p101
      %p103 = scmp.ne.s32.totalorder %s92, %s93
      %p104 = scmp.eq.s32.totalorder %s32, 0
      %p105 = por %p103, %p104
      %p106 = scmp.ne.s32.totalorder %s92, %s93
      %p107 = scmp.eq.s32.totalorder %s33, 1
      %p108 = por %p106, %p107
      %p110 = scmp.ne.s32.totalorder %s93, %s109
      %p111 = scmp.eq.s32.totalorder %s33, 0
      %p112 = por %p110, %p111
      %s114 = sadd.s32 %s113, 1
      %p117 = scmp.eq.s32.totalorder %s27, 1
      %p118 = scmp.ne.s32.totalorder %s113, %s115
      %p119 = scmp.eq.s32.totalorder %s27, 0
      %p120 = por %p118, %p119
      %p121 = scmp.ne.s32.totalorder %s113, %s115
      %p122 = scmp.eq.s32.totalorder %s32, 1
      %p123 = por %p121, %p122
      %p124 = scmp.ne.s32.totalorder %s115, %s116
      %p125 = scmp.eq.s32.totalorder %s32, 0
      %p126 = por %p124, %p125
      %p127 = scmp.ne.s32.totalorder %s115, %s116
      %p128 = scmp.eq.s32.totalorder %s33, 1
      %p129 = por %p127, %p128
      %p131 = scmp.ne.s32.totalorder %s116, %s130
      %p132 = scmp.eq.s32.totalorder %s33, 0
      %p133 = por %p131, %p132
      %s135 = sadd.s32 %s134, 1
      %p138 = scmp.eq.s32.totalorder %s27, 1
      %p139 = scmp.ne.s32.totalorder %s134, %s136
      %p140 = scmp.eq.s32.totalorder %s27, 0
      %p141 = por %p139, %p140
      %p142 = scmp.ne.s32.totalorder %s134, %s136
      %p143 = scmp.eq.s32.totalorder %s32, 1
      %p144 = por %p142, %p143
      %p145 = scmp.ne.s32.totalorder %s136, %s137
      %p146 = scmp.eq.s32.totalorder %s32, 0
      %p147 = por %p145, %p146
      %p148 = scmp.ne.s32.totalorder %s136, %s137
      %p149 = scmp.eq.s32.totalorder %s33, 1
      %p150 = por %p148, %p149
      %p152 = scmp.ne.s32.totalorder %s137, %s151
      %p153 = scmp.eq.s32.totalorder %s33, 0
      %p154 = por %p152, %p153
      %s156 = sadd.s32 %s155, 1
      %p159 = scmp.eq.s32.totalorder %s27, 1
      %p160 = scmp.ne.s32.totalorder %s155, %s157
      %p161 = scmp.eq.s32.totalorder %s27, 0
      %p162 = por %p160, %p161
      %p163 = scmp.ne.s32.totalorder %s155, %s157
      %p164 = scmp.eq.s32.totalorder %s32, 1
      %p165 = por %p163, %p164
      %p166 = scmp.ne.s32.totalorder %s157, %s158
      %p167 = scmp.eq.s32.totalorder %s32, 0
      %p168 = por %p166, %p167
      %p169 = scmp.ne.s32.totalorder %s157, %s158
      %p170 = scmp.eq.s32.totalorder %s33, 1
      %p171 = por %p169, %p170
      %p173 = scmp.ne.s32.totalorder %s158, %s172
      %p174 = scmp.eq.s32.totalorder %s33, 0
      %p175 = por %p173, %p174
      %s177 = sadd.s32 %s176, 1
      %p180 = scmp.eq.s32.totalorder %s27, 1
      %p181 = scmp.ne.s32.totalorder %s176, %s178
      %p182 = scmp.eq.s32.totalorder %s27, 0
      %p183 = por %p181, %p182
      %p184 = scmp.ne.s32.totalorder %s176, %s178
      %p185 = scmp.eq.s32.totalorder %s32, 1
      %p186 = por %p184, %p185
      %p187 = scmp.ne.s32.totalorder %s178, %s179
      %p188 = scmp.eq.s32.totalorder %s32, 0
      %p189 = por %p187, %p188
      %p190 = scmp.ne.s32.totalorder %s178, %s179
      %p191 = scmp.eq.s32.totalorder %s33, 1
      %p192 = por %p190, %p191
      %p194 = scmp.ne.s32.totalorder %s179, %s193
      %p195 = scmp.eq.s32.totalorder %s33, 0
      %p196 = por %p194, %p195
      %s198 = sadd.s32 %s197, 1
      %p201 = scmp.eq.s32.totalorder %s27, 1
      %p202 = scmp.ne.s32.totalorder %s197, %s199
      %p203 = scmp.eq.s32.totalorder %s27, 0
      %p204 = por %p202, %p203
      %p205 = scmp.ne.s32.totalorder %s197, %s199
      %p206 = scmp.eq.s32.totalorder %s32, 1
      %p207 = por %p205, %p206
      %p208 = scmp.ne.s32.totalorder %s199, %s200
      %p209 = scmp.eq.s32.totalorder %s32, 0
      %p210 = por %p208, %p209
      %p211 = scmp.ne.s32.totalorder %s199, %s200
      %p212 = scmp.eq.s32.totalorder %s33, 1
      %p213 = por %p211, %p212
      %p215 = scmp.ne.s32.totalorder %s200, %s214
      %p216 = scmp.eq.s32.totalorder %s33, 0
      %p217 = por %p215, %p216
      %s219 = sadd.s32 %s218, 1
      %p222 = scmp.eq.s32.totalorder %s27, 1
      %p223 = scmp.ne.s32.totalorder %s218, %s220
      %p224 = scmp.eq.s32.totalorder %s27, 0
      %p225 = por %p223, %p224
      %p226 = scmp.ne.s32.totalorder %s218, %s220
      %p227 = scmp.eq.s32.totalorder %s32, 1
      %p228 = por %p226, %p227
      %p229 = scmp.ne.s32.totalorder %s220, %s221
      %p230 = scmp.eq.s32.totalorder %s32, 0
      %p231 = por %p229, %p230
      %p232 = scmp.ne.s32.totalorder %s220, %s221
      %p233 = scmp.eq.s32.totalorder %s33, 1
      %p234 = por %p232, %p233
      %p236 = scmp.ne.s32.totalorder %s221, %s235
      %p237 = scmp.eq.s32.totalorder %s33, 0
      %p238 = por %p236, %p237
      %s240 = sadd.s32 %s239, 1
      %p243 = scmp.eq.s32.totalorder %s27, 1
      %p244 = scmp.ne.s32.totalorder %s239, %s241
      %p245 = scmp.eq.s32.totalorder %s27, 0
      %p246 = por %p244, %p245
      %p247 = scmp.ne.s32.totalorder %s239, %s241
      %p248 = scmp.eq.s32.totalorder %s32, 1
      %p249 = por %p247, %p248
      %p250 = scmp.ne.s32.totalorder %s241, %s242
      %p251 = scmp.eq.s32.totalorder %s32, 0
      %p252 = por %p250, %p251
      %p253 = scmp.ne.s32.totalorder %s241, %s242
      %p254 = scmp.eq.s32.totalorder %s33, 1
      %p255 = por %p253, %p254
      %p257 = scmp.ne.s32.totalorder %s242, %s256
      %p258 = scmp.eq.s32.totalorder %s33, 0
      %p259 = por %p257, %p258
      %s261 = sadd.s32 %s260, 1
      %p264 = scmp.eq.s32.totalorder %s27, 1
      %p265 = scmp.ne.s32.totalorder %s260, %s262
      %p266 = scmp.eq.s32.totalorder %s27, 0
      %p267 = por %p265, %p266
      %p268 = scmp.ne.s32.totalorder %s260, %s262
      %p269 = scmp.eq.s32.totalorder %s32, 1
      %p270 = por %p268, %p269
      %p271 = scmp.ne.s32.totalorder %s262, %s263
      %p272 = scmp.eq.s32.totalorder %s32, 0
      %p273 = por %p271, %p272
      %p274 = scmp.ne.s32.totalorder %s262, %s263
      %p275 = scmp.eq.s32.totalorder %s33, 1
      %p276 = por %p274, %p275
      %p278 = scmp.ne.s32.totalorder %s263, %s277
      %p279 = scmp.eq.s32.totalorder %s33, 0
      %p280 = por %p278, %p279
      %s281 = ssub.s32 %s27, %s34
      %p282 = scmp.eq.s32.totalorder %s281, 0
      %s284 = sadd.s32 %s283, 1
      %s285 = scalar_select %p282, %s283, %s284
      %p288 = pneg %p282
      %p289 = scmp.eq.s32.totalorder %s27, 1
      %p290 = por %p288, %p289
      %p291 = scmp.ne.s32.totalorder %s283, %s286
      %p292 = scmp.eq.s32.totalorder %s27, 0
      %p293 = por %p291, %p292
      %p294 = scmp.ne.s32.totalorder %s283, %s286
      %p295 = scmp.eq.s32.totalorder %s32, 1
      %p296 = por %p294, %p295
      %p297 = scmp.ne.s32.totalorder %s286, %s287
      %p298 = scmp.eq.s32.totalorder %s32, 0
      %p299 = por %p297, %p298
      %p300 = scmp.ne.s32.totalorder %s286, %s287
      %p301 = scmp.eq.s32.totalorder %s33, 1
      %p302 = por %p300, %p301
      %p304 = scmp.ne.s32.totalorder %s287, %s303
      %p305 = scmp.eq.s32.totalorder %s33, 0
      %p306 = por %p304, %p305
      %p307 = scmp.le.s32.totalorder 1, %s27
      %p308 = scmp.lt.s32.totalorder %s27, 3
      %p309 = pnand %p307, %p308
      %p310 = pneg %p309
      // Predicated region
      $region9: #{tpu_custom_call.1} parent=5 // pred_check
        _
      $region10: #{tpu_custom_call.1} parent=5 // pred_check_branch
        %312 = sbr.rel (%p309) target = $region12
      $region11: #{tpu_custom_call.1} parent=5 // pred_region
        %s313 = ssub.s32 %s27, 1
        // Predicated region
        $region13: #{tpu_custom_call.1} parent=11 // pred_check
          %p314 = pneg %p126
        $region14: #{tpu_custom_call.1} parent=11 // pred_check_branch
          %316 = sbr.rel (%p314) target = $region16
        $region15: #{tpu_custom_call.1} parent=11 // pred_region
          _
        $region16: #{tpu_custom_call.1} parent=11 // pred_fallthru
          _
        // Predicated region
        $region17: #{tpu_custom_call.1} parent=11 // pred_check
          %p317 = pneg %p147
        $region18: #{tpu_custom_call.1} parent=11 // pred_check_branch
          %319 = sbr.rel (%p317) target = $region20
        $region19: #{tpu_custom_call.1} parent=11 // pred_region
          %s321 = ssub.s32 16, 16
          %322 = vsyncadd [#allocation7], %s321
          %s324 = sshll.u32 [#allocation8], 4
          %s325 = int_to_ptr.vmem [resolvable:$true] %s324
          %327 = dma.hbm_to_vmem [thread:$0]  %s4, 16, %s325, [#allocation7]
        $region20: #{tpu_custom_call.1} parent=11 // pred_fallthru
          _
        // Predicated region
        $region21: #{tpu_custom_call.1} parent=11 // pred_check
          %p328 = pneg %p168
        $region22: #{tpu_custom_call.1} parent=11 // pred_check_branch
          %330 = sbr.rel (%p328) target = $region24
        $region23: #{tpu_custom_call.1} parent=11 // pred_region
          %s332 = ssub.s32 128, 128
          %333 = vsyncadd [#allocation10], %s332
          %s335 = sshll.u32 [#allocation9], 4
          %s336 = int_to_ptr.vmem [resolvable:$true] %s335
          %338 = dma.hbm_to_vmem [thread:$0]  %s5, 128, %s336, [#allocation10]
        $region24: #{tpu_custom_call.1} parent=11 // pred_fallthru
          _
        // Predicated region
        $region25: #{tpu_custom_call.1} parent=11 // pred_check
          %p339 = pneg %p189
        $region26: #{tpu_custom_call.1} parent=11 // pred_check_branch
          %341 = sbr.rel (%p339) target = $region28
        $region27: #{tpu_custom_call.1} parent=11 // pred_region
          _
        $region28: #{tpu_custom_call.1} parent=11 // pred_fallthru
          _
        // Predicated region
        $region29: #{tpu_custom_call.1} parent=11 // pred_check
          %p342 = pneg %p210
        $region30: #{tpu_custom_call.1} parent=11 // pred_check_branch
          %344 = sbr.rel (%p342) target = $region32
        $region31: #{tpu_custom_call.1} parent=11 // pred_region
          _
        $region32: #{tpu_custom_call.1} parent=11 // pred_fallthru
          _
        // Predicated region
        $region33: #{tpu_custom_call.1} parent=11 // pred_check
          %p345 = pneg %p231
        $region34: #{tpu_custom_call.1} parent=11 // pred_check_branch
          %347 = sbr.rel (%p345) target = $region36
        $region35: #{tpu_custom_call.1} parent=11 // pred_region
          _
        $region36: #{tpu_custom_call.1} parent=11 // pred_fallthru
          _
        // Predicated region
        $region37: #{tpu_custom_call.1} parent=11 // pred_check
          %p348 = pneg %p252
        $region38: #{tpu_custom_call.1} parent=11 // pred_check_branch
          %350 = sbr.rel (%p348) target = $region40
        $region39: #{tpu_custom_call.1} parent=11 // pred_region
          _
        $region40: #{tpu_custom_call.1} parent=11 // pred_fallthru
          _
        // Predicated region
        $region41: #{tpu_custom_call.1} parent=11 // pred_check
          %p351 = pneg %p273
        $region42: #{tpu_custom_call.1} parent=11 // pred_check_branch
          %353 = sbr.rel (%p351) target = $region44
        $region43: #{tpu_custom_call.1} parent=11 // pred_region
          _
        $region44: #{tpu_custom_call.1} parent=11 // pred_fallthru
          _
      $region12: #{tpu_custom_call.1} parent=5 // pred_fallthru
        _
      %p354 = scmp.lt.s32.totalorder %s27, 2
      // Predicated region
      $region45: #{tpu_custom_call.1} parent=5 // pred_check
        %p355 = pneg %p354
      $region46: #{tpu_custom_call.1} parent=5 // pred_check_branch
        %357 = sbr.rel (%p355) target = $region48
      $region47: #{tpu_custom_call.1} parent=5 // pred_region
        // Predicated region
        $region49: #{tpu_custom_call.1} parent=47 // pred_check
          %p358 = pneg %p47
        $region50: #{tpu_custom_call.1} parent=47 // pred_check_branch
          %360 = sbr.rel (%p358) target = $region52
        $region51: #{tpu_custom_call.1} parent=47 // pred_region
          %s361 = sand.u32 %s37, 1
          %s362 = scalar_lea.sflag [#allocation4], %s361
          %s363 = sand.u32 %s37, 1
          %s364 = smul.addr %s363, 8
          %s365 = scalar_lea.vmem [#allocation3], %s364
          %s367 = ssub.s32 128, 128
          %368 = vsyncadd %s362, %s367
          %s369 = smul.addr %s27, 128
          %s370 = scalar_lea.hbm %s0, %s369
          %s372 = sshll.u32 %s365, 4
          %s373 = int_to_ptr.vmem [resolvable:$true] %s372
          %375 = dma.hbm_to_vmem [thread:$0]  %s370, 128, %s373, %s362
        $region52: #{tpu_custom_call.1} parent=47 // pred_fallthru
          _
        // Predicated region
        $region53: #{tpu_custom_call.1} parent=47 // pred_check
          %p376 = pneg %p73
        $region54: #{tpu_custom_call.1} parent=47 // pred_check_branch
          %378 = sbr.rel (%p376) target = $region56
        $region55: #{tpu_custom_call.1} parent=47 // pred_region
          %p379 = scmp.lt.s32.totalorder %s27, 1
          %s380 = scalar_select %p379, %s27, 1
          %s381 = smul.addr %s380, 8
          %s382 = scalar_lea.vmem %s1, %s381
        $region56: #{tpu_custom_call.1} parent=47 // pred_fallthru
          _
        // Predicated region
        $region57: #{tpu_custom_call.1} parent=47 // pred_check
          %p383 = pneg %p99
        $region58: #{tpu_custom_call.1} parent=47 // pred_check_branch
          %385 = sbr.rel (%p383) target = $region60
        $region59: #{tpu_custom_call.1} parent=47 // pred_region
          %s386 = sand.u32 %s27, 1
          %s387 = scalar_lea.sflag [#allocation7], %s386
          %s388 = sand.u32 %s89, 1
          %s389 = scalar_lea.vmem [#allocation6], %s388
          %s391 = ssub.s32 16, 16
          %392 = vsyncadd %s387, %s391
          %s393 = smul.addr %s27, 16
          %s394 = scalar_lea.hbm %s2, %s393
          %s396 = sshll.u32 %s389, 4
          %s397 = int_to_ptr.vmem [resolvable:$true] %s396
          %399 = dma.hbm_to_vmem [thread:$0]  %s394, 16, %s397, %s387
        $region60: #{tpu_custom_call.1} parent=47 // pred_fallthru
          _
      $region48: #{tpu_custom_call.1} parent=5 // pred_fallthru
        _
      %p400 = scmp.le.s32.totalorder 1, %s27
      %p401 = scmp.lt.s32.totalorder %s27, 3
      %p402 = pnand %p400, %p401
      %p403 = pneg %p402
      // Predicated region
      $region61: #{tpu_custom_call.1} parent=5 // pred_check
        _
      $region62: #{tpu_custom_call.1} parent=5 // pred_check_branch
        %405 = sbr.rel (%p402) target = $region64
      $region63: #{tpu_custom_call.1} parent=5 // pred_region
        %s406 = ssub.s32 %s27, 1
        %s407 = sand.u32 %s40, 1
        %s408 = scalar_lea.sflag [#allocation4], %s407
        %s409 = sand.u32 %s40, 1
        %s410 = smul.addr %s409, 8
        %s411 = scalar_lea.vmem [#allocation3], %s410
        // Predicated region
        $region65: #{tpu_custom_call.1} parent=63 // pred_check
          %p412 = pneg %p53
        $region66: #{tpu_custom_call.1} parent=63 // pred_check_branch
          %414 = sbr.rel (%p412) target = $region68
        $region67: #{tpu_custom_call.1} parent=63 // pred_region
          %415 = dma.done %s408, 128
        $region68: #{tpu_custom_call.1} parent=63 // pred_fallthru
          _
        %s416 = sand.u32 %s32, 1
        %s417 = scalar_lea.sflag [#allocation7], %s416
        %s418 = sand.u32 %s92, 1
        %s419 = scalar_lea.vmem [#allocation6], %s418
        // Predicated region
        $region69: #{tpu_custom_call.1} parent=63 // pred_check
          %p420 = pneg %p105
        $region70: #{tpu_custom_call.1} parent=63 // pred_check_branch
          %422 = sbr.rel (%p420) target = $region72
        $region71: #{tpu_custom_call.1} parent=63 // pred_region
          %423 = dma.done %s417, 16
        $region72: #{tpu_custom_call.1} parent=63 // pred_fallthru
          _
        // Predicated region
        $region73: #{tpu_custom_call.1} parent=63 // pred_check
          %p424 = pneg %p147
        $region74: #{tpu_custom_call.1} parent=63 // pred_check_branch
          %426 = sbr.rel (%p424) target = $region76
        $region75: #{tpu_custom_call.1} parent=63 // pred_region
          %427 = dma.done [#allocation7], 16
        $region76: #{tpu_custom_call.1} parent=63 // pred_fallthru
          _
        // Predicated region
        $region77: #{tpu_custom_call.1} parent=63 // pred_check
          %p428 = pneg %p168
        $region78: #{tpu_custom_call.1} parent=63 // pred_check_branch
          %430 = sbr.rel (%p428) target = $region80
        $region79: #{tpu_custom_call.1} parent=63 // pred_region
          %431 = dma.done [#allocation10], 128
        $region80: #{tpu_custom_call.1} parent=63 // pred_fallthru
          _
        %s432 = sand.u32 %s40, 1
        %s433 = scalar_lea.sflag [#allocation4], %s432
        %s434 = sand.u32 %s40, 1
        %s435 = smul.addr %s434, 8
        %s436 = scalar_lea.vmem [#allocation3], %s435
        %p437 = pneg %p53
        %p438 = pneg %p50
        %p439 = scmp.lt.s32.totalorder %s32, 1
        %s440 = scalar_select %p439, %s32, 1
        %s441 = smul.addr %s440, 8
        %s442 = scalar_lea.vmem %s1, %s441
        %p443 = pneg %p79
        %p444 = pneg %p76
        %s445 = sand.u32 %s32, 1
        %s446 = scalar_lea.sflag [#allocation7], %s445
        %s447 = sand.u32 %s92, 1
        %s448 = scalar_lea.vmem [#allocation6], %s447
        %p449 = pneg %p105
        %p450 = pneg %p102
        %p451 = pneg %p126
        %p452 = pneg %p123
        %p453 = pneg %p147
        %p454 = pneg %p144
        %p455 = pneg %p168
        %p456 = pneg %p165
        %p457 = pneg %p189
        %p458 = pneg %p186
        %p459 = pneg %p210
        %p460 = pneg %p207
        %p461 = pneg %p231
        %p462 = pneg %p228
        %p463 = pneg %p252
        %p464 = pneg %p249
        %p465 = pneg %p273
        %p466 = pneg %p270
        %p467 = pneg %p299
        %p468 = pneg %p296
        %s469 = sand.u32 %s286, 1
        %s470 = scalar_lea.sflag [#allocation5], %s469
        %s471 = sand.u32 %s286, 1
        %s472 = smul.addr %s471, 8
        %s473 = scalar_lea.vmem [#allocation11], %s472
        %p474 = scmp.lt.s32.totalorder %s32, 1
        %s475 = scalar_select %p474, %s32, 1
        %s476 = smul.addr %s475, 8
        %s477 = scalar_lea.vmem %s1, %s476
        %v478 = vld [vmem:[%s411] sm:$0xff]
        %v479 = vld [vmem:[%s3] sm:$0xff]
        %v480 = vld [vmem:[%s3 + $0x8] sm:$0xff]
        %v481 = vld [vmem:[%s3 + $0x10] sm:$0xff]
        %v482 = vld [vmem:[%s3 + $0x18] sm:$0xff]
        %v483 = vld [vmem:[#allocation8] sm:$0x1]
        %v485 = vlaneseq
        %v486 = vshrl.u32 %v485, 7
        %v487 = vsub.s32 0, %v486
        %v488 = vrot.slane %v483, %v487
        %vm490 = vcmask 261120
        %v492 = vsel %vm490, %v478, 0
        %494 = vmatprep.subr.mxu0 0.0
        %495 = vmatpush1.msra.mxu0 %v479
        %496 = vmatprep.subr.mxu0 0.0
        %497 = vmatpush1.msra.mxu0 %v480
        %498 = vmatprep.subr.mxu0 0.0
        %499 = vmatpush1.msra.mxu0 %v481
        %500 = vmatprep.subr.mxu0 0.0
        %501 = vmatpush1.msra.mxu0 %v482
        %502 = vmatprep.subr.mxu0 0.0
        %503 = vmatpush1.msra.mxu0 0.0
        %504 = vmatprep.subr.mxu0 0.0
        %505 = vmatpush1.msra.mxu0 0.0
        %506 = vmatprep.subr.mxu0 0.0
        %507 = vmatpush1.msra.mxu0 0.0
        %508 = vmatprep.subr.mxu0 0.0
        %509 = vmatpush1.msra.mxu0 0.0
        %510 = vmatprep.subr.mxu0 0.0
        %511 = vmatpush1.msra.mxu0 0.0
        %512 = vmatprep.subr.mxu0 0.0
        %513 = vmatpush1.msra.mxu0 0.0
        %514 = vmatprep.subr.mxu0 0.0
        %515 = vmatpush1.msra.mxu0 0.0
        %516 = vmatprep.subr.mxu0 0.0
        %517 = vmatpush1.msra.mxu0 0.0
        %518 = vmatprep.subr.mxu0 0.0
        %519 = vmatpush1.msra.mxu0 0.0
        %520 = vmatprep.subr.mxu0 0.0
        %521 = vmatpush1.msra.mxu0 0.0
        %522 = vmatprep.subr.mxu0 0.0
        %523 = vmatpush1.msra.mxu0 0.0
        %524 = vmatprep.subr.mxu0 0.0
        %525 = vmatpush1.msra.mxu0 0.0
        %526 = vmatprep.subr.mxu0 0.0
        %527 = vmatpush1.msra.mxu0 0.0
        %528 = vmatprep.subr.mxu0 0.0
        %529 = vmatpush1.msra.mxu0 0.0
        %530 = vmatprep.subr.mxu0 0.0
        %531 = vmatpush1.msra.mxu0 0.0
        %532 = vmatprep.subr.mxu0 0.0
        %533 = vmatpush1.msra.mxu0 0.0
        %534 = vmatprep.subr.mxu0 0.0
        %535 = vmatpush1.msra.mxu0 0.0
        %536 = vmatprep.subr.mxu0 0.0
        %537 = vmatpush1.msra.mxu0 0.0
        %538 = vmatprep.subr.mxu0 0.0
        %539 = vmatpush1.msra.mxu0 0.0
        %540 = vmatprep.subr.mxu0 0.0
        %541 = vmatpush1.msra.mxu0 0.0
        %542 = vmatprep.subr.mxu0 0.0
        %543 = vmatpush1.msra.mxu0 0.0
        %544 = vmatprep.subr.mxu0 0.0
        %545 = vmatpush1.msra.mxu0 0.0
        %546 = vmatprep.subr.mxu0 0.0
        %547 = vmatpush1.msra.mxu0 0.0
        %548 = vmatprep.subr.mxu0 0.0
        %549 = vmatpush1.msra.mxu0 0.0
        %550 = vmatprep.subr.mxu0 0.0
        %551 = vmatpush1.msra.mxu0 0.0
        %552 = vmatprep.subr.mxu0 0.0
        %553 = vmatpush1.msra.mxu0 0.0
        %554 = vmatprep.subr.mxu0 0.0
        %555 = vmatpush1.msra.mxu0 0.0
        %556 = vmatprep.subr.mxu0 0.0
        %557 = vmatpush1.msra.mxu0 0.0
        %558 = vmatprep.mubr.f32.mxu0 0.0
        %559 = vmatmul.mubr.f32.gmra.mrb[0].mxu0 %v492
        %v560 = vpop.f32.mrb[0].mxu0
        %v561 = vadd.f32 %v488, %v560
        %v562 = vpop.f32.mrb[0].mxu0
        %563 = vdwg.mxu0
        %v564 = vld [vmem:[%s477] sm:$0xff]
        %v565 = vld [vmem:[%s419] sm:$0x1]
        %567 = vset.pattern.permute.xlu0 0
        %568 = vperm.xlu0 %567, %v564
        %v569 = vpop.permute.xlu0 %568
        %v572 = vlaneseq
        %v573 = vshrl.u32 %v572, 7
        %v574 = vsub.s32 0, %v573
        %v575 = vrot.slane %v565, %v574
        %v577 = vmul.f32 %v569, %v575
        %v578 = vlaneseq
        %v579 = vshrl.u32 %v578, 7
        %v580 = vlaneseq
        %v581 = vand.u32 %v580, 127
        %v582 = vsub.s32 %v581, %v579
        %v583 = vld [vmem:[#allocation9] sm:$0xff]
        %v584 = vld [vmem:[%s6] sm:$0xff]
        %v585 = vld [vmem:[%s6 + $0x8] sm:$0x1]
        %v586 = vmul.f32 %v561, 0.35355338
        %vm587 = vcmask 64512
        %v589 = vsel %vm587, %v586, 0
        %591 = vmatprep.subr.mxu0 0.0
        %592 = vmatpush1.msra.mxu0 %v583
        %593 = vmatprep.subr.mxu0 0.0
        %594 = vmatpush1.msra.mxu0 0.0
        %595 = vmatprep.subr.mxu0 0.0
        %596 = vmatpush1.msra.mxu0 0.0
        %597 = vmatprep.subr.mxu0 0.0
        %598 = vmatpush1.msra.mxu0 0.0
        %599 = vmatprep.subr.mxu0 0.0
        %600 = vmatpush1.msra.mxu0 0.0
        %601 = vmatprep.subr.mxu0 0.0
        %602 = vmatpush1.msra.mxu0 0.0
        %603 = vmatprep.subr.mxu0 0.0
        %604 = vmatpush1.msra.mxu0 0.0
        %605 = vmatprep.subr.mxu0 0.0
        %606 = vmatpush1.msra.mxu0 0.0
        %607 = vmatprep.subr.mxu0 0.0
        %608 = vmatpush1.msra.mxu0 0.0
        %609 = vmatprep.subr.mxu0 0.0
        %610 = vmatpush1.msra.mxu0 0.0
        %611 = vmatprep.subr.mxu0 0.0
        %612 = vmatpush1.msra.mxu0 0.0
        %613 = vmatprep.subr.mxu0 0.0
        %614 = vmatpush1.msra.mxu0 0.0
        %615 = vmatprep.subr.mxu0 0.0
        %616 = vmatpush1.msra.mxu0 0.0
        %617 = vmatprep.subr.mxu0 0.0
        %618 = vmatpush1.msra.mxu0 0.0
        %619 = vmatprep.subr.mxu0 0.0
        %620 = vmatpush1.msra.mxu0 0.0
        %621 = vmatprep.subr.mxu0 0.0
        %622 = vmatpush1.msra.mxu0 0.0
        %623 = vmatprep.subr.mxu0 0.0
        %624 = vmatpush1.msra.mxu0 0.0
        %625 = vmatprep.subr.mxu0 0.0
        %626 = vmatpush1.msra.mxu0 0.0
        %627 = vmatprep.subr.mxu0 0.0
        %628 = vmatpush1.msra.mxu0 0.0
        %629 = vmatprep.subr.mxu0 0.0
        %630 = vmatpush1.msra.mxu0 0.0
        %631 = vmatprep.subr.mxu0 0.0
        %632 = vmatpush1.msra.mxu0 0.0
        %633 = vmatprep.subr.mxu0 0.0
        %634 = vmatpush1.msra.mxu0 0.0
        %635 = vmatprep.subr.mxu0 0.0
        %636 = vmatpush1.msra.mxu0 0.0
        %637 = vmatprep.subr.mxu0 0.0
        %638 = vmatpush1.msra.mxu0 0.0
        %639 = vmatprep.subr.mxu0 0.0
        %640 = vmatpush1.msra.mxu0 0.0
        %641 = vmatprep.subr.mxu0 0.0
        %642 = vmatpush1.msra.mxu0 0.0
        %643 = vmatprep.subr.mxu0 0.0
        %644 = vmatpush1.msra.mxu0 0.0
        %645 = vmatprep.subr.mxu0 0.0
        %646 = vmatpush1.msra.mxu0 0.0
        %647 = vmatprep.subr.mxu0 0.0
        %648 = vmatpush1.msra.mxu0 0.0
        %649 = vmatprep.subr.mxu0 0.0
        %650 = vmatpush1.msra.mxu0 0.0
        %651 = vmatprep.subr.mxu0 0.0
        %652 = vmatpush1.msra.mxu0 0.0
        %653 = vmatprep.subr.mxu0 0.0
        %654 = vmatpush1.msra.mxu0 0.0
        %655 = vmatprep.mubr.f32.mxu0 0.0
        %656 = vmatmul.mubr.f32.gmra.mrb[0].mxu0 %v589
        %v657 = vpop.f32.mrb[0].mxu0
        %v658 = vadd.f32 0.0, %v657
        %v659 = vpop.f32.mrb[0].mxu0
        %660 = vdwg.mxu0
        %vm661 = vcmp.eq.s32.totalorder %v582, 4294967292
        %663 = vset.pattern.permute.xlu0 0
        %664 = vperm.xlu0 %663, %v658
        %v665 = vpop.permute.xlu0 %664
        %v667 = vsel %vm661, %v665, 0.0
        %669 = vrot.lane.b32.xlu0 %v561, 96
        %v670 = vpop.permute.xlu0 %669
        %v671 = vsel %vm587, %v670, 0
        %673 = vmatprep.subr.mxu0 0.0
        %674 = vmatpush1.xpose.msra.mxu0 %v671
        %675 = vmatprep.subr.mxu0 0.0
        %676 = vmatpush1.xpose.msra.mxu0 0.0
        %677 = vmatprep.subr.mxu0 0.0
        %678 = vmatpush1.xpose.msra.mxu0 0.0
        %679 = vmatprep.subr.mxu0 0.0
        %680 = vmatpush1.xpose.msra.mxu0 0.0
        %681 = vmatprep.subr.mxu0 0.0
        %682 = vmatpush1.xpose.msra.mxu0 0.0
        %683 = vmatprep.subr.mxu0 0.0
        %684 = vmatpush1.xpose.msra.mxu0 0.0
        %685 = vmatprep.subr.mxu0 0.0
        %686 = vmatpush1.xpose.msra.mxu0 0.0
        %687 = vmatprep.subr.mxu0 0.0
        %688 = vmatpush1.xpose.msra.mxu0 0.0
        %689 = vmatprep.subr.mxu0 0.0
        %690 = vmatpush1.xpose.msra.mxu0 0.0
        %691 = vmatprep.subr.mxu0 0.0
        %692 = vmatpush1.xpose.msra.mxu0 0.0
        %693 = vmatprep.subr.mxu0 0.0
        %694 = vmatpush1.xpose.msra.mxu0 0.0
        %695 = vmatprep.subr.mxu0 0.0
        %696 = vmatpush1.xpose.msra.mxu0 0.0
        %697 = vmatprep.subr.mxu0 0.0
        %698 = vmatpush1.xpose.msra.mxu0 0.0
        %699 = vmatprep.subr.mxu0 0.0
        %700 = vmatpush1.xpose.msra.mxu0 0.0
        %701 = vmatprep.subr.mxu0 0.0
        %702 = vmatpush1.xpose.msra.mxu0 0.0
        %703 = vmatprep.subr.mxu0 0.0
        %704 = vmatpush1.xpose.msra.mxu0 0.0
        %705 = vmatprep.subr.mxu0 0.0
        %706 = vmatpush1.xpose.msra.mxu0 0.0
        %707 = vmatprep.subr.mxu0 0.0
        %708 = vmatpush1.xpose.msra.mxu0 0.0
        %709 = vmatprep.subr.mxu0 0.0
        %710 = vmatpush1.xpose.msra.mxu0 0.0
        %711 = vmatprep.subr.mxu0 0.0
        %712 = vmatpush1.xpose.msra.mxu0 0.0
        %713 = vmatprep.subr.mxu0 0.0
        %714 = vmatpush1.xpose.msra.mxu0 0.0
        %715 = vmatprep.subr.mxu0 0.0
        %716 = vmatpush1.xpose.msra.mxu0 0.0
        %717 = vmatprep.subr.mxu0 0.0
        %718 = vmatpush1.xpose.msra.mxu0 0.0
        %719 = vmatprep.subr.mxu0 0.0
        %720 = vmatpush1.xpose.msra.mxu0 0.0
        %721 = vmatprep.subr.mxu0 0.0
        %722 = vmatpush1.xpose.msra.mxu0 0.0
        %723 = vmatprep.subr.mxu0 0.0
        %724 = vmatpush1.xpose.msra.mxu0 0.0
        %725 = vmatprep.subr.mxu0 0.0
        %726 = vmatpush1.xpose.msra.mxu0 0.0
        %727 = vmatprep.subr.mxu0 0.0
        %728 = vmatpush1.xpose.msra.mxu0 0.0
        %729 = vmatprep.subr.mxu0 0.0
        %730 = vmatpush1.xpose.msra.mxu0 0.0
        %731 = vmatprep.subr.mxu0 0.0
        %732 = vmatpush1.xpose.msra.mxu0 0.0
        %733 = vmatprep.subr.mxu0 0.0
        %734 = vmatpush1.xpose.msra.mxu0 0.0
        %735 = vmatprep.subr.mxu0 0.0
        %736 = vmatpush1.xpose.msra.mxu0 0.0
        %737 = vmatprep.mubr.f32.mxu0 0.0
        %738 = vmatmul.mubr.f32.gmra.mrb[0].mxu0 %v589
        %v739 = vpop.f32.mrb[0].mxu0
        %v740 = vadd.f32 %v667, %v739
        %v741 = vpop.f32.mrb[0].mxu0
        %742 = vdwg.mxu0
        %vm743 = vcmp.eq.s32.totalorder %v582, 4294967293
        %744 = vset.pattern.permute.xlu0 1
        %745 = vperm.xlu0 %744, %v658
        %v746 = vpop.permute.xlu0 %745
        %v748 = vsel %vm743, %v746, 0.0
        %v749 = vadd.f32 %v740, %v748
        %vm750 = vcmp.eq.s32.totalorder %v582, 4294967294
        %751 = vset.pattern.permute.xlu0 2
        %752 = vperm.xlu0 %751, %v658
        %v753 = vpop.permute.xlu0 %752
        %v755 = vsel %vm750, %v753, 0.0
        %v756 = vadd.f32 %v749, %v755
        %vm757 = vcmp.eq.s32.totalorder %v582, 4294967295
        %758 = vset.pattern.permute.xlu0 3
        %759 = vperm.xlu0 %758, %v658
        %v760 = vpop.permute.xlu0 %759
        %v762 = vsel %vm757, %v760, 0.0
        %v763 = vadd.f32 %v756, %v762
        %vm764 = vcmp.eq.s32.totalorder %v582, 0
        %765 = vset.pattern.permute.xlu0 4
        %766 = vperm.xlu0 %765, %v658
        %v767 = vpop.permute.xlu0 %766
        %v769 = vsel %vm764, %v767, 0.0
        %v770 = vadd.f32 %v763, %v769
        %vm771 = vcmp.eq.s32.totalorder %v582, 1
        %772 = vset.pattern.permute.xlu0 5
        %773 = vperm.xlu0 %772, %v658
        %v774 = vpop.permute.xlu0 %773
        %v776 = vsel %vm771, %v774, 0.0
        %v777 = vadd.f32 %v770, %v776
        %vm778 = vcmp.eq.s32.totalorder %v582, 2
        %779 = vset.pattern.permute.xlu0 6
        %780 = vperm.xlu0 %779, %v658
        %v781 = vpop.permute.xlu0 %780
        %v783 = vsel %vm778, %v781, 0.0
        %v784 = vadd.f32 %v777, %v783
        %vm785 = vcmp.eq.s32.totalorder %v582, 3
        %786 = vset.pattern.permute.xlu0 7
        %787 = vperm.xlu0 %786, %v658
        %v788 = vpop.permute.xlu0 %787
        %v790 = vsel %vm785, %v788, 0.0
        %v791 = vadd.f32 %v784, %v790
        %vm792 = vcmp.eq.s32.totalorder %v582, 4
        %793 = vset.pattern.permute.xlu0 8
        %794 = vperm.xlu0 %793, %v658
        %v795 = vpop.permute.xlu0 %794
        %v797 = vsel %vm792, %v795, 0.0
        %v798 = vadd.f32 %v791, %v797
        %vm799 = vcmp.eq.f32.partialorder %v577, 0.0
        %v800 = vsel %vm799, -10000.0, %v798
        %v801 = vsel %vm587, %v800, -inf
        %802 = vmax.xlane.f32.xlu0 %v801
        %v803 = vpop.xlane.xlu0 %802
        %v804 = vsub.f32 %v800, %v803
        %v805 = vmul.f32 %v804, 1.442695
        %v806 = vpow.pop %v805
        %v807 = vsel %vm587, %v806, 0.0
        %808 = vadd.xlane.f32.xlu0 %v807
        %v809 = vpop.xlane.xlu0 %808
        %v810 = vrcp.pop %v809
        %v811 = vmul.f32 %v806, %v810
        %v812 = vsel %vm661, %v811, 0.0
        %v813 = vsel %vm587, %v812, 0.0
        %814 = vadd.xlane.f32.xlu0 %v813
        %v815 = vpop.xlane.xlu0 %814
        %v816 = vlaneseq
        %v817 = vshrl.u32 %v816, 7
        %v818 = vsub.s32 0, %v817
        %v819 = vrot.slane %v584, %v818
        %v820 = vmul.f32 %v815, %v819
        %821 = vrot.lane.b32.xlu0 %v561, 64
        %v822 = vpop.permute.xlu0 %821
        %v825 = vsel %vm587, %v811, 0
        %827 = vmatprep.subr.mxu0 0.0
        %828 = vmatpush1.msra.mxu0 %v822
        %829 = vmatprep.subr.mxu0 0.0
        %830 = vmatpush1.msra.mxu0 0.0
        %831 = vmatprep.subr.mxu0 0.0
        %832 = vmatpush1.msra.mxu0 0.0
        %833 = vmatprep.subr.mxu0 0.0
        %834 = vmatpush1.msra.mxu0 0.0
        %835 = vmatprep.subr.mxu0 0.0
        %836 = vmatpush1.msra.mxu0 0.0
        %837 = vmatprep.subr.mxu0 0.0
        %838 = vmatpush1.msra.mxu0 0.0
        %839 = vmatprep.subr.mxu0 0.0
        %840 = vmatpush1.msra.mxu0 0.0
        %841 = vmatprep.subr.mxu0 0.0
        %842 = vmatpush1.msra.mxu0 0.0
        %843 = vmatprep.subr.mxu0 0.0
        %844 = vmatpush1.msra.mxu0 0.0
        %845 = vmatprep.subr.mxu0 0.0
        %846 = vmatpush1.msra.mxu0 0.0
        %847 = vmatprep.subr.mxu0 0.0
        %848 = vmatpush1.msra.mxu0 0.0
        %849 = vmatprep.subr.mxu0 0.0
        %850 = vmatpush1.msra.mxu0 0.0
        %851 = vmatprep.subr.mxu0 0.0
        %852 = vmatpush1.msra.mxu0 0.0
        %853 = vmatprep.subr.mxu0 0.0
        %854 = vmatpush1.msra.mxu0 0.0
        %855 = vmatprep.subr.mxu0 0.0
        %856 = vmatpush1.msra.mxu0 0.0
        %857 = vmatprep.subr.mxu0 0.0
        %858 = vmatpush1.msra.mxu0 0.0
        %859 = vmatprep.subr.mxu0 0.0
        %860 = vmatpush1.msra.mxu0 0.0
        %861 = vmatprep.subr.mxu0 0.0
        %862 = vmatpush1.msra.mxu0 0.0
        %863 = vmatprep.subr.mxu0 0.0
        %864 = vmatpush1.msra.mxu0 0.0
        %865 = vmatprep.subr.mxu0 0.0
        %866 = vmatpush1.msra.mxu0 0.0
        %867 = vmatprep.subr.mxu0 0.0
        %868 = vmatpush1.msra.mxu0 0.0
        %869 = vmatprep.subr.mxu0 0.0
        %870 = vmatpush1.msra.mxu0 0.0
        %871 = vmatprep.subr.mxu0 0.0
        %872 = vmatpush1.msra.mxu0 0.0
        %873 = vmatprep.subr.mxu0 0.0
        %874 = vmatpush1.msra.mxu0 0.0
        %875 = vmatprep.subr.mxu0 0.0
        %876 = vmatpush1.msra.mxu0 0.0
        %877 = vmatprep.subr.mxu0 0.0
        %878 = vmatpush1.msra.mxu0 0.0
        %879 = vmatprep.subr.mxu0 0.0
        %880 = vmatpush1.msra.mxu0 0.0
        %881 = vmatprep.subr.mxu0 0.0
        %882 = vmatpush1.msra.mxu0 0.0
        %883 = vmatprep.subr.mxu0 0.0
        %884 = vmatpush1.msra.mxu0 0.0
        %885 = vmatprep.subr.mxu0 0.0
        %886 = vmatpush1.msra.mxu0 0.0
        %887 = vmatprep.subr.mxu0 0.0
        %888 = vmatpush1.msra.mxu0 0.0
        %889 = vmatprep.subr.mxu0 0.0
        %890 = vmatpush1.msra.mxu0 0.0
        %891 = vmatprep.mubr.f32.mxu0 0.0
        %892 = vmatmul.mubr.f32.gmra.mrb[0].mxu0 %v825
        %v893 = vpop.f32.mrb[0].mxu0
        %v894 = vadd.f32 %v820, %v893
        %v895 = vpop.f32.mrb[0].mxu0
        %896 = vdwg.mxu0
        %v897 = vsel %vm743, %v811, 0.0
        %v898 = vsel %vm587, %v897, 0.0
        %899 = vadd.xlane.f32.xlu0 %v898
        %v900 = vpop.xlane.xlu0 %899
        %v901 = vlaneseq
        %v902 = vshrl.u32 %v901, 7
        %v903 = vsub.s32 1, %v902
        %v904 = vrot.slane %v584, %v903
        %v905 = vmul.f32 %v900, %v904
        %v906 = vadd.f32 %v894, %v905
        %v907 = vsel %vm750, %v811, 0.0
        %v908 = vsel %vm587, %v907, 0.0
        %909 = vadd.xlane.f32.xlu0 %v908
        %v910 = vpop.xlane.xlu0 %909
        %v911 = vlaneseq
        %v912 = vshrl.u32 %v911, 7
        %v913 = vsub.s32 2, %v912
        %v914 = vrot.slane %v584, %v913
        %v915 = vmul.f32 %v910, %v914
        %v916 = vadd.f32 %v906, %v915
        %v917 = vsel %vm757, %v811, 0.0
        %v918 = vsel %vm587, %v917, 0.0
        %919 = vadd.xlane.f32.xlu0 %v918
        %v920 = vpop.xlane.xlu0 %919
        %v921 = vlaneseq
        %v922 = vshrl.u32 %v921, 7
        %v923 = vsub.s32 3, %v922
        %v924 = vrot.slane %v584, %v923
        %v925 = vmul.f32 %v920, %v924
        %v926 = vadd.f32 %v916, %v925
        %v927 = vsel %vm764, %v811, 0.0
        %v928 = vsel %vm587, %v927, 0.0
        %929 = vadd.xlane.f32.xlu0 %v928
        %v930 = vpop.xlane.xlu0 %929
        %v931 = vlaneseq
        %v932 = vshrl.u32 %v931, 7
        %v933 = vsub.s32 4, %v932
        %v934 = vrot.slane %v584, %v933
        %v935 = vmul.f32 %v930, %v934
        %v936 = vadd.f32 %v926, %v935
        %v937 = vsel %vm771, %v811, 0.0
        %v938 = vsel %vm587, %v937, 0.0
        %939 = vadd.xlane.f32.xlu0 %v938
        %v940 = vpop.xlane.xlu0 %939
        %v941 = vlaneseq
        %v942 = vshrl.u32 %v941, 7
        %v943 = vsub.s32 5, %v942
        %v944 = vrot.slane %v584, %v943
        %v945 = vmul.f32 %v940, %v944
        %v946 = vadd.f32 %v936, %v945
        %v947 = vsel %vm778, %v811, 0.0
        %v948 = vsel %vm587, %v947, 0.0
        %949 = vadd.xlane.f32.xlu0 %v948
        %v950 = vpop.xlane.xlu0 %949
        %v951 = vlaneseq
        %v952 = vshrl.u32 %v951, 7
        %v953 = vsub.s32 6, %v952
        %v954 = vrot.slane %v584, %v953
        %v955 = vmul.f32 %v950, %v954
        %v956 = vadd.f32 %v946, %v955
        %v957 = vsel %vm785, %v811, 0.0
        %v958 = vsel %vm587, %v957, 0.0
        %959 = vadd.xlane.f32.xlu0 %v958
        %v960 = vpop.xlane.xlu0 %959
        %v961 = vlaneseq
        %v962 = vshrl.u32 %v961, 7
        %v963 = vsub.s32 7, %v962
        %v964 = vrot.slane %v584, %v963
        %v965 = vmul.f32 %v960, %v964
        %v966 = vadd.f32 %v956, %v965
        %v967 = vsel %vm792, %v811, 0.0
        %v968 = vsel %vm587, %v967, 0.0
        %969 = vadd.xlane.f32.xlu0 %v968
        %v970 = vpop.xlane.xlu0 %969
        %v971 = vlaneseq
        %v972 = vshrl.u32 %v971, 7
        %v973 = vsub.s32 0, %v972
        %v974 = vrot.slane %v585, %v973
        %v975 = vmul.f32 %v970, %v974
        %v976 = vadd.f32 %v966, %v975
        %977 = vst.msk [vmem:[#allocation2] sm:$0xff] %vm587, %v976
        %978 = vrot.lane.b32.xlu0 %v586, 120
        %v979 = vpop.permute.xlu0 %978
        %v980 = vsel %vm587, %v979, 0
        %982 = vmatprep.subr.mxu0 0.0
        %983 = vmatpush1.msra.mxu0 %v583
        %984 = vmatprep.subr.mxu0 0.0
        %985 = vmatpush1.msra.mxu0 0.0
        %986 = vmatprep.subr.mxu0 0.0
        %987 = vmatpush1.msra.mxu0 0.0
        %988 = vmatprep.subr.mxu0 0.0
        %989 = vmatpush1.msra.mxu0 0.0
        %990 = vmatprep.subr.mxu0 0.0
        %991 = vmatpush1.msra.mxu0 0.0
        %992 = vmatprep.subr.mxu0 0.0
        %993 = vmatpush1.msra.mxu0 0.0
        %994 = vmatprep.subr.mxu0 0.0
        %995 = vmatpush1.msra.mxu0 0.0
        %996 = vmatprep.subr.mxu0 0.0
        %997 = vmatpush1.msra.mxu0 0.0
        %998 = vmatprep.subr.mxu0 0.0
        %999 = vmatpush1.msra.mxu0 0.0
        %1000 = vmatprep.subr.mxu0 0.0
        %1001 = vmatpush1.msra.mxu0 0.0
        %1002 = vmatprep.subr.mxu0 0.0
        %1003 = vmatpush1.msra.mxu0 0.0
        %1004 = vmatprep.subr.mxu0 0.0
        %1005 = vmatpush1.msra.mxu0 0.0
        %1006 = vmatprep.subr.mxu0 0.0
        %1007 = vmatpush1.msra.mxu0 0.0
        %1008 = vmatprep.subr.mxu0 0.0
        %1009 = vmatpush1.msra.mxu0 0.0
        %1010 = vmatprep.subr.mxu0 0.0
        %1011 = vmatpush1.msra.mxu0 0.0
        %1012 = vmatprep.subr.mxu0 0.0
        %1013 = vmatpush1.msra.mxu0 0.0
        %1014 = vmatprep.subr.mxu0 0.0
        %1015 = vmatpush1.msra.mxu0 0.0
        %1016 = vmatprep.subr.mxu0 0.0
        %1017 = vmatpush1.msra.mxu0 0.0
        %1018 = vmatprep.subr.mxu0 0.0
        %1019 = vmatpush1.msra.mxu0 0.0
        %1020 = vmatprep.subr.mxu0 0.0
        %1021 = vmatpush1.msra.mxu0 0.0
        %1022 = vmatprep.subr.mxu0 0.0
        %1023 = vmatpush1.msra.mxu0 0.0
        %1024 = vmatprep.subr.mxu0 0.0
        %1025 = vmatpush1.msra.mxu0 0.0
        %1026 = vmatprep.subr.mxu0 0.0
        %1027 = vmatpush1.msra.mxu0 0.0
        %1028 = vmatprep.subr.mxu0 0.0
        %1029 = vmatpush1.msra.mxu0 0.0
        %1030 = vmatprep.subr.mxu0 0.0
        %1031 = vmatpush1.msra.mxu0 0.0
        %1032 = vmatprep.subr.mxu0 0.0
        %1033 = vmatpush1.msra.mxu0 0.0
        %1034 = vmatprep.subr.mxu0 0.0
        %1035 = vmatpush1.msra.mxu0 0.0
        %1036 = vmatprep.subr.mxu0 0.0
        %1037 = vmatpush1.msra.mxu0 0.0
        %1038 = vmatprep.subr.mxu0 0.0
        %1039 = vmatpush1.msra.mxu0 0.0
        %1040 = vmatprep.subr.mxu0 0.0
        %1041 = vmatpush1.msra.mxu0 0.0
        %1042 = vmatprep.subr.mxu0 0.0
        %1043 = vmatpush1.msra.mxu0 0.0
        %1044 = vmatprep.subr.mxu0 0.0
        %1045 = vmatpush1.msra.mxu0 0.0
        %1046 = vmatprep.mubr.f32.mxu0 0.0
        %1047 = vmatmul.mubr.f32.gmra.mrb[0].mxu0 %v980
        %v1048 = vpop.f32.mrb[0].mxu0
        %v1049 = vadd.f32 0.0, %v1048
        %v1050 = vpop.f32.mrb[0].mxu0
        %1051 = vdwg.mxu0
        %1053 = vset.pattern.permute.xlu0 0
        %1054 = vperm.xlu0 %1053, %v1049
        %v1055 = vpop.permute.xlu0 %1054
        %v1057 = vsel %vm661, %v1055, 0.0
        %1058 = vrot.lane.b32.xlu0 %v561, 88
        %v1059 = vpop.permute.xlu0 %1058
        %v1060 = vsel %vm587, %v1059, 0
        %1062 = vmatprep.subr.mxu0 0.0
        %1063 = vmatpush1.xpose.msra.mxu0 %v1060
        %1064 = vmatprep.subr.mxu0 0.0
        %1065 = vmatpush1.xpose.msra.mxu0 0.0
        %1066 = vmatprep.subr.mxu0 0.0
        %1067 = vmatpush1.xpose.msra.mxu0 0.0
        %1068 = vmatprep.subr.mxu0 0.0
        %1069 = vmatpush1.xpose.msra.mxu0 0.0
        %1070 = vmatprep.subr.mxu0 0.0
        %1071 = vmatpush1.xpose.msra.mxu0 0.0
        %1072 = vmatprep.subr.mxu0 0.0
        %1073 = vmatpush1.xpose.msra.mxu0 0.0
        %1074 = vmatprep.subr.mxu0 0.0
        %1075 = vmatpush1.xpose.msra.mxu0 0.0
        %1076 = vmatprep.subr.mxu0 0.0
        %1077 = vmatpush1.xpose.msra.mxu0 0.0
        %1078 = vmatprep.subr.mxu0 0.0
        %1079 = vmatpush1.xpose.msra.mxu0 0.0
        %1080 = vmatprep.subr.mxu0 0.0
        %1081 = vmatpush1.xpose.msra.mxu0 0.0
        %1082 = vmatprep.subr.mxu0 0.0
        %1083 = vmatpush1.xpose.msra.mxu0 0.0
        %1084 = vmatprep.subr.mxu0 0.0
        %1085 = vmatpush1.xpose.msra.mxu0 0.0
        %1086 = vmatprep.subr.mxu0 0.0
        %1087 = vmatpush1.xpose.msra.mxu0 0.0
        %1088 = vmatprep.subr.mxu0 0.0
        %1089 = vmatpush1.xpose.msra.mxu0 0.0
        %1090 = vmatprep.subr.mxu0 0.0
        %1091 = vmatpush1.xpose.msra.mxu0 0.0
        %1092 = vmatprep.subr.mxu0 0.0
        %1093 = vmatpush1.xpose.msra.mxu0 0.0
        %1094 = vmatprep.subr.mxu0 0.0
        %1095 = vmatpush1.xpose.msra.mxu0 0.0
        %1096 = vmatprep.subr.mxu0 0.0
        %1097 = vmatpush1.xpose.msra.mxu0 0.0
        %1098 = vmatprep.subr.mxu0 0.0
        %1099 = vmatpush1.xpose.msra.mxu0 0.0
        %1100 = vmatprep.subr.mxu0 0.0
        %1101 = vmatpush1.xpose.msra.mxu0 0.0
        %1102 = vmatprep.subr.mxu0 0.0
        %1103 = vmatpush1.xpose.msra.mxu0 0.0
        %1104 = vmatprep.subr.mxu0 0.0
        %1105 = vmatpush1.xpose.msra.mxu0 0.0
        %1106 = vmatprep.subr.mxu0 0.0
        %1107 = vmatpush1.xpose.msra.mxu0 0.0
        %1108 = vmatprep.subr.mxu0 0.0
        %1109 = vmatpush1.xpose.msra.mxu0 0.0
        %1110 = vmatprep.subr.mxu0 0.0
        %1111 = vmatpush1.xpose.msra.mxu0 0.0
        %1112 = vmatprep.subr.mxu0 0.0
        %1113 = vmatpush1.xpose.msra.mxu0 0.0
        %1114 = vmatprep.subr.mxu0 0.0
        %1115 = vmatpush1.xpose.msra.mxu0 0.0
        %1116 = vmatprep.subr.mxu0 0.0
        %1117 = vmatpush1.xpose.msra.mxu0 0.0
        %1118 = vmatprep.subr.mxu0 0.0
        %1119 = vmatpush1.xpose.msra.mxu0 0.0
        %1120 = vmatprep.subr.mxu0 0.0
        %1121 = vmatpush1.xpose.msra.mxu0 0.0
        %1122 = vmatprep.subr.mxu0 0.0
        %1123 = vmatpush1.xpose.msra.mxu0 0.0
        %1124 = vmatprep.subr.mxu0 0.0
        %1125 = vmatpush1.xpose.msra.mxu0 0.0
        %1126 = vmatprep.mubr.f32.mxu0 0.0
        %1127 = vmatmul.mubr.f32.gmra.mrb[0].mxu0 %v980
        %v1128 = vpop.f32.mrb[0].mxu0
        %v1129 = vadd.f32 %v1057, %v1128
        %v1130 = vpop.f32.mrb[0].mxu0
        %1131 = vdwg.mxu0
        %1132 = vset.pattern.permute.xlu0 1
        %1133 = vperm.xlu0 %1132, %v1049
        %v1134 = vpop.permute.xlu0 %1133
        %v1136 = vsel %vm743, %v1134, 0.0
        %v1137 = vadd.f32 %v1129, %v1136
        %1138 = vset.pattern.permute.xlu0 2
        %1139 = vperm.xlu0 %1138, %v1049
        %v1140 = vpop.permute.xlu0 %1139
        %v1142 = vsel %vm750, %v1140, 0.0
        %v1143 = vadd.f32 %v1137, %v1142
        %1144 = vset.pattern.permute.xlu0 3
        %1145 = vperm.xlu0 %1144, %v1049
        %v1146 = vpop.permute.xlu0 %1145
        %v1148 = vsel %vm757, %v1146, 0.0
        %v1149 = vadd.f32 %v1143, %v1148
        %1150 = vset.pattern.permute.xlu0 4
        %1151 = vperm.xlu0 %1150, %v1049
        %v1152 = vpop.permute.xlu0 %1151
        %v1154 = vsel %vm764, %v1152, 0.0
        %v1155 = vadd.f32 %v1149, %v1154
        %1156 = vset.pattern.permute.xlu0 5
        %1157 = vperm.xlu0 %1156, %v1049
        %v1158 = vpop.permute.xlu0 %1157
        %v1160 = vsel %vm771, %v1158, 0.0
        %v1161 = vadd.f32 %v1155, %v1160
        %1162 = vset.pattern.permute.xlu0 6
        %1163 = vperm.xlu0 %1162, %v1049
        %v1164 = vpop.permute.xlu0 %1163
        %v1166 = vsel %vm778, %v1164, 0.0
        %v1167 = vadd.f32 %v1161, %v1166
        %1168 = vset.pattern.permute.xlu0 7
        %1169 = vperm.xlu0 %1168, %v1049
        %v1170 = vpop.permute.xlu0 %1169
        %v1172 = vsel %vm785, %v1170, 0.0
        %v1173 = vadd.f32 %v1167, %v1172
        %1174 = vset.pattern.permute.xlu0 8
        %1175 = vperm.xlu0 %1174, %v1049
        %v1176 = vpop.permute.xlu0 %1175
        %v1178 = vsel %vm792, %v1176, 0.0
        %v1179 = vadd.f32 %v1173, %v1178
        %v1180 = vsel %vm799, -10000.0, %v1179
        %v1181 = vsel %vm587, %v1180, -inf
        %1182 = vmax.xlane.f32.xlu0 %v1181
        %v1183 = vpop.xlane.xlu0 %1182
        %v1184 = vsub.f32 %v1180, %v1183
        %v1185 = vmul.f32 %v1184, 1.442695
        %v1186 = vpow.pop %v1185
        %v1187 = vsel %vm587, %v1186, 0.0
        %1188 = vadd.xlane.f32.xlu0 %v1187
        %v1189 = vpop.xlane.xlu0 %1188
        %v1190 = vrcp.pop %v1189
        %v1191 = vmul.f32 %v1186, %v1190
        %v1192 = vsel %vm661, %v1191, 0.0
        %v1193 = vsel %vm587, %v1192, 0.0
        %1194 = vadd.xlane.f32.xlu0 %v1193
        %v1195 = vpop.xlane.xlu0 %1194
        %v1196 = vmul.f32 %v1195, %v819
        %1197 = vrot.lane.b32.xlu0 %v561, 56
        %v1198 = vpop.permute.xlu0 %1197
        %v1201 = vsel %vm587, %v1191, 0
        %1203 = vmatprep.subr.mxu0 0.0
        %1204 = vmatpush1.msra.mxu0 %v1198
        %1205 = vmatprep.subr.mxu0 0.0
        %1206 = vmatpush1.msra.mxu0 0.0
        %1207 = vmatprep.subr.mxu0 0.0
        %1208 = vmatpush1.msra.mxu0 0.0
        %1209 = vmatprep.subr.mxu0 0.0
        %1210 = vmatpush1.msra.mxu0 0.0
        %1211 = vmatprep.subr.mxu0 0.0
        %1212 = vmatpush1.msra.mxu0 0.0
        %1213 = vmatprep.subr.mxu0 0.0
        %1214 = vmatpush1.msra.mxu0 0.0
        %1215 = vmatprep.subr.mxu0 0.0
        %1216 = vmatpush1.msra.mxu0 0.0
        %1217 = vmatprep.subr.mxu0 0.0
        %1218 = vmatpush1.msra.mxu0 0.0
        %1219 = vmatprep.subr.mxu0 0.0
        %1220 = vmatpush1.msra.mxu0 0.0
        %1221 = vmatprep.subr.mxu0 0.0
        %1222 = vmatpush1.msra.mxu0 0.0
        %1223 = vmatprep.subr.mxu0 0.0
        %1224 = vmatpush1.msra.mxu0 0.0
        %1225 = vmatprep.subr.mxu0 0.0
        %1226 = vmatpush1.msra.mxu0 0.0
        %1227 = vmatprep.subr.mxu0 0.0
        %1228 = vmatpush1.msra.mxu0 0.0
        %1229 = vmatprep.subr.mxu0 0.0
        %1230 = vmatpush1.msra.mxu0 0.0
        %1231 = vmatprep.subr.mxu0 0.0
        %1232 = vmatpush1.msra.mxu0 0.0
        %1233 = vmatprep.subr.mxu0 0.0
        %1234 = vmatpush1.msra.mxu0 0.0
        %1235 = vmatprep.subr.mxu0 0.0
        %1236 = vmatpush1.msra.mxu0 0.0
        %1237 = vmatprep.subr.mxu0 0.0
        %1238 = vmatpush1.msra.mxu0 0.0
        %1239 = vmatprep.subr.mxu0 0.0
        %1240 = vmatpush1.msra.mxu0 0.0
        %1241 = vmatprep.subr.mxu0 0.0
        %1242 = vmatpush1.msra.mxu0 0.0
        %1243 = vmatprep.subr.mxu0 0.0
        %1244 = vmatpush1.msra.mxu0 0.0
        %1245 = vmatprep.subr.mxu0 0.0
        %1246 = vmatpush1.msra.mxu0 0.0
        %1247 = vmatprep.subr.mxu0 0.0
        %1248 = vmatpush1.msra.mxu0 0.0
        %1249 = vmatprep.subr.mxu0 0.0
        %1250 = vmatpush1.msra.mxu0 0.0
        %1251 = vmatprep.subr.mxu0 0.0
        %1252 = vmatpush1.msra.mxu0 0.0
        %1253 = vmatprep.subr.mxu0 0.0
        %1254 = vmatpush1.msra.mxu0 0.0
        %1255 = vmatprep.subr.mxu0 0.0
        %1256 = vmatpush1.msra.mxu0 0.0
        %1257 = vmatprep.subr.mxu0 0.0
        %1258 = vmatpush1.msra.mxu0 0.0
        %1259 = vmatprep.subr.mxu0 0.0
        %1260 = vmatpush1.msra.mxu0 0.0
        %1261 = vmatprep.subr.mxu0 0.0
        %1262 = vmatpush1.msra.mxu0 0.0
        %1263 = vmatprep.subr.mxu0 0.0
        %1264 = vmatpush1.msra.mxu0 0.0
        %1265 = vmatprep.subr.mxu0 0.0
        %1266 = vmatpush1.msra.mxu0 0.0
        %1267 = vmatprep.mubr.f32.mxu0 0.0
        %1268 = vmatmul.mubr.f32.gmra.mrb[0].mxu0 %v1201
        %v1269 = vpop.f32.mrb[0].mxu0
        %v1270 = vadd.f32 %v1196, %v1269
        %v1271 = vpop.f32.mrb[0].mxu0
        %1272 = vdwg.mxu0
        %v1273 = vsel %vm743, %v1191, 0.0
        %v1274 = vsel %vm587, %v1273, 0.0
        %1275 = vadd.xlane.f32.xlu0 %v1274
        %v1276 = vpop.xlane.xlu0 %1275
        %v1277 = vmul.f32 %v1276, %v904
        %v1278 = vadd.f32 %v1270, %v1277
        %v1279 = vsel %vm750, %v1191, 0.0
        %v1280 = vsel %vm587, %v1279, 0.0
        %1281 = vadd.xlane.f32.xlu0 %v1280
        %v1282 = vpop.xlane.xlu0 %1281
        %v1283 = vmul.f32 %v1282, %v914
        %v1284 = vadd.f32 %v1278, %v1283
        %v1285 = vsel %vm757, %v1191, 0.0
        %v1286 = vsel %vm587, %v1285, 0.0
        %1287 = vadd.xlane.f32.xlu0 %v1286
        %v1288 = vpop.xlane.xlu0 %1287
        %v1289 = vmul.f32 %v1288, %v924
        %v1290 = vadd.f32 %v1284, %v1289
        %v1291 = vsel %vm764, %v1191, 0.0
        %v1292 = vsel %vm587, %v1291, 0.0
        %1293 = vadd.xlane.f32.xlu0 %v1292
        %v1294 = vpop.xlane.xlu0 %1293
        %v1295 = vmul.f32 %v1294, %v934
        %v1296 = vadd.f32 %v1290, %v1295
        %v1297 = vsel %vm771, %v1191, 0.0
        %v1298 = vsel %vm587, %v1297, 0.0
        %1299 = vadd.xlane.f32.xlu0 %v1298
        %v1300 = vpop.xlane.xlu0 %1299
        %v1301 = vmul.f32 %v1300, %v944
        %v1302 = vadd.f32 %v1296, %v1301
        %v1303 = vsel %vm778, %v1191, 0.0
        %v1304 = vsel %vm587, %v1303, 0.0
        %1305 = vadd.xlane.f32.xlu0 %v1304
        %v1306 = vpop.xlane.xlu0 %1305
        %v1307 = vmul.f32 %v1306, %v954
        %v1308 = vadd.f32 %v1302, %v1307
        %v1309 = vsel %vm785, %v1191, 0.0
        %v1310 = vsel %vm587, %v1309, 0.0
        %1311 = vadd.xlane.f32.xlu0 %v1310
        %v1312 = vpop.xlane.xlu0 %1311
        %v1313 = vmul.f32 %v1312, %v964
        %v1314 = vadd.f32 %v1308, %v1313
        %v1315 = vsel %vm792, %v1191, 0.0
        %v1316 = vsel %vm587, %v1315, 0.0
        %1317 = vadd.xlane.f32.xlu0 %v1316
        %v1318 = vpop.xlane.xlu0 %1317
        %v1319 = vmul.f32 %v1318, %v974
        %v1320 = vadd.f32 %v1314, %v1319
        %1322 = vrot.lane.b32.xlu0 %v1320, 8
        %v1323 = vpop.permute.xlu0 %1322
        %vm1325 = vcmask 130112
        %1326 = vst.msk [vmem:[#allocation2] sm:$0xff] %vm1325, %v1323
        %1327 = vrot.lane.b32.xlu0 %v586, 112
        %v1328 = vpop.permute.xlu0 %1327
        %v1329 = vsel %vm587, %v1328, 0
        %1331 = vmatprep.subr.mxu0 0.0
        %1332 = vmatpush1.msra.mxu0 %v583
        %1333 = vmatprep.subr.mxu0 0.0
        %1334 = vmatpush1.msra.mxu0 0.0
        %1335 = vmatprep.subr.mxu0 0.0
        %1336 = vmatpush1.msra.mxu0 0.0
        %1337 = vmatprep.subr.mxu0 0.0
        %1338 = vmatpush1.msra.mxu0 0.0
        %1339 = vmatprep.subr.mxu0 0.0
        %1340 = vmatpush1.msra.mxu0 0.0
        %1341 = vmatprep.subr.mxu0 0.0
        %1342 = vmatpush1.msra.mxu0 0.0
        %1343 = vmatprep.subr.mxu0 0.0
        %1344 = vmatpush1.msra.mxu0 0.0
        %1345 = vmatprep.subr.mxu0 0.0
        %1346 = vmatpush1.msra.mxu0 0.0
        %1347 = vmatprep.subr.mxu0 0.0
        %1348 = vmatpush1.msra.mxu0 0.0
        %1349 = vmatprep.subr.mxu0 0.0
        %1350 = vmatpush1.msra.mxu0 0.0
        %1351 = vmatprep.subr.mxu0 0.0
        %1352 = vmatpush1.msra.mxu0 0.0
        %1353 = vmatprep.subr.mxu0 0.0
        %1354 = vmatpush1.msra.mxu0 0.0
        %1355 = vmatprep.subr.mxu0 0.0
        %1356 = vmatpush1.msra.mxu0 0.0
        %1357 = vmatprep.subr.mxu0 0.0
        %1358 = vmatpush1.msra.mxu0 0.0
        %1359 = vmatprep.subr.mxu0 0.0
        %1360 = vmatpush1.msra.mxu0 0.0
        %1361 = vmatprep.subr.mxu0 0.0
        %1362 = vmatpush1.msra.mxu0 0.0
        %1363 = vmatprep.subr.mxu0 0.0
        %1364 = vmatpush1.msra.mxu0 0.0
        %1365 = vmatprep.subr.mxu0 0.0
        %1366 = vmatpush1.msra.mxu0 0.0
        %1367 = vmatprep.subr.mxu0 0.0
        %1368 = vmatpush1.msra.mxu0 0.0
        %1369 = vmatprep.subr.mxu0 0.0
        %1370 = vmatpush1.msra.mxu0 0.0
        %1371 = vmatprep.subr.mxu0 0.0
        %1372 = vmatpush1.msra.mxu0 0.0
        %1373 = vmatprep.subr.mxu0 0.0
        %1374 = vmatpush1.msra.mxu0 0.0
        %1375 = vmatprep.subr.mxu0 0.0
        %1376 = vmatpush1.msra.mxu0 0.0
        %1377 = vmatprep.subr.mxu0 0.0
        %1378 = vmatpush1.msra.mxu0 0.0
        %1379 = vmatprep.subr.mxu0 0.0
        %1380 = vmatpush1.msra.mxu0 0.0
        %1381 = vmatprep.subr.mxu0 0.0
        %1382 = vmatpush1.msra.mxu0 0.0
        %1383 = vmatprep.subr.mxu0 0.0
        %1384 = vmatpush1.msra.mxu0 0.0
        %1385 = vmatprep.subr.mxu0 0.0
        %1386 = vmatpush1.msra.mxu0 0.0
        %1387 = vmatprep.subr.mxu0 0.0
        %1388 = vmatpush1.msra.mxu0 0.0
        %1389 = vmatprep.subr.mxu0 0.0
        %1390 = vmatpush1.msra.mxu0 0.0
        %1391 = vmatprep.subr.mxu0 0.0
        %1392 = vmatpush1.msra.mxu0 0.0
        %1393 = vmatprep.subr.mxu0 0.0
        %1394 = vmatpush1.msra.mxu0 0.0
        %1395 = vmatprep.mubr.f32.mxu0 0.0
        %1396 = vmatmul.mubr.f32.gmra.mrb[0].mxu0 %v1329
        %v1397 = vpop.f32.mrb[0].mxu0
        %v1398 = vadd.f32 0.0, %v1397
        %v1399 = vpop.f32.mrb[0].mxu0
        %1400 = vdwg.mxu0
        %1402 = vset.pattern.permute.xlu0 0
        %1403 = vperm.xlu0 %1402, %v1398
        %v1404 = vpop.permute.xlu0 %1403
        %v1406 = vsel %vm661, %v1404, 0.0
        %1407 = vrot.lane.b32.xlu0 %v561, 80
        %v1408 = vpop.permute.xlu0 %1407
        %v1409 = vsel %vm587, %v1408, 0
        %1411 = vmatprep.subr.mxu0 0.0
        %1412 = vmatpush1.xpose.msra.mxu0 %v1409
        %1413 = vmatprep.subr.mxu0 0.0
        %1414 = vmatpush1.xpose.msra.mxu0 0.0
        %1415 = vmatprep.subr.mxu0 0.0
        %1416 = vmatpush1.xpose.msra.mxu0 0.0
        %1417 = vmatprep.subr.mxu0 0.0
        %1418 = vmatpush1.xpose.msra.mxu0 0.0
        %1419 = vmatprep.subr.mxu0 0.0
        %1420 = vmatpush1.xpose.msra.mxu0 0.0
        %1421 = vmatprep.subr.mxu0 0.0
        %1422 = vmatpush1.xpose.msra.mxu0 0.0
        %1423 = vmatprep.subr.mxu0 0.0
        %1424 = vmatpush1.xpose.msra.mxu0 0.0
        %1425 = vmatprep.subr.mxu0 0.0
        %1426 = vmatpush1.xpose.msra.mxu0 0.0
        %1427 = vmatprep.subr.mxu0 0.0
        %1428 = vmatpush1.xpose.msra.mxu0 0.0
        %1429 = vmatprep.subr.mxu0 0.0
        %1430 = vmatpush1.xpose.msra.mxu0 0.0
        %1431 = vmatprep.subr.mxu0 0.0
        %1432 = vmatpush1.xpose.msra.mxu0 0.0
        %1433 = vmatprep.subr.mxu0 0.0
        %1434 = vmatpush1.xpose.msra.mxu0 0.0
        %1435 = vmatprep.subr.mxu0 0.0
        %1436 = vmatpush1.xpose.msra.mxu0 0.0
        %1437 = vmatprep.subr.mxu0 0.0
        %1438 = vmatpush1.xpose.msra.mxu0 0.0
        %1439 = vmatprep.subr.mxu0 0.0
        %1440 = vmatpush1.xpose.msra.mxu0 0.0
        %1441 = vmatprep.subr.mxu0 0.0
        %1442 = vmatpush1.xpose.msra.mxu0 0.0
        %1443 = vmatprep.subr.mxu0 0.0
        %1444 = vmatpush1.xpose.msra.mxu0 0.0
        %1445 = vmatprep.subr.mxu0 0.0
        %1446 = vmatpush1.xpose.msra.mxu0 0.0
        %1447 = vmatprep.subr.mxu0 0.0
        %1448 = vmatpush1.xpose.msra.mxu0 0.0
        %1449 = vmatprep.subr.mxu0 0.0
        %1450 = vmatpush1.xpose.msra.mxu0 0.0
        %1451 = vmatprep.subr.mxu0 0.0
        %1452 = vmatpush1.xpose.msra.mxu0 0.0
        %1453 = vmatprep.subr.mxu0 0.0
        %1454 = vmatpush1.xpose.msra.mxu0 0.0
        %1455 = vmatprep.subr.mxu0 0.0
        %1456 = vmatpush1.xpose.msra.mxu0 0.0
        %1457 = vmatprep.subr.mxu0 0.0
        %1458 = vmatpush1.xpose.msra.mxu0 0.0
        %1459 = vmatprep.subr.mxu0 0.0
        %1460 = vmatpush1.xpose.msra.mxu0 0.0
        %1461 = vmatprep.subr.mxu0 0.0
        %1462 = vmatpush1.xpose.msra.mxu0 0.0
        %1463 = vmatprep.subr.mxu0 0.0
        %1464 = vmatpush1.xpose.msra.mxu0 0.0
        %1465 = vmatprep.subr.mxu0 0.0
        %1466 = vmatpush1.xpose.msra.mxu0 0.0
        %1467 = vmatprep.subr.mxu0 0.0
        %1468 = vmatpush1.xpose.msra.mxu0 0.0
        %1469 = vmatprep.subr.mxu0 0.0
        %1470 = vmatpush1.xpose.msra.mxu0 0.0
        %1471 = vmatprep.subr.mxu0 0.0
        %1472 = vmatpush1.xpose.msra.mxu0 0.0
        %1473 = vmatprep.subr.mxu0 0.0
        %1474 = vmatpush1.xpose.msra.mxu0 0.0
        %1475 = vmatprep.mubr.f32.mxu0 0.0
        %1476 = vmatmul.mubr.f32.gmra.mrb[0].mxu0 %v1329
        %v1477 = vpop.f32.mrb[0].mxu0
        %v1478 = vadd.f32 %v1406, %v1477
        %v1479 = vpop.f32.mrb[0].mxu0
        %1480 = vdwg.mxu0
        %1481 = vset.pattern.permute.xlu0 1
        %1482 = vperm.xlu0 %1481, %v1398
        %v1483 = vpop.permute.xlu0 %1482
        %v1485 = vsel %vm743, %v1483, 0.0
        %v1486 = vadd.f32 %v1478, %v1485
        %1487 = vset.pattern.permute.xlu0 2
        %1488 = vperm.xlu0 %1487, %v1398
        %v1489 = vpop.permute.xlu0 %1488
        %v1491 = vsel %vm750, %v1489, 0.0
        %v1492 = vadd.f32 %v1486, %v1491
        %1493 = vset.pattern.permute.xlu0 3
        %1494 = vperm.xlu0 %1493, %v1398
        %v1495 = vpop.permute.xlu0 %1494
        %v1497 = vsel %vm757, %v1495, 0.0
        %v1498 = vadd.f32 %v1492, %v1497
        %1499 = vset.pattern.permute.xlu0 4
        %1500 = vperm.xlu0 %1499, %v1398
        %v1501 = vpop.permute.xlu0 %1500
        %v1503 = vsel %vm764, %v1501, 0.0
        %v1504 = vadd.f32 %v1498, %v1503
        %1505 = vset.pattern.permute.xlu0 5
        %1506 = vperm.xlu0 %1505, %v1398
        %v1507 = vpop.permute.xlu0 %1506
        %v1509 = vsel %vm771, %v1507, 0.0
        %v1510 = vadd.f32 %v1504, %v1509
        %1511 = vset.pattern.permute.xlu0 6
        %1512 = vperm.xlu0 %1511, %v1398
        %v1513 = vpop.permute.xlu0 %1512
        %v1515 = vsel %vm778, %v1513, 0.0
        %v1516 = vadd.f32 %v1510, %v1515
        %1517 = vset.pattern.permute.xlu0 7
        %1518 = vperm.xlu0 %1517, %v1398
        %v1519 = vpop.permute.xlu0 %1518
        %v1521 = vsel %vm785, %v1519, 0.0
        %v1522 = vadd.f32 %v1516, %v1521
        %1523 = vset.pattern.permute.xlu0 8
        %1524 = vperm.xlu0 %1523, %v1398
        %v1525 = vpop.permute.xlu0 %1524
        %v1527 = vsel %vm792, %v1525, 0.0
        %v1528 = vadd.f32 %v1522, %v1527
        %v1529 = vsel %vm799, -10000.0, %v1528
        %v1530 = vsel %vm587, %v1529, -inf
        %1531 = vmax.xlane.f32.xlu0 %v1530
        %v1532 = vpop.xlane.xlu0 %1531
        %v1533 = vsub.f32 %v1529, %v1532
        %v1534 = vmul.f32 %v1533, 1.442695
        %v1535 = vpow.pop %v1534
        %v1536 = vsel %vm587, %v1535, 0.0
        %1537 = vadd.xlane.f32.xlu0 %v1536
        %v1538 = vpop.xlane.xlu0 %1537
        %v1539 = vrcp.pop %v1538
        %v1540 = vmul.f32 %v1535, %v1539
        %v1541 = vsel %vm661, %v1540, 0.0
        %v1542 = vsel %vm587, %v1541, 0.0
        %1543 = vadd.xlane.f32.xlu0 %v1542
        %v1544 = vpop.xlane.xlu0 %1543
        %v1545 = vmul.f32 %v1544, %v819
        %1546 = vrot.lane.b32.xlu0 %v561, 48
        %v1547 = vpop.permute.xlu0 %1546
        %v1550 = vsel %vm587, %v1540, 0
        %1552 = vmatprep.subr.mxu0 0.0
        %1553 = vmatpush1.msra.mxu0 %v1547
        %1554 = vmatprep.subr.mxu0 0.0
        %1555 = vmatpush1.msra.mxu0 0.0
        %1556 = vmatprep.subr.mxu0 0.0
        %1557 = vmatpush1.msra.mxu0 0.0
        %1558 = vmatprep.subr.mxu0 0.0
        %1559 = vmatpush1.msra.mxu0 0.0
        %1560 = vmatprep.subr.mxu0 0.0
        %1561 = vmatpush1.msra.mxu0 0.0
        %1562 = vmatprep.subr.mxu0 0.0
        %1563 = vmatpush1.msra.mxu0 0.0
        %1564 = vmatprep.subr.mxu0 0.0
        %1565 = vmatpush1.msra.mxu0 0.0
        %1566 = vmatprep.subr.mxu0 0.0
        %1567 = vmatpush1.msra.mxu0 0.0
        %1568 = vmatprep.subr.mxu0 0.0
        %1569 = vmatpush1.msra.mxu0 0.0
        %1570 = vmatprep.subr.mxu0 0.0
        %1571 = vmatpush1.msra.mxu0 0.0
        %1572 = vmatprep.subr.mxu0 0.0
        %1573 = vmatpush1.msra.mxu0 0.0
        %1574 = vmatprep.subr.mxu0 0.0
        %1575 = vmatpush1.msra.mxu0 0.0
        %1576 = vmatprep.subr.mxu0 0.0
        %1577 = vmatpush1.msra.mxu0 0.0
        %1578 = vmatprep.subr.mxu0 0.0
        %1579 = vmatpush1.msra.mxu0 0.0
        %1580 = vmatprep.subr.mxu0 0.0
        %1581 = vmatpush1.msra.mxu0 0.0
        %1582 = vmatprep.subr.mxu0 0.0
        %1583 = vmatpush1.msra.mxu0 0.0
        %1584 = vmatprep.subr.mxu0 0.0
        %1585 = vmatpush1.msra.mxu0 0.0
        %1586 = vmatprep.subr.mxu0 0.0
        %1587 = vmatpush1.msra.mxu0 0.0
        %1588 = vmatprep.subr.mxu0 0.0
        %1589 = vmatpush1.msra.mxu0 0.0
        %1590 = vmatprep.subr.mxu0 0.0
        %1591 = vmatpush1.msra.mxu0 0.0
        %1592 = vmatprep.subr.mxu0 0.0
        %1593 = vmatpush1.msra.mxu0 0.0
        %1594 = vmatprep.subr.mxu0 0.0
        %1595 = vmatpush1.msra.mxu0 0.0
        %1596 = vmatprep.subr.mxu0 0.0
        %1597 = vmatpush1.msra.mxu0 0.0
        %1598 = vmatprep.subr.mxu0 0.0
        %1599 = vmatpush1.msra.mxu0 0.0
        %1600 = vmatprep.subr.mxu0 0.0
        %1601 = vmatpush1.msra.mxu0 0.0
        %1602 = vmatprep.subr.mxu0 0.0
        %1603 = vmatpush1.msra.mxu0 0.0
        %1604 = vmatprep.subr.mxu0 0.0
        %1605 = vmatpush1.msra.mxu0 0.0
        %1606 = vmatprep.subr.mxu0 0.0
        %1607 = vmatpush1.msra.mxu0 0.0
        %1608 = vmatprep.subr.mxu0 0.0
        %1609 = vmatpush1.msra.mxu0 0.0
        %1610 = vmatprep.subr.mxu0 0.0
        %1611 = vmatpush1.msra.mxu0 0.0
        %1612 = vmatprep.subr.mxu0 0.0
        %1613 = vmatpush1.msra.mxu0 0.0
        %1614 = vmatprep.subr.mxu0 0.0
        %1615 = vmatpush1.msra.mxu0 0.0
        %1616 = vmatprep.mubr.f32.mxu0 0.0
        %1617 = vmatmul.mubr.f32.gmra.mrb[0].mxu0 %v1550
        %v1618 = vpop.f32.mrb[0].mxu0
        %v1619 = vadd.f32 %v1545, %v1618
        %v1620 = vpop.f32.mrb[0].mxu0
        %1621 = vdwg.mxu0
        %v1622 = vsel %vm743, %v1540, 0.0
        %v1623 = vsel %vm587, %v1622, 0.0
        %1624 = vadd.xlane.f32.xlu0 %v1623
        %v1625 = vpop.xlane.xlu0 %1624
        %v1626 = vmul.f32 %v1625, %v904
        %v1627 = vadd.f32 %v1619, %v1626
        %v1628 = vsel %vm750, %v1540, 0.0
        %v1629 = vsel %vm587, %v1628, 0.0
        %1630 = vadd.xlane.f32.xlu0 %v1629
        %v1631 = vpop.xlane.xlu0 %1630
        %v1632 = vmul.f32 %v1631, %v914
        %v1633 = vadd.f32 %v1627, %v1632
        %v1634 = vsel %vm757, %v1540, 0.0
        %v1635 = vsel %vm587, %v1634, 0.0
        %1636 = vadd.xlane.f32.xlu0 %v1635
        %v1637 = vpop.xlane.xlu0 %1636
        %v1638 = vmul.f32 %v1637, %v924
        %v1639 = vadd.f32 %v1633, %v1638
        %v1640 = vsel %vm764, %v1540, 0.0
        %v1641 = vsel %vm587, %v1640, 0.0
        %1642 = vadd.xlane.f32.xlu0 %v1641
        %v1643 = vpop.xlane.xlu0 %1642
        %v1644 = vmul.f32 %v1643, %v934
        %v1645 = vadd.f32 %v1639, %v1644
        %v1646 = vsel %vm771, %v1540, 0.0
        %v1647 = vsel %vm587, %v1646, 0.0
        %1648 = vadd.xlane.f32.xlu0 %v1647
        %v1649 = vpop.xlane.xlu0 %1648
        %v1650 = vmul.f32 %v1649, %v944
        %v1651 = vadd.f32 %v1645, %v1650
        %v1652 = vsel %vm778, %v1540, 0.0
        %v1653 = vsel %vm587, %v1652, 0.0
        %1654 = vadd.xlane.f32.xlu0 %v1653
        %v1655 = vpop.xlane.xlu0 %1654
        %v1656 = vmul.f32 %v1655, %v954
        %v1657 = vadd.f32 %v1651, %v1656
        %v1658 = vsel %vm785, %v1540, 0.0
        %v1659 = vsel %vm587, %v1658, 0.0
        %1660 = vadd.xlane.f32.xlu0 %v1659
        %v1661 = vpop.xlane.xlu0 %1660
        %v1662 = vmul.f32 %v1661, %v964
        %v1663 = vadd.f32 %v1657, %v1662
        %v1664 = vsel %vm792, %v1540, 0.0
        %v1665 = vsel %vm587, %v1664, 0.0
        %1666 = vadd.xlane.f32.xlu0 %v1665
        %v1667 = vpop.xlane.xlu0 %1666
        %v1668 = vmul.f32 %v1667, %v974
        %v1669 = vadd.f32 %v1663, %v1668
        %1671 = vrot.lane.b32.xlu0 %v1669, 16
        %v1672 = vpop.permute.xlu0 %1671
        %vm1674 = vcmask 195712
        %1675 = vst.msk [vmem:[#allocation2] sm:$0xff] %vm1674, %v1672
        %1676 = vrot.lane.b32.xlu0 %v586, 104
        %v1677 = vpop.permute.xlu0 %1676
        %v1678 = vsel %vm587, %v1677, 0
        %1680 = vmatprep.subr.mxu0 0.0
        %1681 = vmatpush1.msra.mxu0 %v583
        %1682 = vmatprep.subr.mxu0 0.0
        %1683 = vmatpush1.msra.mxu0 0.0
        %1684 = vmatprep.subr.mxu0 0.0
        %1685 = vmatpush1.msra.mxu0 0.0
        %1686 = vmatprep.subr.mxu0 0.0
        %1687 = vmatpush1.msra.mxu0 0.0
        %1688 = vmatprep.subr.mxu0 0.0
        %1689 = vmatpush1.msra.mxu0 0.0
        %1690 = vmatprep.subr.mxu0 0.0
        %1691 = vmatpush1.msra.mxu0 0.0
        %1692 = vmatprep.subr.mxu0 0.0
        %1693 = vmatpush1.msra.mxu0 0.0
        %1694 = vmatprep.subr.mxu0 0.0
        %1695 = vmatpush1.msra.mxu0 0.0
        %1696 = vmatprep.subr.mxu0 0.0
        %1697 = vmatpush1.msra.mxu0 0.0
        %1698 = vmatprep.subr.mxu0 0.0
        %1699 = vmatpush1.msra.mxu0 0.0
        %1700 = vmatprep.subr.mxu0 0.0
        %1701 = vmatpush1.msra.mxu0 0.0
        %1702 = vmatprep.subr.mxu0 0.0
        %1703 = vmatpush1.msra.mxu0 0.0
        %1704 = vmatprep.subr.mxu0 0.0
        %1705 = vmatpush1.msra.mxu0 0.0
        %1706 = vmatprep.subr.mxu0 0.0
        %1707 = vmatpush1.msra.mxu0 0.0
        %1708 = vmatprep.subr.mxu0 0.0
        %1709 = vmatpush1.msra.mxu0 0.0
        %1710 = vmatprep.subr.mxu0 0.0
        %1711 = vmatpush1.msra.mxu0 0.0
        %1712 = vmatprep.subr.mxu0 0.0
        %1713 = vmatpush1.msra.mxu0 0.0
        %1714 = vmatprep.subr.mxu0 0.0
        %1715 = vmatpush1.msra.mxu0 0.0
        %1716 = vmatprep.subr.mxu0 0.0
        %1717 = vmatpush1.msra.mxu0 0.0
        %1718 = vmatprep.subr.mxu0 0.0
        %1719 = vmatpush1.msra.mxu0 0.0
        %1720 = vmatprep.subr.mxu0 0.0
        %1721 = vmatpush1.msra.mxu0 0.0
        %1722 = vmatprep.subr.mxu0 0.0
        %1723 = vmatpush1.msra.mxu0 0.0
        %1724 = vmatprep.subr.mxu0 0.0
        %1725 = vmatpush1.msra.mxu0 0.0
        %1726 = vmatprep.subr.mxu0 0.0
        %1727 = vmatpush1.msra.mxu0 0.0
        %1728 = vmatprep.subr.mxu0 0.0
        %1729 = vmatpush1.msra.mxu0 0.0
        %1730 = vmatprep.subr.mxu0 0.0
        %1731 = vmatpush1.msra.mxu0 0.0
        %1732 = vmatprep.subr.mxu0 0.0
        %1733 = vmatpush1.msra.mxu0 0.0
        %1734 = vmatprep.subr.mxu0 0.0
        %1735 = vmatpush1.msra.mxu0 0.0
        %1736 = vmatprep.subr.mxu0 0.0
        %1737 = vmatpush1.msra.mxu0 0.0
        %1738 = vmatprep.subr.mxu0 0.0
        %1739 = vmatpush1.msra.mxu0 0.0
        %1740 = vmatprep.subr.mxu0 0.0
        %1741 = vmatpush1.msra.mxu0 0.0
        %1742 = vmatprep.subr.mxu0 0.0
        %1743 = vmatpush1.msra.mxu0 0.0
        %1744 = vmatprep.mubr.f32.mxu0 0.0
        %1745 = vmatmul.mubr.f32.gmra.mrb[0].mxu0 %v1678
        %v1746 = vpop.f32.mrb[0].mxu0
        %v1747 = vadd.f32 0.0, %v1746
        %v1748 = vpop.f32.mrb[0].mxu0
        %1749 = vdwg.mxu0
        %1751 = vset.pattern.permute.xlu0 0
        %1752 = vperm.xlu0 %1751, %v1747
        %v1753 = vpop.permute.xlu0 %1752
        %v1755 = vsel %vm661, %v1753, 0.0
        %1756 = vrot.lane.b32.xlu0 %v561, 72
        %v1757 = vpop.permute.xlu0 %1756
        %v1758 = vsel %vm587, %v1757, 0
        %1760 = vmatprep.subr.mxu0 0.0
        %1761 = vmatpush1.xpose.msra.mxu0 %v1758
        %1762 = vmatprep.subr.mxu0 0.0
        %1763 = vmatpush1.xpose.msra.mxu0 0.0
        %1764 = vmatprep.subr.mxu0 0.0
        %1765 = vmatpush1.xpose.msra.mxu0 0.0
        %1766 = vmatprep.subr.mxu0 0.0
        %1767 = vmatpush1.xpose.msra.mxu0 0.0
        %1768 = vmatprep.subr.mxu0 0.0
        %1769 = vmatpush1.xpose.msra.mxu0 0.0
        %1770 = vmatprep.subr.mxu0 0.0
        %1771 = vmatpush1.xpose.msra.mxu0 0.0
        %1772 = vmatprep.subr.mxu0 0.0
        %1773 = vmatpush1.xpose.msra.mxu0 0.0
        %1774 = vmatprep.subr.mxu0 0.0
        %1775 = vmatpush1.xpose.msra.mxu0 0.0
        %1776 = vmatprep.subr.mxu0 0.0
        %1777 = vmatpush1.xpose.msra.mxu0 0.0
        %1778 = vmatprep.subr.mxu0 0.0
        %1779 = vmatpush1.xpose.msra.mxu0 0.0
        %1780 = vmatprep.subr.mxu0 0.0
        %1781 = vmatpush1.xpose.msra.mxu0 0.0
        %1782 = vmatprep.subr.mxu0 0.0
        %1783 = vmatpush1.xpose.msra.mxu0 0.0
        %1784 = vmatprep.subr.mxu0 0.0
        %1785 = vmatpush1.xpose.msra.mxu0 0.0
        %1786 = vmatprep.subr.mxu0 0.0
        %1787 = vmatpush1.xpose.msra.mxu0 0.0
        %1788 = vmatprep.subr.mxu0 0.0
        %1789 = vmatpush1.xpose.msra.mxu0 0.0
        %1790 = vmatprep.subr.mxu0 0.0
        %1791 = vmatpush1.xpose.msra.mxu0 0.0
        %1792 = vmatprep.subr.mxu0 0.0
        %1793 = vmatpush1.xpose.msra.mxu0 0.0
        %1794 = vmatprep.subr.mxu0 0.0
        %1795 = vmatpush1.xpose.msra.mxu0 0.0
        %1796 = vmatprep.subr.mxu0 0.0
        %1797 = vmatpush1.xpose.msra.mxu0 0.0
        %1798 = vmatprep.subr.mxu0 0.0
        %1799 = vmatpush1.xpose.msra.mxu0 0.0
        %1800 = vmatprep.subr.mxu0 0.0
        %1801 = vmatpush1.xpose.msra.mxu0 0.0
        %1802 = vmatprep.subr.mxu0 0.0
        %1803 = vmatpush1.xpose.msra.mxu0 0.0
        %1804 = vmatprep.subr.mxu0 0.0
        %1805 = vmatpush1.xpose.msra.mxu0 0.0
        %1806 = vmatprep.subr.mxu0 0.0
        %1807 = vmatpush1.xpose.msra.mxu0 0.0
        %1808 = vmatprep.subr.mxu0 0.0
        %1809 = vmatpush1.xpose.msra.mxu0 0.0
        %1810 = vmatprep.subr.mxu0 0.0
        %1811 = vmatpush1.xpose.msra.mxu0 0.0
        %1812 = vmatprep.subr.mxu0 0.0
        %1813 = vmatpush1.xpose.msra.mxu0 0.0
        %1814 = vmatprep.subr.mxu0 0.0
        %1815 = vmatpush1.xpose.msra.mxu0 0.0
        %1816 = vmatprep.subr.mxu0 0.0
        %1817 = vmatpush1.xpose.msra.mxu0 0.0
        %1818 = vmatprep.subr.mxu0 0.0
        %1819 = vmatpush1.xpose.msra.mxu0 0.0
        %1820 = vmatprep.subr.mxu0 0.0
        %1821 = vmatpush1.xpose.msra.mxu0 0.0
        %1822 = vmatprep.subr.mxu0 0.0
        %1823 = vmatpush1.xpose.msra.mxu0 0.0
        %1824 = vmatprep.mubr.f32.mxu0 0.0
        %1825 = vmatmul.mubr.f32.gmra.mrb[0].mxu0 %v1678
        %v1826 = vpop.f32.mrb[0].mxu0
        %v1827 = vadd.f32 %v1755, %v1826
        %v1828 = vpop.f32.mrb[0].mxu0
        %1829 = vdwg.mxu0
        %1830 = vset.pattern.permute.xlu0 1
        %1831 = vperm.xlu0 %1830, %v1747
        %v1832 = vpop.permute.xlu0 %1831
        %v1834 = vsel %vm743, %v1832, 0.0
        %v1835 = vadd.f32 %v1827, %v1834
        %1836 = vset.pattern.permute.xlu0 2
        %1837 = vperm.xlu0 %1836, %v1747
        %v1838 = vpop.permute.xlu0 %1837
        %v1840 = vsel %vm750, %v1838, 0.0
        %v1841 = vadd.f32 %v1835, %v1840
        %1842 = vset.pattern.permute.xlu0 3
        %1843 = vperm.xlu0 %1842, %v1747
        %v1844 = vpop.permute.xlu0 %1843
        %v1846 = vsel %vm757, %v1844, 0.0
        %v1847 = vadd.f32 %v1841, %v1846
        %1848 = vset.pattern.permute.xlu0 4
        %1849 = vperm.xlu0 %1848, %v1747
        %v1850 = vpop.permute.xlu0 %1849
        %v1852 = vsel %vm764, %v1850, 0.0
        %v1853 = vadd.f32 %v1847, %v1852
        %1854 = vset.pattern.permute.xlu0 5
        %1855 = vperm.xlu0 %1854, %v1747
        %v1856 = vpop.permute.xlu0 %1855
        %v1858 = vsel %vm771, %v1856, 0.0
        %v1859 = vadd.f32 %v1853, %v1858
        %1860 = vset.pattern.permute.xlu0 6
        %1861 = vperm.xlu0 %1860, %v1747
        %v1862 = vpop.permute.xlu0 %1861
        %v1864 = vsel %vm778, %v1862, 0.0
        %v1865 = vadd.f32 %v1859, %v1864
        %1866 = vset.pattern.permute.xlu0 7
        %1867 = vperm.xlu0 %1866, %v1747
        %v1868 = vpop.permute.xlu0 %1867
        %v1870 = vsel %vm785, %v1868, 0.0
        %v1871 = vadd.f32 %v1865, %v1870
        %1872 = vset.pattern.permute.xlu0 8
        %1873 = vperm.xlu0 %1872, %v1747
        %v1874 = vpop.permute.xlu0 %1873
        %v1876 = vsel %vm792, %v1874, 0.0
        %v1877 = vadd.f32 %v1871, %v1876
        %v1878 = vsel %vm799, -10000.0, %v1877
        %v1879 = vsel %vm587, %v1878, -inf
        %1880 = vmax.xlane.f32.xlu0 %v1879
        %v1881 = vpop.xlane.xlu0 %1880
        %v1882 = vsub.f32 %v1878, %v1881
        %v1883 = vmul.f32 %v1882, 1.442695
        %v1884 = vpow.pop %v1883
        %v1885 = vsel %vm587, %v1884, 0.0
        %1886 = vadd.xlane.f32.xlu0 %v1885
        %v1887 = vpop.xlane.xlu0 %1886
        %v1888 = vrcp.pop %v1887
        %v1889 = vmul.f32 %v1884, %v1888
        %v1890 = vsel %vm661, %v1889, 0.0
        %v1891 = vsel %vm587, %v1890, 0.0
        %1892 = vadd.xlane.f32.xlu0 %v1891
        %v1893 = vpop.xlane.xlu0 %1892
        %v1894 = vmul.f32 %v1893, %v819
        %1895 = vrot.lane.b32.xlu0 %v561, 40
        %v1896 = vpop.permute.xlu0 %1895
        %v1899 = vsel %vm587, %v1889, 0
        %1901 = vmatprep.subr.mxu0 0.0
        %1902 = vmatpush1.msra.mxu0 %v1896
        %1903 = vmatprep.subr.mxu0 0.0
        %1904 = vmatpush1.msra.mxu0 0.0
        %1905 = vmatprep.subr.mxu0 0.0
        %1906 = vmatpush1.msra.mxu0 0.0
        %1907 = vmatprep.subr.mxu0 0.0
        %1908 = vmatpush1.msra.mxu0 0.0
        %1909 = vmatprep.subr.mxu0 0.0
        %1910 = vmatpush1.msra.mxu0 0.0
        %1911 = vmatprep.subr.mxu0 0.0
        %1912 = vmatpush1.msra.mxu0 0.0
        %1913 = vmatprep.subr.mxu0 0.0
        %1914 = vmatpush1.msra.mxu0 0.0
        %1915 = vmatprep.subr.mxu0 0.0
        %1916 = vmatpush1.msra.mxu0 0.0
        %1917 = vmatprep.subr.mxu0 0.0
        %1918 = vmatpush1.msra.mxu0 0.0
        %1919 = vmatprep.subr.mxu0 0.0
        %1920 = vmatpush1.msra.mxu0 0.0
        %1921 = vmatprep.subr.mxu0 0.0
        %1922 = vmatpush1.msra.mxu0 0.0
        %1923 = vmatprep.subr.mxu0 0.0
        %1924 = vmatpush1.msra.mxu0 0.0
        %1925 = vmatprep.subr.mxu0 0.0
        %1926 = vmatpush1.msra.mxu0 0.0
        %1927 = vmatprep.subr.mxu0 0.0
        %1928 = vmatpush1.msra.mxu0 0.0
        %1929 = vmatprep.subr.mxu0 0.0
        %1930 = vmatpush1.msra.mxu0 0.0
        %1931 = vmatprep.subr.mxu0 0.0
        %1932 = vmatpush1.msra.mxu0 0.0
        %1933 = vmatprep.subr.mxu0 0.0
        %1934 = vmatpush1.msra.mxu0 0.0
        %1935 = vmatprep.subr.mxu0 0.0
        %1936 = vmatpush1.msra.mxu0 0.0
        %1937 = vmatprep.subr.mxu0 0.0
        %1938 = vmatpush1.msra.mxu0 0.0
        %1939 = vmatprep.subr.mxu0 0.0
        %1940 = vmatpush1.msra.mxu0 0.0
        %1941 = vmatprep.subr.mxu0 0.0
        %1942 = vmatpush1.msra.mxu0 0.0
        %1943 = vmatprep.subr.mxu0 0.0
        %1944 = vmatpush1.msra.mxu0 0.0
        %1945 = vmatprep.subr.mxu0 0.0
        %1946 = vmatpush1.msra.mxu0 0.0
        %1947 = vmatprep.subr.mxu0 0.0
        %1948 = vmatpush1.msra.mxu0 0.0
        %1949 = vmatprep.subr.mxu0 0.0
        %1950 = vmatpush1.msra.mxu0 0.0
        %1951 = vmatprep.subr.mxu0 0.0
        %1952 = vmatpush1.msra.mxu0 0.0
        %1953 = vmatprep.subr.mxu0 0.0
        %1954 = vmatpush1.msra.mxu0 0.0
        %1955 = vmatprep.subr.mxu0 0.0
        %1956 = vmatpush1.msra.mxu0 0.0
        %1957 = vmatprep.subr.mxu0 0.0
        %1958 = vmatpush1.msra.mxu0 0.0
        %1959 = vmatprep.subr.mxu0 0.0
        %1960 = vmatpush1.msra.mxu0 0.0
        %1961 = vmatprep.subr.mxu0 0.0
        %1962 = vmatpush1.msra.mxu0 0.0
        %1963 = vmatprep.subr.mxu0 0.0
        %1964 = vmatpush1.msra.mxu0 0.0
        %1965 = vmatprep.mubr.f32.mxu0 0.0
        %1966 = vmatmul.mubr.f32.gmra.mrb[0].mxu0 %v1899
        %v1967 = vpop.f32.mrb[0].mxu0
        %v1968 = vadd.f32 %v1894, %v1967
        %v1969 = vpop.f32.mrb[0].mxu0
        %1970 = vdwg.mxu0
        %v1971 = vsel %vm743, %v1889, 0.0
        %v1972 = vsel %vm587, %v1971, 0.0
        %1973 = vadd.xlane.f32.xlu0 %v1972
        %v1974 = vpop.xlane.xlu0 %1973
        %v1975 = vmul.f32 %v1974, %v904
        %v1976 = vadd.f32 %v1968, %v1975
        %v1977 = vsel %vm750, %v1889, 0.0
        %v1978 = vsel %vm587, %v1977, 0.0
        %1979 = vadd.xlane.f32.xlu0 %v1978
        %v1980 = vpop.xlane.xlu0 %1979
        %v1981 = vmul.f32 %v1980, %v914
        %v1982 = vadd.f32 %v1976, %v1981
        %v1983 = vsel %vm757, %v1889, 0.0
        %v1984 = vsel %vm587, %v1983, 0.0
        %1985 = vadd.xlane.f32.xlu0 %v1984
        %v1986 = vpop.xlane.xlu0 %1985
        %v1987 = vmul.f32 %v1986, %v924
        %v1988 = vadd.f32 %v1982, %v1987
        %v1989 = vsel %vm764, %v1889, 0.0
        %v1990 = vsel %vm587, %v1989, 0.0
        %1991 = vadd.xlane.f32.xlu0 %v1990
        %v1992 = vpop.xlane.xlu0 %1991
        %v1993 = vmul.f32 %v1992, %v934
        %v1994 = vadd.f32 %v1988, %v1993
        %v1995 = vsel %vm771, %v1889, 0.0
        %v1996 = vsel %vm587, %v1995, 0.0
        %1997 = vadd.xlane.f32.xlu0 %v1996
        %v1998 = vpop.xlane.xlu0 %1997
        %v1999 = vmul.f32 %v1998, %v944
        %v2000 = vadd.f32 %v1994, %v1999
        %v2001 = vsel %vm778, %v1889, 0.0
        %v2002 = vsel %vm587, %v2001, 0.0
        %2003 = vadd.xlane.f32.xlu0 %v2002
        %v2004 = vpop.xlane.xlu0 %2003
        %v2005 = vmul.f32 %v2004, %v954
        %v2006 = vadd.f32 %v2000, %v2005
        %v2007 = vsel %vm785, %v1889, 0.0
        %v2008 = vsel %vm587, %v2007, 0.0
        %2009 = vadd.xlane.f32.xlu0 %v2008
        %v2010 = vpop.xlane.xlu0 %2009
        %v2011 = vmul.f32 %v2010, %v964
        %v2012 = vadd.f32 %v2006, %v2011
        %v2013 = vsel %vm792, %v1889, 0.0
        %v2014 = vsel %vm587, %v2013, 0.0
        %2015 = vadd.xlane.f32.xlu0 %v2014
        %v2016 = vpop.xlane.xlu0 %2015
        %v2017 = vmul.f32 %v2016, %v974
        %v2018 = vadd.f32 %v2012, %v2017
        %2020 = vrot.lane.b32.xlu0 %v2018, 24
        %v2021 = vpop.permute.xlu0 %2020
        %vm2023 = vcmask 261312
        %2024 = vst.msk [vmem:[#allocation2] sm:$0xff] %vm2023, %v2021
        %v2025 = vld [vmem:[#allocation2] sm:$0xff]
        %v2026 = vld [vmem:[%s7] sm:$0xff]
        %v2027 = vld [vmem:[%s7 + $0x8] sm:$0xff]
        %v2028 = vld [vmem:[%s7 + $0x10] sm:$0xff]
        %v2029 = vld [vmem:[%s7 + $0x18] sm:$0xff]
        %v2030 = vld [vmem:[%s8] sm:$0x1]
        %v2032 = vlaneseq
        %v2033 = vshrl.u32 %v2032, 7
        %v2034 = vsub.s32 0, %v2033
        %v2035 = vrot.slane %v2030, %v2034
        %v2038 = vsel %vm490, %v2025, 0
        %2040 = vmatprep.subr.mxu0 0.0
        %2041 = vmatpush1.msra.mxu0 %v2026
        %2042 = vmatprep.subr.mxu0 0.0
        %2043 = vmatpush1.msra.mxu0 %v2027
        %2044 = vmatprep.subr.mxu0 0.0
        %2045 = vmatpush1.msra.mxu0 %v2028
        %2046 = vmatprep.subr.mxu0 0.0
        %2047 = vmatpush1.msra.mxu0 %v2029
        %2048 = vmatprep.subr.mxu0 0.0
        %2049 = vmatpush1.msra.mxu0 0.0
        %2050 = vmatprep.subr.mxu0 0.0
        %2051 = vmatpush1.msra.mxu0 0.0
        %2052 = vmatprep.subr.mxu0 0.0
        %2053 = vmatpush1.msra.mxu0 0.0
        %2054 = vmatprep.subr.mxu0 0.0
        %2055 = vmatpush1.msra.mxu0 0.0
        %2056 = vmatprep.subr.mxu0 0.0
        %2057 = vmatpush1.msra.mxu0 0.0
        %2058 = vmatprep.subr.mxu0 0.0
        %2059 = vmatpush1.msra.mxu0 0.0
        %2060 = vmatprep.subr.mxu0 0.0
        %2061 = vmatpush1.msra.mxu0 0.0
        %2062 = vmatprep.subr.mxu0 0.0
        %2063 = vmatpush1.msra.mxu0 0.0
        %2064 = vmatprep.subr.mxu0 0.0
        %2065 = vmatpush1.msra.mxu0 0.0
        %2066 = vmatprep.subr.mxu0 0.0
        %2067 = vmatpush1.msra.mxu0 0.0
        %2068 = vmatprep.subr.mxu0 0.0
        %2069 = vmatpush1.msra.mxu0 0.0
        %2070 = vmatprep.subr.mxu0 0.0
        %2071 = vmatpush1.msra.mxu0 0.0
        %2072 = vmatprep.subr.mxu0 0.0
        %2073 = vmatpush1.msra.mxu0 0.0
        %2074 = vmatprep.subr.mxu0 0.0
        %2075 = vmatpush1.msra.mxu0 0.0
        %2076 = vmatprep.subr.mxu0 0.0
        %2077 = vmatpush1.msra.mxu0 0.0
        %2078 = vmatprep.subr.mxu0 0.0
        %2079 = vmatpush1.msra.mxu0 0.0
        %2080 = vmatprep.subr.mxu0 0.0
        %2081 = vmatpush1.msra.mxu0 0.0
        %2082 = vmatprep.subr.mxu0 0.0
        %2083 = vmatpush1.msra.mxu0 0.0
        %2084 = vmatprep.subr.mxu0 0.0
        %2085 = vmatpush1.msra.mxu0 0.0
        %2086 = vmatprep.subr.mxu0 0.0
        %2087 = vmatpush1.msra.mxu0 0.0
        %2088 = vmatprep.subr.mxu0 0.0
        %2089 = vmatpush1.msra.mxu0 0.0
        %2090 = vmatprep.subr.mxu0 0.0
        %2091 = vmatpush1.msra.mxu0 0.0
        %2092 = vmatprep.subr.mxu0 0.0
        %2093 = vmatpush1.msra.mxu0 0.0
        %2094 = vmatprep.subr.mxu0 0.0
        %2095 = vmatpush1.msra.mxu0 0.0
        %2096 = vmatprep.subr.mxu0 0.0
        %2097 = vmatpush1.msra.mxu0 0.0
        %2098 = vmatprep.subr.mxu0 0.0
        %2099 = vmatpush1.msra.mxu0 0.0
        %2100 = vmatprep.subr.mxu0 0.0
        %2101 = vmatpush1.msra.mxu0 0.0
        %2102 = vmatprep.subr.mxu0 0.0
        %2103 = vmatpush1.msra.mxu0 0.0
        %2104 = vmatprep.mubr.f32.mxu0 0.0
        %2105 = vmatmul.mubr.f32.gmra.mrb[0].mxu0 %v2038
        %v2106 = vpop.f32.mrb[0].mxu0
        %v2107 = vadd.f32 %v2035, %v2106
        %v2108 = vpop.f32.mrb[0].mxu0
        %2109 = vdwg.mxu0
        %v2110 = vadd.f32 %v478, %v2107
        %v2111 = vsel %vm490, %v2110, 0.0
        %2112 = vadd.xlane.f32.xlu0 %v2111
        %v2113 = vpop.xlane.xlu0 %2112
        %v2114 = vrcp.pop 32.0
        %v2115 = vmul.f32 %v2113, %v2114
        %v2116 = vsub.f32 %v2110, %v2115
        %v2117 = vmul.f32 %v2116, %v2116
        %v2118 = vsel %vm490, %v2117, 0.0
        %2119 = vadd.xlane.f32.xlu0 %v2118
        %v2120 = vpop.xlane.xlu0 %2119
        %v2121 = vmul.f32 %v2120, %v2114
        %v2122 = vadd.f32 %v2121, 1e-05
        %v2123 = vrsqrt.pop %v2122
        %v2124 = vmul.f32 %v2116, %v2123
        %v2125 = vld [vmem:[%s9] sm:$0x1]
        %v2127 = vlaneseq
        %v2128 = vshrl.u32 %v2127, 7
        %v2129 = vsub.s32 0, %v2128
        %v2130 = vrot.slane %v2125, %v2129
        %v2132 = vmul.f32 %v2124, %v2130
        %v2133 = vld [vmem:[%s10] sm:$0x1]
        %v2135 = vlaneseq
        %v2136 = vshrl.u32 %v2135, 7
        %v2137 = vsub.s32 0, %v2136
        %v2138 = vrot.slane %v2133, %v2137
        %v2140 = vadd.f32 %v2132, %v2138
        %2141 = vst.msk [vmem:[%s473] sm:$0xff] %vm490, %v2140
        %s2142 = sand.u32 %s286, 1
        %s2143 = scalar_lea.sflag [#allocation5], %s2142
        %s2144 = sand.u32 %s286, 1
        %s2145 = smul.addr %s2144, 8
        %s2146 = scalar_lea.vmem [#allocation11], %s2145
        // Predicated region
        $region81: #{tpu_custom_call.1} parent=63 // pred_check
          %p2147 = pneg %p296
        $region82: #{tpu_custom_call.1} parent=63 // pred_check_branch
          %2149 = sbr.rel (%p2147) target = $region84
        $region83: #{tpu_custom_call.1} parent=63 // pred_region
          %s2151 = ssub.s32 128, 128
          %2152 = vsyncadd %s2143, %s2151
          %s2153 = smul.addr %s32, 128
          %s2154 = scalar_lea.hbm %s11, %s2153
          %s2156 = sshll.u32 %s2146, 4
          %s2157 = int_to_ptr.vmem [resolvable:$true] %s2156
          %2159 = dma.vmem_to_hbm [thread:$0]  %s2157, 128, %s2154, %s2143
        $region84: #{tpu_custom_call.1} parent=63 // pred_fallthru
          _
      $region64: #{tpu_custom_call.1} parent=5 // pred_fallthru
        _
      %p2160 = scmp.le.s32.totalorder 2, %s27
      // Predicated region
      $region85: #{tpu_custom_call.1} parent=5 // pred_check
        %p2161 = pneg %p2160
      $region86: #{tpu_custom_call.1} parent=5 // pred_check_branch
        %2163 = sbr.rel (%p2161) target = $region88
      $region87: #{tpu_custom_call.1} parent=5 // pred_region
        %s2164 = ssub.s32 %s27, 2
        // Predicated region
        $region89: #{tpu_custom_call.1} parent=87 // pred_check
          %p2165 = pneg %p302
        $region90: #{tpu_custom_call.1} parent=87 // pred_check_branch
          %2167 = sbr.rel (%p2165) target = $region92
        $region91: #{tpu_custom_call.1} parent=87 // pred_region
          %s2168 = sand.u32 %s287, 1
          %s2169 = scalar_lea.sflag [#allocation5], %s2168
          %s2170 = sand.u32 %s287, 1
          %s2171 = smul.addr %s2170, 8
          %s2172 = scalar_lea.vmem [#allocation11], %s2171
          %2173 = dma.done %s2169, 128
        $region92: #{tpu_custom_call.1} parent=87 // pred_fallthru
          _
      $region88: #{tpu_custom_call.1} parent=5 // pred_fallthru
        _
    $region6: #{tpu_custom_call.1} parent=1 // loop_footer
      %s31 = sadd.s32 1, %s27
    $region7: #{tpu_custom_call.1} parent=1 // loop_footer_branch
      %26 = sbr.rel target = $region3
    $region8: #{tpu_custom_call.1} parent=1 // loop_exit
      _
    %2174 = vsyncpa [#allocation4], 1
    %s2175 = scalar_lea.sflag [#allocation4], 1
    %2176 = vsyncpa %s2175, 1
    %2177 = vsyncpa [#allocation7], 1
    %s2178 = scalar_lea.sflag [#allocation7], 1
    %2179 = vsyncpa %s2178, 1
    %2180 = vsyncpa [#allocation10], 1
    %2181 = vsyncpa [#allocation5], 1
    %s2182 = scalar_lea.sflag [#allocation5], 1
    %2183 = vsyncpa %s2182, 1

</llo_original>
